<compile_context>
chip_gen: v7x
topology: tpu7x:2x2x1
jax: 0.10.0
libtpu: 0.0.40
codegen_flags: <defaults>
</compile_context>

<pallas_src>
import functools

import jax
import jax.numpy as jnp
from jax.experimental import pallas as pl
from jax.experimental.pallas import tpu as pltpu


def _upsample_conv_kernel(x_ref, w_ref, b_ref, o_ref, *, C, TH, W2):
    """One output row-tile (TH original rows -> 2*TH output rows) per grid step.

    x_ref: (1, C, H+2, W2+2) VMEM  W-upsampled, zero-padded image (resident per n)
    w_ref: (2*2*3*C*C,)      SMEM  folded weights, flat [a, iy, kx, cin, cout]
    b_ref: (C,)              SMEM  bias
    o_ref: (1, C, 2*TH, W2)  VMEM  output row tile
    """
    r = pl.program_id(1)
    base = r * TH  # first original row covered by this tile

    for a in range(2):                       # output-row parity (H-upsample phase)
        for cout in range(C):
            acc = jnp.full((TH, W2), b_ref[cout], dtype=jnp.float32)
            for iy in range(2):              # folded (2-tap) vertical kernel
                row_start = base + a + iy    # row index in the padded image
                for kx in range(3):          # horizontal tap
                    for cin in range(C):
                        w = w_ref[(((a * 2 + iy) * 3 + kx) * C + cin) * C + cout]
                        sl = x_ref[0, cin, pl.ds(row_start, TH), pl.ds(kx, W2)]
                        acc = acc + w * sl   # scalar-broadcast MAC on the VPU
            accc = acc.astype(o_ref.dtype)
            # Interleave phase-a rows into the output tile.  Per-row stores are
            # lane-dense; the vst slot is not the bottleneck here (VPU is).
            for i in range(TH):
                o_ref[0, cout, pl.ds(2 * i + a, 1), :] = accc[i:i + 1, :]


def _pick_row_tile(H):
    for t in (8, 16, 4):
        if H % t == 0:
            return t
    return H  # single tile: 2*t == H2 == full dim, always a legal block


def upsampler2x(x_nchw, weight_oihw, bias):
    """Forward pass of Upsampler2x.

    x_nchw:      [N, C, H, W]  float32 (NCHW, PyTorch layout)
    weight_oihw: [C, C, 3, 3]  PyTorch Conv2d weight
    bias:        [C]
    returns:     [N, C, 2H, 2W]
    """
    N, C, H, W = x_nchw.shape
    H2, W2 = 2 * H, 2 * W
    TH = _pick_row_tile(H)
    TH2 = 2 * TH

    # ---- wrapper prep (small-input side only) ----------------------------
    # Horizontal 2x nearest upsample + 1-pixel zero border on both spatial dims.
    xw = jnp.repeat(x_nchw, 2, axis=3)                               # [N,C,H,W2]
    xp = jnp.pad(xw, ((0, 0), (0, 0), (1, 1), (1, 1)))               # [N,C,H+2,W2+2]

    # Fold the vertical upsample into the conv taps:
    #   output row parity a=0 uses rows {i-1, i} with weights {w[0], w[1]+w[2]}
    #   output row parity a=1 uses rows {i, i+1} with weights {w[0]+w[1], w[2]}
    wt = jnp.transpose(weight_oihw, (2, 3, 1, 0)).astype(jnp.float32)  # [ky,kx,cin,cout]
    eff = jnp.stack([
        jnp.stack([wt[0], wt[1] + wt[2]], axis=0),   # a = 0 : iy = 0, 1
        jnp.stack([wt[0] + wt[1], wt[2]], axis=0),   # a = 1 : iy = 0, 1
    ], axis=0)                                       # [2, 2, 3, C, C]
    eff_flat = eff.reshape(-1)
    bias_f = bias.astype(jnp.float32)

    kernel = functools.partial(_upsample_conv_kernel, C=C, TH=TH, W2=W2)

    return pl.pallas_call(
        kernel,
        out_shape=jax.ShapeDtypeStruct((N, C, H2, W2), x_nchw.dtype),
        grid_spec=pltpu.PrefetchScalarGridSpec(
            num_scalar_prefetch=0,
            grid=(N, H // TH),
            in_specs=[
                # Whole prepped image, resident across the row-tile axis.
                pl.BlockSpec((1, C, H + 2, W2 + 2), lambda n, r: (n, 0, 0, 0)),
                # Folded weights + bias as SMEM scalar tables.
                pl.BlockSpec(memory_space=pltpu.MemorySpace.SMEM),
                pl.BlockSpec(memory_space=pltpu.MemorySpace.SMEM),
            ],
            out_specs=pl.BlockSpec((1, C, TH2, W2), lambda n, r: (n, 0, r, 0)),
        ),
        compiler_params=pltpu.CompilerParams(
            dimension_semantics=("parallel", "parallel"),
            vmem_limit_bytes=32 * 1024 * 1024),
    )(xp, eff_flat, bias_f)


def _ref_forward(x_nchw, weight_oihw, bias):
    """Pure-JAX reference: F.interpolate(scale=2, nearest) + Conv2d(3x3, pad=1)."""
    x_up = jnp.repeat(jnp.repeat(x_nchw, 2, axis=2), 2, axis=3)
    out = jax.lax.conv_general_dilated(
        x_up, weight_oihw, window_strides=(1, 1), padding=((1, 1), (1, 1)),
        dimension_numbers=("NCHW", "OIHW", "NCHW"))
    return out + bias[None, :, None, None]


if __name__ == "__main__":
    key = jax.random.PRNGKey(0)
    kx, kw, kb = jax.random.split(key, 3)

    # Small shapes consistent with the module: Upsampler2x(in_chn=4), NCHW input.
    N, C, H, W = 2, 4, 16, 16
    x = jax.random.normal(kx, (N, C, H, W), jnp.float32)

    # Deterministic synthetic init of Conv2d(in_chn, in_chn, 3, padding=1) params.
    fan_in = C * 3 * 3
    bound = 1.0 / (fan_in ** 0.5)
    weight = jax.random.uniform(kw, (C, C, 3, 3), jnp.float32, -bound, bound)
    bias = jax.random.uniform(kb, (C,), jnp.float32, -bound, bound)

    out = jax.jit(upsampler2x)(x, weight, bias)
    out = jax.block_until_ready(out)

    ref = _ref_forward(x, weight, bias)
    assert out.shape == (N, C, 2 * H, 2 * W), out.shape
    assert jnp.allclose(out, ref, atol=1e-3, rtol=1e-3), float(
        jnp.max(jnp.abs(out - ref)))

    print("KERNEL_OK")
</pallas_src>

<mosaic_0001>
module attributes {stable_mosaic.version = 11 : i64} {
  func.func @_upsample_conv_kernel(%arg0: i32, %arg1: i32, %arg2: memref<1x4x18x34xf32, #tpu.memory_space<vmem>>, %arg3: memref<192xf32, #tpu.memory_space<smem>>, %arg4: memref<4xf32, #tpu.memory_space<smem>>, %arg5: memref<1x4x16x32xf32, #tpu.memory_space<vmem>>) attributes {dimension_semantics = [#tpu.dimension_semantics<parallel>, #tpu.dimension_semantics<parallel>], iteration_bounds = array<i64: 2, 2>, scalar_prefetch = 0 : i64, scratch_operands = 0 : i64, tpu.core_type = #tpu.core_type<tc>, window_params = [{transform_indices = @transform_0, window_bounds = array<i64: 1, 4, 18, 34>}, {transform_indices = @transform_1, window_bounds = array<i64: 192>}, {transform_indices = @transform_2, window_bounds = array<i64: 4>}, {transform_indices = @transform_3, window_bounds = array<i64: 1, 4, 16, 32>}]} {
    %c8_i32 = arith.constant 8 : i32
    %0 = arith.muli %arg1, %c8_i32 : i32
    %c0 = arith.constant 0 : index
    %1 = memref.load %arg4[%c0] : memref<4xf32, #tpu.memory_space<smem>>
    %2 = vector.broadcast %1 : f32 to vector<8x32xf32>
    %c0_i32 = arith.constant 0 : i32
    %3 = arith.addi %0, %c0_i32 : i32
    %c0_i32_0 = arith.constant 0 : i32
    %4 = arith.addi %3, %c0_i32_0 : i32
    %c0_1 = arith.constant 0 : index
    %5 = memref.load %arg3[%c0_1] : memref<192xf32, #tpu.memory_space<smem>>
    %c0_2 = arith.constant 0 : index
    %c0_3 = arith.constant 0 : index
    %6 = arith.index_cast %4 : i32 to index
    %c0_4 = arith.constant 0 : index
    %7 = vector.load %arg2[%c0_2, %c0_3, %6, %c0_4] : memref<1x4x18x34xf32, #tpu.memory_space<vmem>>, vector<1x1x8x32xf32>
    %8 = vector.shape_cast %7 : vector<1x1x8x32xf32> to vector<8x32xf32>
    %9 = vector.broadcast %5 : f32 to vector<8x32xf32>
    %10 = arith.mulf %9, %8 : vector<8x32xf32>
    %11 = arith.addf %2, %10 : vector<8x32xf32>
    %c4 = arith.constant 4 : index
    %12 = memref.load %arg3[%c4] : memref<192xf32, #tpu.memory_space<smem>>
    %c0_5 = arith.constant 0 : index
    %c1 = arith.constant 1 : index
    %13 = arith.index_cast %4 : i32 to index
    %c0_6 = arith.constant 0 : index
    %14 = vector.load %arg2[%c0_5, %c1, %13, %c0_6] : memref<1x4x18x34xf32, #tpu.memory_space<vmem>>, vector<1x1x8x32xf32>
    %15 = vector.shape_cast %14 : vector<1x1x8x32xf32> to vector<8x32xf32>
    %16 = vector.broadcast %12 : f32 to vector<8x32xf32>
    %17 = arith.mulf %16, %15 : vector<8x32xf32>
    %18 = arith.addf %11, %17 : vector<8x32xf32>
    %c8 = arith.constant 8 : index
    %19 = memref.load %arg3[%c8] : memref<192xf32, #tpu.memory_space<smem>>
    %c0_7 = arith.constant 0 : index
    %c2 = arith.constant 2 : index
    %20 = arith.index_cast %4 : i32 to index
    %c0_8 = arith.constant 0 : index
    %21 = vector.load %arg2[%c0_7, %c2, %20, %c0_8] : memref<1x4x18x34xf32, #tpu.memory_space<vmem>>, vector<1x1x8x32xf32>
    %22 = vector.shape_cast %21 : vector<1x1x8x32xf32> to vector<8x32xf32>
    %23 = vector.broadcast %19 : f32 to vector<8x32xf32>
    %24 = arith.mulf %23, %22 : vector<8x32xf32>
    %25 = arith.addf %18, %24 : vector<8x32xf32>
    %c12 = arith.constant 12 : index
    %26 = memref.load %arg3[%c12] : memref<192xf32, #tpu.memory_space<smem>>
    %c0_9 = arith.constant 0 : index
    %c3 = arith.constant 3 : index
    %27 = arith.index_cast %4 : i32 to index
    %c0_10 = arith.constant 0 : index
    %28 = vector.load %arg2[%c0_9, %c3, %27, %c0_10] : memref<1x4x18x34xf32, #tpu.memory_space<vmem>>, vector<1x1x8x32xf32>
    %29 = vector.shape_cast %28 : vector<1x1x8x32xf32> to vector<8x32xf32>
    %30 = vector.broadcast %26 : f32 to vector<8x32xf32>
    %31 = arith.mulf %30, %29 : vector<8x32xf32>
    %32 = arith.addf %25, %31 : vector<8x32xf32>
    %c16 = arith.constant 16 : index
    %33 = memref.load %arg3[%c16] : memref<192xf32, #tpu.memory_space<smem>>
    %c0_11 = arith.constant 0 : index
    %c0_12 = arith.constant 0 : index
    %34 = arith.index_cast %4 : i32 to index
    %c1_13 = arith.constant 1 : index
    %35 = vector.load %arg2[%c0_11, %c0_12, %34, %c1_13] : memref<1x4x18x34xf32, #tpu.memory_space<vmem>>, vector<1x1x8x32xf32>
    %36 = vector.shape_cast %35 : vector<1x1x8x32xf32> to vector<8x32xf32>
    %37 = vector.broadcast %33 : f32 to vector<8x32xf32>
    %38 = arith.mulf %37, %36 : vector<8x32xf32>
    %39 = arith.addf %32, %38 : vector<8x32xf32>
    %c20 = arith.constant 20 : index
    %40 = memref.load %arg3[%c20] : memref<192xf32, #tpu.memory_space<smem>>
    %c0_14 = arith.constant 0 : index
    %c1_15 = arith.constant 1 : index
    %41 = arith.index_cast %4 : i32 to index
    %c1_16 = arith.constant 1 : index
    %42 = vector.load %arg2[%c0_14, %c1_15, %41, %c1_16] : memref<1x4x18x34xf32, #tpu.memory_space<vmem>>, vector<1x1x8x32xf32>
    %43 = vector.shape_cast %42 : vector<1x1x8x32xf32> to vector<8x32xf32>
    %44 = vector.broadcast %40 : f32 to vector<8x32xf32>
    %45 = arith.mulf %44, %43 : vector<8x32xf32>
    %46 = arith.addf %39, %45 : vector<8x32xf32>
    %c24 = arith.constant 24 : index
    %47 = memref.load %arg3[%c24] : memref<192xf32, #tpu.memory_space<smem>>
    %c0_17 = arith.constant 0 : index
    %c2_18 = arith.constant 2 : index
    %48 = arith.index_cast %4 : i32 to index
    %c1_19 = arith.constant 1 : index
    %49 = vector.load %arg2[%c0_17, %c2_18, %48, %c1_19] : memref<1x4x18x34xf32, #tpu.memory_space<vmem>>, vector<1x1x8x32xf32>
    %50 = vector.shape_cast %49 : vector<1x1x8x32xf32> to vector<8x32xf32>
    %51 = vector.broadcast %47 : f32 to vector<8x32xf32>
    %52 = arith.mulf %51, %50 : vector<8x32xf32>
    %53 = arith.addf %46, %52 : vector<8x32xf32>
    %c28 = arith.constant 28 : index
    %54 = memref.load %arg3[%c28] : memref<192xf32, #tpu.memory_space<smem>>
    %c0_20 = arith.constant 0 : index
    %c3_21 = arith.constant 3 : index
    %55 = arith.index_cast %4 : i32 to index
    %c1_22 = arith.constant 1 : index
    %56 = vector.load %arg2[%c0_20, %c3_21, %55, %c1_22] : memref<1x4x18x34xf32, #tpu.memory_space<vmem>>, vector<1x1x8x32xf32>
    %57 = vector.shape_cast %56 : vector<1x1x8x32xf32> to vector<8x32xf32>
    %58 = vector.broadcast %54 : f32 to vector<8x32xf32>
    %59 = arith.mulf %58, %57 : vector<8x32xf32>
    %60 = arith.addf %53, %59 : vector<8x32xf32>
    %c32 = arith.constant 32 : index
    %61 = memref.load %arg3[%c32] : memref<192xf32, #tpu.memory_space<smem>>
    %c0_23 = arith.constant 0 : index
    %c0_24 = arith.constant 0 : index
    %62 = arith.index_cast %4 : i32 to index
    %c2_25 = arith.constant 2 : index
    %63 = vector.load %arg2[%c0_23, %c0_24, %62, %c2_25] : memref<1x4x18x34xf32, #tpu.memory_space<vmem>>, vector<1x1x8x32xf32>
    %64 = vector.shape_cast %63 : vector<1x1x8x32xf32> to vector<8x32xf32>
    %65 = vector.broadcast %61 : f32 to vector<8x32xf32>
    %66 = arith.mulf %65, %64 : vector<8x32xf32>
    %67 = arith.addf %60, %66 : vector<8x32xf32>
    %c36 = arith.constant 36 : index
    %68 = memref.load %arg3[%c36] : memref<192xf32, #tpu.memory_space<smem>>
    %c0_26 = arith.constant 0 : index
    %c1_27 = arith.constant 1 : index
    %69 = arith.index_cast %4 : i32 to index
    %c2_28 = arith.constant 2 : index
    %70 = vector.load %arg2[%c0_26, %c1_27, %69, %c2_28] : memref<1x4x18x34xf32, #tpu.memory_space<vmem>>, vector<1x1x8x32xf32>
    %71 = vector.shape_cast %70 : vector<1x1x8x32xf32> to vector<8x32xf32>
    %72 = vector.broadcast %68 : f32 to vector<8x32xf32>
    %73 = arith.mulf %72, %71 : vector<8x32xf32>
    %74 = arith.addf %67, %73 : vector<8x32xf32>
    %c40 = arith.constant 40 : index
    %75 = memref.load %arg3[%c40] : memref<192xf32, #tpu.memory_space<smem>>
    %c0_29 = arith.constant 0 : index
    %c2_30 = arith.constant 2 : index
    %76 = arith.index_cast %4 : i32 to index
    %c2_31 = arith.constant 2 : index
    %77 = vector.load %arg2[%c0_29, %c2_30, %76, %c2_31] : memref<1x4x18x34xf32, #tpu.memory_space<vmem>>, vector<1x1x8x32xf32>
    %78 = vector.shape_cast %77 : vector<1x1x8x32xf32> to vector<8x32xf32>
    %79 = vector.broadcast %75 : f32 to vector<8x32xf32>
    %80 = arith.mulf %79, %78 : vector<8x32xf32>
    %81 = arith.addf %74, %80 : vector<8x32xf32>
    %c44 = arith.constant 44 : index
    %82 = memref.load %arg3[%c44] : memref<192xf32, #tpu.memory_space<smem>>
    %c0_32 = arith.constant 0 : index
    %c3_33 = arith.constant 3 : index
    %83 = arith.index_cast %4 : i32 to index
    %c2_34 = arith.constant 2 : index
    %84 = vector.load %arg2[%c0_32, %c3_33, %83, %c2_34] : memref<1x4x18x34xf32, #tpu.memory_space<vmem>>, vector<1x1x8x32xf32>
    %85 = vector.shape_cast %84 : vector<1x1x8x32xf32> to vector<8x32xf32>
    %86 = vector.broadcast %82 : f32 to vector<8x32xf32>
    %87 = arith.mulf %86, %85 : vector<8x32xf32>
    %88 = arith.addf %81, %87 : vector<8x32xf32>
    %c0_i32_35 = arith.constant 0 : i32
    %89 = arith.addi %0, %c0_i32_35 : i32
    %c1_i32 = arith.constant 1 : i32
    %90 = arith.addi %89, %c1_i32 : i32
    %c48 = arith.constant 48 : index
    %91 = memref.load %arg3[%c48] : memref<192xf32, #tpu.memory_space<smem>>
    %c0_36 = arith.constant 0 : index
    %c0_37 = arith.constant 0 : index
    %92 = arith.index_cast %90 : i32 to index
    %c0_38 = arith.constant 0 : index
    %93 = vector.load %arg2[%c0_36, %c0_37, %92, %c0_38] : memref<1x4x18x34xf32, #tpu.memory_space<vmem>>, vector<1x1x8x32xf32>
    %94 = vector.shape_cast %93 : vector<1x1x8x32xf32> to vector<8x32xf32>
    %95 = vector.broadcast %91 : f32 to vector<8x32xf32>
    %96 = arith.mulf %95, %94 : vector<8x32xf32>
    %97 = arith.addf %88, %96 : vector<8x32xf32>
    %c52 = arith.constant 52 : index
    %98 = memref.load %arg3[%c52] : memref<192xf32, #tpu.memory_space<smem>>
    %c0_39 = arith.constant 0 : index
    %c1_40 = arith.constant 1 : index
    %99 = arith.index_cast %90 : i32 to index
    %c0_41 = arith.constant 0 : index
    %100 = vector.load %arg2[%c0_39, %c1_40, %99, %c0_41] : memref<1x4x18x34xf32, #tpu.memory_space<vmem>>, vector<1x1x8x32xf32>
    %101 = vector.shape_cast %100 : vector<1x1x8x32xf32> to vector<8x32xf32>
    %102 = vector.broadcast %98 : f32 to vector<8x32xf32>
    %103 = arith.mulf %102, %101 : vector<8x32xf32>
    %104 = arith.addf %97, %103 : vector<8x32xf32>
    %c56 = arith.constant 56 : index
    %105 = memref.load %arg3[%c56] : memref<192xf32, #tpu.memory_space<smem>>
    %c0_42 = arith.constant 0 : index
    %c2_43 = arith.constant 2 : index
    %106 = arith.index_cast %90 : i32 to index
    %c0_44 = arith.constant 0 : index
    %107 = vector.load %arg2[%c0_42, %c2_43, %106, %c0_44] : memref<1x4x18x34xf32, #tpu.memory_space<vmem>>, vector<1x1x8x32xf32>
    %108 = vector.shape_cast %107 : vector<1x1x8x32xf32> to vector<8x32xf32>
    %109 = vector.broadcast %105 : f32 to vector<8x32xf32>
    %110 = arith.mulf %109, %108 : vector<8x32xf32>
    %111 = arith.addf %104, %110 : vector<8x32xf32>
    %c60 = arith.constant 60 : index
    %112 = memref.load %arg3[%c60] : memref<192xf32, #tpu.memory_space<smem>>
    %c0_45 = arith.constant 0 : index
    %c3_46 = arith.constant 3 : index
    %113 = arith.index_cast %90 : i32 to index
    %c0_47 = arith.constant 0 : index
    %114 = vector.load %arg2[%c0_45, %c3_46, %113, %c0_47] : memref<1x4x18x34xf32, #tpu.memory_space<vmem>>, vector<1x1x8x32xf32>
    %115 = vector.shape_cast %114 : vector<1x1x8x32xf32> to vector<8x32xf32>
    %116 = vector.broadcast %112 : f32 to vector<8x32xf32>
    %117 = arith.mulf %116, %115 : vector<8x32xf32>
    %118 = arith.addf %111, %117 : vector<8x32xf32>
    %c64 = arith.constant 64 : index
    %119 = memref.load %arg3[%c64] : memref<192xf32, #tpu.memory_space<smem>>
    %c0_48 = arith.constant 0 : index
    %c0_49 = arith.constant 0 : index
    %120 = arith.index_cast %90 : i32 to index
    %c1_50 = arith.constant 1 : index
    %121 = vector.load %arg2[%c0_48, %c0_49, %120, %c1_50] : memref<1x4x18x34xf32, #tpu.memory_space<vmem>>, vector<1x1x8x32xf32>
    %122 = vector.shape_cast %121 : vector<1x1x8x32xf32> to vector<8x32xf32>
    %123 = vector.broadcast %119 : f32 to vector<8x32xf32>
    %124 = arith.mulf %123, %122 : vector<8x32xf32>
    %125 = arith.addf %118, %124 : vector<8x32xf32>
    %c68 = arith.constant 68 : index
    %126 = memref.load %arg3[%c68] : memref<192xf32, #tpu.memory_space<smem>>
    %c0_51 = arith.constant 0 : index
    %c1_52 = arith.constant 1 : index
    %127 = arith.index_cast %90 : i32 to index
    %c1_53 = arith.constant 1 : index
    %128 = vector.load %arg2[%c0_51, %c1_52, %127, %c1_53] : memref<1x4x18x34xf32, #tpu.memory_space<vmem>>, vector<1x1x8x32xf32>
    %129 = vector.shape_cast %128 : vector<1x1x8x32xf32> to vector<8x32xf32>
    %130 = vector.broadcast %126 : f32 to vector<8x32xf32>
    %131 = arith.mulf %130, %129 : vector<8x32xf32>
    %132 = arith.addf %125, %131 : vector<8x32xf32>
    %c72 = arith.constant 72 : index
    %133 = memref.load %arg3[%c72] : memref<192xf32, #tpu.memory_space<smem>>
    %c0_54 = arith.constant 0 : index
    %c2_55 = arith.constant 2 : index
    %134 = arith.index_cast %90 : i32 to index
    %c1_56 = arith.constant 1 : index
    %135 = vector.load %arg2[%c0_54, %c2_55, %134, %c1_56] : memref<1x4x18x34xf32, #tpu.memory_space<vmem>>, vector<1x1x8x32xf32>
    %136 = vector.shape_cast %135 : vector<1x1x8x32xf32> to vector<8x32xf32>
    %137 = vector.broadcast %133 : f32 to vector<8x32xf32>
    %138 = arith.mulf %137, %136 : vector<8x32xf32>
    %139 = arith.addf %132, %138 : vector<8x32xf32>
    %c76 = arith.constant 76 : index
    %140 = memref.load %arg3[%c76] : memref<192xf32, #tpu.memory_space<smem>>
    %c0_57 = arith.constant 0 : index
    %c3_58 = arith.constant 3 : index
    %141 = arith.index_cast %90 : i32 to index
    %c1_59 = arith.constant 1 : index
    %142 = vector.load %arg2[%c0_57, %c3_58, %141, %c1_59] : memref<1x4x18x34xf32, #tpu.memory_space<vmem>>, vector<1x1x8x32xf32>
    %143 = vector.shape_cast %142 : vector<1x1x8x32xf32> to vector<8x32xf32>
    %144 = vector.broadcast %140 : f32 to vector<8x32xf32>
    %145 = arith.mulf %144, %143 : vector<8x32xf32>
    %146 = arith.addf %139, %145 : vector<8x32xf32>
    %c80 = arith.constant 80 : index
    %147 = memref.load %arg3[%c80] : memref<192xf32, #tpu.memory_space<smem>>
    %c0_60 = arith.constant 0 : index
    %c0_61 = arith.constant 0 : index
    %148 = arith.index_cast %90 : i32 to index
    %c2_62 = arith.constant 2 : index
    %149 = vector.load %arg2[%c0_60, %c0_61, %148, %c2_62] : memref<1x4x18x34xf32, #tpu.memory_space<vmem>>, vector<1x1x8x32xf32>
    %150 = vector.shape_cast %149 : vector<1x1x8x32xf32> to vector<8x32xf32>
    %151 = vector.broadcast %147 : f32 to vector<8x32xf32>
    %152 = arith.mulf %151, %150 : vector<8x32xf32>
    %153 = arith.addf %146, %152 : vector<8x32xf32>
    %c84 = arith.constant 84 : index
    %154 = memref.load %arg3[%c84] : memref<192xf32, #tpu.memory_space<smem>>
    %c0_63 = arith.constant 0 : index
    %c1_64 = arith.constant 1 : index
    %155 = arith.index_cast %90 : i32 to index
    %c2_65 = arith.constant 2 : index
    %156 = vector.load %arg2[%c0_63, %c1_64, %155, %c2_65] : memref<1x4x18x34xf32, #tpu.memory_space<vmem>>, vector<1x1x8x32xf32>
    %157 = vector.shape_cast %156 : vector<1x1x8x32xf32> to vector<8x32xf32>
    %158 = vector.broadcast %154 : f32 to vector<8x32xf32>
    %159 = arith.mulf %158, %157 : vector<8x32xf32>
    %160 = arith.addf %153, %159 : vector<8x32xf32>
    %c88 = arith.constant 88 : index
    %161 = memref.load %arg3[%c88] : memref<192xf32, #tpu.memory_space<smem>>
    %c0_66 = arith.constant 0 : index
    %c2_67 = arith.constant 2 : index
    %162 = arith.index_cast %90 : i32 to index
    %c2_68 = arith.constant 2 : index
    %163 = vector.load %arg2[%c0_66, %c2_67, %162, %c2_68] : memref<1x4x18x34xf32, #tpu.memory_space<vmem>>, vector<1x1x8x32xf32>
    %164 = vector.shape_cast %163 : vector<1x1x8x32xf32> to vector<8x32xf32>
    %165 = vector.broadcast %161 : f32 to vector<8x32xf32>
    %166 = arith.mulf %165, %164 : vector<8x32xf32>
    %167 = arith.addf %160, %166 : vector<8x32xf32>
    %c92 = arith.constant 92 : index
    %168 = memref.load %arg3[%c92] : memref<192xf32, #tpu.memory_space<smem>>
    %c0_69 = arith.constant 0 : index
    %c3_70 = arith.constant 3 : index
    %169 = arith.index_cast %90 : i32 to index
    %c2_71 = arith.constant 2 : index
    %170 = vector.load %arg2[%c0_69, %c3_70, %169, %c2_71] : memref<1x4x18x34xf32, #tpu.memory_space<vmem>>, vector<1x1x8x32xf32>
    %171 = vector.shape_cast %170 : vector<1x1x8x32xf32> to vector<8x32xf32>
    %172 = vector.broadcast %168 : f32 to vector<8x32xf32>
    %173 = arith.mulf %172, %171 : vector<8x32xf32>
    %174 = arith.addf %167, %173 : vector<8x32xf32>
    %175 = vector.extract_strided_slice %174 {offsets = [0, 0], sizes = [1, 32], strides = [1, 1]} : vector<8x32xf32> to vector<1x32xf32>
    %c0_72 = arith.constant 0 : index
    %c0_73 = arith.constant 0 : index
    %c0_74 = arith.constant 0 : index
    %c0_75 = arith.constant 0 : index
    %176 = vector.load %arg5[%c0_72, %c0_73, %c0_74, %c0_75] : memref<1x4x16x32xf32, #tpu.memory_space<vmem>>, vector<1x1x1x32xf32>
    %177 = vector.shape_cast %176 : vector<1x1x1x32xf32> to vector<1x32xf32>
    %178 = vector.shape_cast %175 : vector<1x32xf32> to vector<1x1x1x32xf32>
    tpu.vector_store %arg5[%c0_72, %c0_73, %c0_74, %c0_75], %178 {strides = array<i32>} : memref<1x4x16x32xf32, #tpu.memory_space<vmem>>, vector<1x1x1x32xf32>,
    %179 = vector.extract_strided_slice %174 {offsets = [1, 0], sizes = [1, 32], strides = [1, 1]} : vector<8x32xf32> to vector<1x32xf32>
    %c0_76 = arith.constant 0 : index
    %c0_77 = arith.constant 0 : index
    %c2_78 = arith.constant 2 : index
    %c0_79 = arith.constant 0 : index
    %180 = vector.load %arg5[%c0_76, %c0_77, %c2_78, %c0_79] : memref<1x4x16x32xf32, #tpu.memory_space<vmem>>, vector<1x1x1x32xf32>
    %181 = vector.shape_cast %180 : vector<1x1x1x32xf32> to vector<1x32xf32>
    %182 = vector.shape_cast %179 : vector<1x32xf32> to vector<1x1x1x32xf32>
    tpu.vector_store %arg5[%c0_76, %c0_77, %c2_78, %c0_79], %182 {strides = array<i32>} : memref<1x4x16x32xf32, #tpu.memory_space<vmem>>, vector<1x1x1x32xf32>,
    %183 = vector.extract_strided_slice %174 {offsets = [2, 0], sizes = [1, 32], strides = [1, 1]} : vector<8x32xf32> to vector<1x32xf32>
    %c0_80 = arith.constant 0 : index
    %c0_81 = arith.constant 0 : index
    %c4_82 = arith.constant 4 : index
    %c0_83 = arith.constant 0 : index
    %184 = vector.load %arg5[%c0_80, %c0_81, %c4_82, %c0_83] : memref<1x4x16x32xf32, #tpu.memory_space<vmem>>, vector<1x1x1x32xf32>
    %185 = vector.shape_cast %184 : vector<1x1x1x32xf32> to vector<1x32xf32>
    %186 = vector.shape_cast %183 : vector<1x32xf32> to vector<1x1x1x32xf32>
    tpu.vector_store %arg5[%c0_80, %c0_81, %c4_82, %c0_83], %186 {strides = array<i32>} : memref<1x4x16x32xf32, #tpu.memory_space<vmem>>, vector<1x1x1x32xf32>,
    %187 = vector.extract_strided_slice %174 {offsets = [3, 0], sizes = [1, 32], strides = [1, 1]} : vector<8x32xf32> to vector<1x32xf32>
    %c0_84 = arith.constant 0 : index
    %c0_85 = arith.constant 0 : index
    %c6 = arith.constant 6 : index
    %c0_86 = arith.constant 0 : index
    %188 = vector.load %arg5[%c0_84, %c0_85, %c6, %c0_86] : memref<1x4x16x32xf32, #tpu.memory_space<vmem>>, vector<1x1x1x32xf32>
    %189 = vector.shape_cast %188 : vector<1x1x1x32xf32> to vector<1x32xf32>
    %190 = vector.shape_cast %187 : vector<1x32xf32> to vector<1x1x1x32xf32>
    tpu.vector_store %arg5[%c0_84, %c0_85, %c6, %c0_86], %190 {strides = array<i32>} : memref<1x4x16x32xf32, #tpu.memory_space<vmem>>, vector<1x1x1x32xf32>,
    %191 = vector.extract_strided_slice %174 {offsets = [4, 0], sizes = [1, 32], strides = [1, 1]} : vector<8x32xf32> to vector<1x32xf32>
    %c0_87 = arith.constant 0 : index
    %c0_88 = arith.constant 0 : index
    %c8_89 = arith.constant 8 : index
    %c0_90 = arith.constant 0 : index
    %192 = vector.load %arg5[%c0_87, %c0_88, %c8_89, %c0_90] : memref<1x4x16x32xf32, #tpu.memory_space<vmem>>, vector<1x1x1x32xf32>
    %193 = vector.shape_cast %192 : vector<1x1x1x32xf32> to vector<1x32xf32>
    %194 = vector.shape_cast %191 : vector<1x32xf32> to vector<1x1x1x32xf32>
    tpu.vector_store %arg5[%c0_87, %c0_88, %c8_89, %c0_90], %194 {strides = array<i32>} : memref<1x4x16x32xf32, #tpu.memory_space<vmem>>, vector<1x1x1x32xf32>,
    %195 = vector.extract_strided_slice %174 {offsets = [5, 0], sizes = [1, 32], strides = [1, 1]} : vector<8x32xf32> to vector<1x32xf32>
    %c0_91 = arith.constant 0 : index
    %c0_92 = arith.constant 0 : index
    %c10 = arith.constant 10 : index
    %c0_93 = arith.constant 0 : index
    %196 = vector.load %arg5[%c0_91, %c0_92, %c10, %c0_93] : memref<1x4x16x32xf32, #tpu.memory_space<vmem>>, vector<1x1x1x32xf32>
    %197 = vector.shape_cast %196 : vector<1x1x1x32xf32> to vector<1x32xf32>
    %198 = vector.shape_cast %195 : vector<1x32xf32> to vector<1x1x1x32xf32>
    tpu.vector_store %arg5[%c0_91, %c0_92, %c10, %c0_93], %198 {strides = array<i32>} : memref<1x4x16x32xf32, #tpu.memory_space<vmem>>, vector<1x1x1x32xf32>,
    %199 = vector.extract_strided_slice %174 {offsets = [6, 0], sizes = [1, 32], strides = [1, 1]} : vector<8x32xf32> to vector<1x32xf32>
    %c0_94 = arith.constant 0 : index
    %c0_95 = arith.constant 0 : index
    %c12_96 = arith.constant 12 : index
    %c0_97 = arith.constant 0 : index
    %200 = vector.load %arg5[%c0_94, %c0_95, %c12_96, %c0_97] : memref<1x4x16x32xf32, #tpu.memory_space<vmem>>, vector<1x1x1x32xf32>
    %201 = vector.shape_cast %200 : vector<1x1x1x32xf32> to vector<1x32xf32>
    %202 = vector.shape_cast %199 : vector<1x32xf32> to vector<1x1x1x32xf32>
    tpu.vector_store %arg5[%c0_94, %c0_95, %c12_96, %c0_97], %202 {strides = array<i32>} : memref<1x4x16x32xf32, #tpu.memory_space<vmem>>, vector<1x1x1x32xf32>,
    %203 = vector.extract_strided_slice %174 {offsets = [7, 0], sizes = [1, 32], strides = [1, 1]} : vector<8x32xf32> to vector<1x32xf32>
    %c0_98 = arith.constant 0 : index
    %c0_99 = arith.constant 0 : index
    %c14 = arith.constant 14 : index
    %c0_100 = arith.constant 0 : index
    %204 = vector.load %arg5[%c0_98, %c0_99, %c14, %c0_100] : memref<1x4x16x32xf32, #tpu.memory_space<vmem>>, vector<1x1x1x32xf32>
    %205 = vector.shape_cast %204 : vector<1x1x1x32xf32> to vector<1x32xf32>
    %206 = vector.shape_cast %203 : vector<1x32xf32> to vector<1x1x1x32xf32>
    tpu.vector_store %arg5[%c0_98, %c0_99, %c14, %c0_100], %206 {strides = array<i32>} : memref<1x4x16x32xf32, #tpu.memory_space<vmem>>, vector<1x1x1x32xf32>,
    %c1_101 = arith.constant 1 : index
    %207 = memref.load %arg4[%c1_101] : memref<4xf32, #tpu.memory_space<smem>>
    %208 = vector.broadcast %207 : f32 to vector<8x32xf32>
    %c0_i32_102 = arith.constant 0 : i32
    %209 = arith.addi %0, %c0_i32_102 : i32
    %c0_i32_103 = arith.constant 0 : i32
    %210 = arith.addi %209, %c0_i32_103 : i32
    %c1_104 = arith.constant 1 : index
    %211 = memref.load %arg3[%c1_104] : memref<192xf32, #tpu.memory_space<smem>>
    %c0_105 = arith.constant 0 : index
    %c0_106 = arith.constant 0 : index
    %212 = arith.index_cast %210 : i32 to index
    %c0_107 = arith.constant 0 : index
    %213 = vector.load %arg2[%c0_105, %c0_106, %212, %c0_107] : memref<1x4x18x34xf32, #tpu.memory_space<vmem>>, vector<1x1x8x32xf32>
    %214 = vector.shape_cast %213 : vector<1x1x8x32xf32> to vector<8x32xf32>
    %215 = vector.broadcast %211 : f32 to vector<8x32xf32>
    %216 = arith.mulf %215, %214 : vector<8x32xf32>
    %217 = arith.addf %208, %216 : vector<8x32xf32>
    %c5 = arith.constant 5 : index
    %218 = memref.load %arg3[%c5] : memref<192xf32, #tpu.memory_space<smem>>
    %c0_108 = arith.constant 0 : index
    %c1_109 = arith.constant 1 : index
    %219 = arith.index_cast %210 : i32 to index
    %c0_110 = arith.constant 0 : index
    %220 = vector.load %arg2[%c0_108, %c1_109, %219, %c0_110] : memref<1x4x18x34xf32, #tpu.memory_space<vmem>>, vector<1x1x8x32xf32>
    %221 = vector.shape_cast %220 : vector<1x1x8x32xf32> to vector<8x32xf32>
    %222 = vector.broadcast %218 : f32 to vector<8x32xf32>
    %223 = arith.mulf %222, %221 : vector<8x32xf32>
    %224 = arith.addf %217, %223 : vector<8x32xf32>
    %c9 = arith.constant 9 : index
    %225 = memref.load %arg3[%c9] : memref<192xf32, #tpu.memory_space<smem>>
    %c0_111 = arith.constant 0 : index
    %c2_112 = arith.constant 2 : index
    %226 = arith.index_cast %210 : i32 to index
    %c0_113 = arith.constant 0 : index
    %227 = vector.load %arg2[%c0_111, %c2_112, %226, %c0_113] : memref<1x4x18x34xf32, #tpu.memory_space<vmem>>, vector<1x1x8x32xf32>
    %228 = vector.shape_cast %227 : vector<1x1x8x32xf32> to vector<8x32xf32>
    %229 = vector.broadcast %225 : f32 to vector<8x32xf32>
    %230 = arith.mulf %229, %228 : vector<8x32xf32>
    %231 = arith.addf %224, %230 : vector<8x32xf32>
    %c13 = arith.constant 13 : index
    %232 = memref.load %arg3[%c13] : memref<192xf32, #tpu.memory_space<smem>>
    %c0_114 = arith.constant 0 : index
    %c3_115 = arith.constant 3 : index
    %233 = arith.index_cast %210 : i32 to index
    %c0_116 = arith.constant 0 : index
    %234 = vector.load %arg2[%c0_114, %c3_115, %233, %c0_116] : memref<1x4x18x34xf32, #tpu.memory_space<vmem>>, vector<1x1x8x32xf32>
    %235 = vector.shape_cast %234 : vector<1x1x8x32xf32> to vector<8x32xf32>
    %236 = vector.broadcast %232 : f32 to vector<8x32xf32>
    %237 = arith.mulf %236, %235 : vector<8x32xf32>
    %238 = arith.addf %231, %237 : vector<8x32xf32>
    %c17 = arith.constant 17 : index
    %239 = memref.load %arg3[%c17] : memref<192xf32, #tpu.memory_space<smem>>
    %c0_117 = arith.constant 0 : index
    %c0_118 = arith.constant 0 : index
    %240 = arith.index_cast %210 : i32 to index
    %c1_119 = arith.constant 1 : index
    %241 = vector.load %arg2[%c0_117, %c0_118, %240, %c1_119] : memref<1x4x18x34xf32, #tpu.memory_space<vmem>>, vector<1x1x8x32xf32>
    %242 = vector.shape_cast %241 : vector<1x1x8x32xf32> to vector<8x32xf32>
    %243 = vector.broadcast %239 : f32 to vector<8x32xf32>
    %244 = arith.mulf %243, %242 : vector<8x32xf32>
    %245 = arith.addf %238, %244 : vector<8x32xf32>
    %c21 = arith.constant 21 : index
    %246 = memref.load %arg3[%c21] : memref<192xf32, #tpu.memory_space<smem>>
    %c0_120 = arith.constant 0 : index
    %c1_121 = arith.constant 1 : index
    %247 = arith.index_cast %210 : i32 to index
    %c1_122 = arith.constant 1 : index
    %248 = vector.load %arg2[%c0_120, %c1_121, %247, %c1_122] : memref<1x4x18x34xf32, #tpu.memory_space<vmem>>, vector<1x1x8x32xf32>
    %249 = vector.shape_cast %248 : vector<1x1x8x32xf32> to vector<8x32xf32>
    %250 = vector.broadcast %246 : f32 to vector<8x32xf32>
    %251 = arith.mulf %250, %249 : vector<8x32xf32>
    %252 = arith.addf %245, %251 : vector<8x32xf32>
    %c25 = arith.constant 25 : index
    %253 = memref.load %arg3[%c25] : memref<192xf32, #tpu.memory_space<smem>>
    %c0_123 = arith.constant 0 : index
    %c2_124 = arith.constant 2 : index
    %254 = arith.index_cast %210 : i32 to index
    %c1_125 = arith.constant 1 : index
    %255 = vector.load %arg2[%c0_123, %c2_124, %254, %c1_125] : memref<1x4x18x34xf32, #tpu.memory_space<vmem>>, vector<1x1x8x32xf32>
    %256 = vector.shape_cast %255 : vector<1x1x8x32xf32> to vector<8x32xf32>
    %257 = vector.broadcast %253 : f32 to vector<8x32xf32>
    %258 = arith.mulf %257, %256 : vector<8x32xf32>
    %259 = arith.addf %252, %258 : vector<8x32xf32>
    %c29 = arith.constant 29 : index
    %260 = memref.load %arg3[%c29] : memref<192xf32, #tpu.memory_space<smem>>
    %c0_126 = arith.constant 0 : index
    %c3_127 = arith.constant 3 : index
    %261 = arith.index_cast %210 : i32 to index
    %c1_128 = arith.constant 1 : index
    %262 = vector.load %arg2[%c0_126, %c3_127, %261, %c1_128] : memref<1x4x18x34xf32, #tpu.memory_space<vmem>>, vector<1x1x8x32xf32>
    %263 = vector.shape_cast %262 : vector<1x1x8x32xf32> to vector<8x32xf32>
    %264 = vector.broadcast %260 : f32 to vector<8x32xf32>
    %265 = arith.mulf %264, %263 : vector<8x32xf32>
    %266 = arith.addf %259, %265 : vector<8x32xf32>
    %c33 = arith.constant 33 : index
    %267 = memref.load %arg3[%c33] : memref<192xf32, #tpu.memory_space<smem>>
    %c0_129 = arith.constant 0 : index
    %c0_130 = arith.constant 0 : index
    %268 = arith.index_cast %210 : i32 to index
    %c2_131 = arith.constant 2 : index
    %269 = vector.load %arg2[%c0_129, %c0_130, %268, %c2_131] : memref<1x4x18x34xf32, #tpu.memory_space<vmem>>, vector<1x1x8x32xf32>
    %270 = vector.shape_cast %269 : vector<1x1x8x32xf32> to vector<8x32xf32>
    %271 = vector.broadcast %267 : f32 to vector<8x32xf32>
    %272 = arith.mulf %271, %270 : vector<8x32xf32>
    %273 = arith.addf %266, %272 : vector<8x32xf32>
    %c37 = arith.constant 37 : index
    %274 = memref.load %arg3[%c37] : memref<192xf32, #tpu.memory_space<smem>>
    %c0_132 = arith.constant 0 : index
    %c1_133 = arith.constant 1 : index
    %275 = arith.index_cast %210 : i32 to index
    %c2_134 = arith.constant 2 : index
    %276 = vector.load %arg2[%c0_132, %c1_133, %275, %c2_134] : memref<1x4x18x34xf32, #tpu.memory_space<vmem>>, vector<1x1x8x32xf32>
    %277 = vector.shape_cast %276 : vector<1x1x8x32xf32> to vector<8x32xf32>
    %278 = vector.broadcast %274 : f32 to vector<8x32xf32>
    %279 = arith.mulf %278, %277 : vector<8x32xf32>
    %280 = arith.addf %273, %279 : vector<8x32xf32>
    %c41 = arith.constant 41 : index
    %281 = memref.load %arg3[%c41] : memref<192xf32, #tpu.memory_space<smem>>
    %c0_135 = arith.constant 0 : index
    %c2_136 = arith.constant 2 : index
    %282 = arith.index_cast %210 : i32 to index
    %c2_137 = arith.constant 2 : index
    %283 = vector.load %arg2[%c0_135, %c2_136, %282, %c2_137] : memref<1x4x18x34xf32, #tpu.memory_space<vmem>>, vector<1x1x8x32xf32>
    %284 = vector.shape_cast %283 : vector<1x1x8x32xf32> to vector<8x32xf32>
    %285 = vector.broadcast %281 : f32 to vector<8x32xf32>
    %286 = arith.mulf %285, %284 : vector<8x32xf32>
    %287 = arith.addf %280, %286 : vector<8x32xf32>
    %c45 = arith.constant 45 : index
    %288 = memref.load %arg3[%c45] : memref<192xf32, #tpu.memory_space<smem>>
    %c0_138 = arith.constant 0 : index
    %c3_139 = arith.constant 3 : index
    %289 = arith.index_cast %210 : i32 to index
    %c2_140 = arith.constant 2 : index
    %290 = vector.load %arg2[%c0_138, %c3_139, %289, %c2_140] : memref<1x4x18x34xf32, #tpu.memory_space<vmem>>, vector<1x1x8x32xf32>
    %291 = vector.shape_cast %290 : vector<1x1x8x32xf32> to vector<8x32xf32>
    %292 = vector.broadcast %288 : f32 to vector<8x32xf32>
    %293 = arith.mulf %292, %291 : vector<8x32xf32>
    %294 = arith.addf %287, %293 : vector<8x32xf32>
    %c0_i32_141 = arith.constant 0 : i32
    %295 = arith.addi %0, %c0_i32_141 : i32
    %c1_i32_142 = arith.constant 1 : i32
    %296 = arith.addi %295, %c1_i32_142 : i32
    %c49 = arith.constant 49 : index
    %297 = memref.load %arg3[%c49] : memref<192xf32, #tpu.memory_space<smem>>
    %c0_143 = arith.constant 0 : index
    %c0_144 = arith.constant 0 : index
    %298 = arith.index_cast %296 : i32 to index
    %c0_145 = arith.constant 0 : index
    %299 = vector.load %arg2[%c0_143, %c0_144, %298, %c0_145] : memref<1x4x18x34xf32, #tpu.memory_space<vmem>>, vector<1x1x8x32xf32>
    %300 = vector.shape_cast %299 : vector<1x1x8x32xf32> to vector<8x32xf32>
    %301 = vector.broadcast %297 : f32 to vector<8x32xf32>
    %302 = arith.mulf %301, %300 : vector<8x32xf32>
    %303 = arith.addf %294, %302 : vector<8x32xf32>
    %c53 = arith.constant 53 : index
    %304 = memref.load %arg3[%c53] : memref<192xf32, #tpu.memory_space<smem>>
    %c0_146 = arith.constant 0 : index
    %c1_147 = arith.constant 1 : index
    %305 = arith.index_cast %296 : i32 to index
    %c0_148 = arith.constant 0 : index
    %306 = vector.load %arg2[%c0_146, %c1_147, %305, %c0_148] : memref<1x4x18x34xf32, #tpu.memory_space<vmem>>, vector<1x1x8x32xf32>
    %307 = vector.shape_cast %306 : vector<1x1x8x32xf32> to vector<8x32xf32>
    %308 = vector.broadcast %304 : f32 to vector<8x32xf32>
    %309 = arith.mulf %308, %307 : vector<8x32xf32>
    %310 = arith.addf %303, %309 : vector<8x32xf32>
    %c57 = arith.constant 57 : index
    %311 = memref.load %arg3[%c57] : memref<192xf32, #tpu.memory_space<smem>>
    %c0_149 = arith.constant 0 : index
    %c2_150 = arith.constant 2 : index
    %312 = arith.index_cast %296 : i32 to index
    %c0_151 = arith.constant 0 : index
    %313 = vector.load %arg2[%c0_149, %c2_150, %312, %c0_151] : memref<1x4x18x34xf32, #tpu.memory_space<vmem>>, vector<1x1x8x32xf32>
    %314 = vector.shape_cast %313 : vector<1x1x8x32xf32> to vector<8x32xf32>
    %315 = vector.broadcast %311 : f32 to vector<8x32xf32>
    %316 = arith.mulf %315, %314 : vector<8x32xf32>
    %317 = arith.addf %310, %316 : vector<8x32xf32>
    %c61 = arith.constant 61 : index
    %318 = memref.load %arg3[%c61] : memref<192xf32, #tpu.memory_space<smem>>
    %c0_152 = arith.constant 0 : index
    %c3_153 = arith.constant 3 : index
    %319 = arith.index_cast %296 : i32 to index
    %c0_154 = arith.constant 0 : index
    %320 = vector.load %arg2[%c0_152, %c3_153, %319, %c0_154] : memref<1x4x18x34xf32, #tpu.memory_space<vmem>>, vector<1x1x8x32xf32>
    %321 = vector.shape_cast %320 : vector<1x1x8x32xf32> to vector<8x32xf32>
    %322 = vector.broadcast %318 : f32 to vector<8x32xf32>
    %323 = arith.mulf %322, %321 : vector<8x32xf32>
    %324 = arith.addf %317, %323 : vector<8x32xf32>
    %c65 = arith.constant 65 : index
    %325 = memref.load %arg3[%c65] : memref<192xf32, #tpu.memory_space<smem>>
    %c0_155 = arith.constant 0 : index
    %c0_156 = arith.constant 0 : index
    %326 = arith.index_cast %296 : i32 to index
    %c1_157 = arith.constant 1 : index
    %327 = vector.load %arg2[%c0_155, %c0_156, %326, %c1_157] : memref<1x4x18x34xf32, #tpu.memory_space<vmem>>, vector<1x1x8x32xf32>
    %328 = vector.shape_cast %327 : vector<1x1x8x32xf32> to vector<8x32xf32>
    %329 = vector.broadcast %325 : f32 to vector<8x32xf32>
    %330 = arith.mulf %329, %328 : vector<8x32xf32>
    %331 = arith.addf %324, %330 : vector<8x32xf32>
    %c69 = arith.constant 69 : index
    %332 = memref.load %arg3[%c69] : memref<192xf32, #tpu.memory_space<smem>>
    %c0_158 = arith.constant 0 : index
    %c1_159 = arith.constant 1 : index
    %333 = arith.index_cast %296 : i32 to index
    %c1_160 = arith.constant 1 : index
    %334 = vector.load %arg2[%c0_158, %c1_159, %333, %c1_160] : memref<1x4x18x34xf32, #tpu.memory_space<vmem>>, vector<1x1x8x32xf32>
    %335 = vector.shape_cast %334 : vector<1x1x8x32xf32> to vector<8x32xf32>
    %336 = vector.broadcast %332 : f32 to vector<8x32xf32>
    %337 = arith.mulf %336, %335 : vector<8x32xf32>
    %338 = arith.addf %331, %337 : vector<8x32xf32>
    %c73 = arith.constant 73 : index
    %339 = memref.load %arg3[%c73] : memref<192xf32, #tpu.memory_space<smem>>
    %c0_161 = arith.constant 0 : index
    %c2_162 = arith.constant 2 : index
    %340 = arith.index_cast %296 : i32 to index
    %c1_163 = arith.constant 1 : index
    %341 = vector.load %arg2[%c0_161, %c2_162, %340, %c1_163] : memref<1x4x18x34xf32, #tpu.memory_space<vmem>>, vector<1x1x8x32xf32>
    %342 = vector.shape_cast %341 : vector<1x1x8x32xf32> to vector<8x32xf32>
    %343 = vector.broadcast %339 : f32 to vector<8x32xf32>
    %344 = arith.mulf %343, %342 : vector<8x32xf32>
    %345 = arith.addf %338, %344 : vector<8x32xf32>
    %c77 = arith.constant 77 : index
    %346 = memref.load %arg3[%c77] : memref<192xf32, #tpu.memory_space<smem>>
    %c0_164 = arith.constant 0 : index
    %c3_165 = arith.constant 3 : index
    %347 = arith.index_cast %296 : i32 to index
    %c1_166 = arith.constant 1 : index
    %348 = vector.load %arg2[%c0_164, %c3_165, %347, %c1_166] : memref<1x4x18x34xf32, #tpu.memory_space<vmem>>, vector<1x1x8x32xf32>
    %349 = vector.shape_cast %348 : vector<1x1x8x32xf32> to vector<8x32xf32>
    %350 = vector.broadcast %346 : f32 to vector<8x32xf32>
    %351 = arith.mulf %350, %349 : vector<8x32xf32>
    %352 = arith.addf %345, %351 : vector<8x32xf32>
    %c81 = arith.constant 81 : index
    %353 = memref.load %arg3[%c81] : memref<192xf32, #tpu.memory_space<smem>>
    %c0_167 = arith.constant 0 : index
    %c0_168 = arith.constant 0 : index
    %354 = arith.index_cast %296 : i32 to index
    %c2_169 = arith.constant 2 : index
    %355 = vector.load %arg2[%c0_167, %c0_168, %354, %c2_169] : memref<1x4x18x34xf32, #tpu.memory_space<vmem>>, vector<1x1x8x32xf32>
    %356 = vector.shape_cast %355 : vector<1x1x8x32xf32> to vector<8x32xf32>
    %357 = vector.broadcast %353 : f32 to vector<8x32xf32>
    %358 = arith.mulf %357, %356 : vector<8x32xf32>
    %359 = arith.addf %352, %358 : vector<8x32xf32>
    %c85 = arith.constant 85 : index
    %360 = memref.load %arg3[%c85] : memref<192xf32, #tpu.memory_space<smem>>
    %c0_170 = arith.constant 0 : index
    %c1_171 = arith.constant 1 : index
    %361 = arith.index_cast %296 : i32 to index
    %c2_172 = arith.constant 2 : index
    %362 = vector.load %arg2[%c0_170, %c1_171, %361, %c2_172] : memref<1x4x18x34xf32, #tpu.memory_space<vmem>>, vector<1x1x8x32xf32>
    %363 = vector.shape_cast %362 : vector<1x1x8x32xf32> to vector<8x32xf32>
    %364 = vector.broadcast %360 : f32 to vector<8x32xf32>
    %365 = arith.mulf %364, %363 : vector<8x32xf32>
    %366 = arith.addf %359, %365 : vector<8x32xf32>
    %c89 = arith.constant 89 : index
    %367 = memref.load %arg3[%c89] : memref<192xf32, #tpu.memory_space<smem>>
    %c0_173 = arith.constant 0 : index
    %c2_174 = arith.constant 2 : index
    %368 = arith.index_cast %296 : i32 to index
    %c2_175 = arith.constant 2 : index
    %369 = vector.load %arg2[%c0_173, %c2_174, %368, %c2_175] : memref<1x4x18x34xf32, #tpu.memory_space<vmem>>, vector<1x1x8x32xf32>
    %370 = vector.shape_cast %369 : vector<1x1x8x32xf32> to vector<8x32xf32>
    %371 = vector.broadcast %367 : f32 to vector<8x32xf32>
    %372 = arith.mulf %371, %370 : vector<8x32xf32>
    %373 = arith.addf %366, %372 : vector<8x32xf32>
    %c93 = arith.constant 93 : index
    %374 = memref.load %arg3[%c93] : memref<192xf32, #tpu.memory_space<smem>>
    %c0_176 = arith.constant 0 : index
    %c3_177 = arith.constant 3 : index
    %375 = arith.index_cast %296 : i32 to index
    %c2_178 = arith.constant 2 : index
    %376 = vector.load %arg2[%c0_176, %c3_177, %375, %c2_178] : memref<1x4x18x34xf32, #tpu.memory_space<vmem>>, vector<1x1x8x32xf32>
    %377 = vector.shape_cast %376 : vector<1x1x8x32xf32> to vector<8x32xf32>
    %378 = vector.broadcast %374 : f32 to vector<8x32xf32>
    %379 = arith.mulf %378, %377 : vector<8x32xf32>
    %380 = arith.addf %373, %379 : vector<8x32xf32>
    %381 = vector.extract_strided_slice %380 {offsets = [0, 0], sizes = [1, 32], strides = [1, 1]} : vector<8x32xf32> to vector<1x32xf32>
    %c0_179 = arith.constant 0 : index
    %c1_180 = arith.constant 1 : index
    %c0_181 = arith.constant 0 : index
    %c0_182 = arith.constant 0 : index
    %382 = vector.load %arg5[%c0_179, %c1_180, %c0_181, %c0_182] : memref<1x4x16x32xf32, #tpu.memory_space<vmem>>, vector<1x1x1x32xf32>
    %383 = vector.shape_cast %382 : vector<1x1x1x32xf32> to vector<1x32xf32>
    %384 = vector.shape_cast %381 : vector<1x32xf32> to vector<1x1x1x32xf32>
    tpu.vector_store %arg5[%c0_179, %c1_180, %c0_181, %c0_182], %384 {strides = array<i32>} : memref<1x4x16x32xf32, #tpu.memory_space<vmem>>, vector<1x1x1x32xf32>,
    %385 = vector.extract_strided_slice %380 {offsets = [1, 0], sizes = [1, 32], strides = [1, 1]} : vector<8x32xf32> to vector<1x32xf32>
    %c0_183 = arith.constant 0 : index
    %c1_184 = arith.constant 1 : index
    %c2_185 = arith.constant 2 : index
    %c0_186 = arith.constant 0 : index
    %386 = vector.load %arg5[%c0_183, %c1_184, %c2_185, %c0_186] : memref<1x4x16x32xf32, #tpu.memory_space<vmem>>, vector<1x1x1x32xf32>
    %387 = vector.shape_cast %386 : vector<1x1x1x32xf32> to vector<1x32xf32>
    %388 = vector.shape_cast %385 : vector<1x32xf32> to vector<1x1x1x32xf32>
    tpu.vector_store %arg5[%c0_183, %c1_184, %c2_185, %c0_186], %388 {strides = array<i32>} : memref<1x4x16x32xf32, #tpu.memory_space<vmem>>, vector<1x1x1x32xf32>,
    %389 = vector.extract_strided_slice %380 {offsets = [2, 0], sizes = [1, 32], strides = [1, 1]} : vector<8x32xf32> to vector<1x32xf32>
    %c0_187 = arith.constant 0 : index
    %c1_188 = arith.constant 1 : index
    %c4_189 = arith.constant 4 : index
    %c0_190 = arith.constant 0 : index
    %390 = vector.load %arg5[%c0_187, %c1_188, %c4_189, %c0_190] : memref<1x4x16x32xf32, #tpu.memory_space<vmem>>, vector<1x1x1x32xf32>
    %391 = vector.shape_cast %390 : vector<1x1x1x32xf32> to vector<1x32xf32>
    %392 = vector.shape_cast %389 : vector<1x32xf32> to vector<1x1x1x32xf32>
    tpu.vector_store %arg5[%c0_187, %c1_188, %c4_189, %c0_190], %392 {strides = array<i32>} : memref<1x4x16x32xf32, #tpu.memory_space<vmem>>, vector<1x1x1x32xf32>,
    %393 = vector.extract_strided_slice %380 {offsets = [3, 0], sizes = [1, 32], strides = [1, 1]} : vector<8x32xf32> to vector<1x32xf32>
    %c0_191 = arith.constant 0 : index
    %c1_192 = arith.constant 1 : index
    %c6_193 = arith.constant 6 : index
    %c0_194 = arith.constant 0 : index
    %394 = vector.load %arg5[%c0_191, %c1_192, %c6_193, %c0_194] : memref<1x4x16x32xf32, #tpu.memory_space<vmem>>, vector<1x1x1x32xf32>
    %395 = vector.shape_cast %394 : vector<1x1x1x32xf32> to vector<1x32xf32>
    %396 = vector.shape_cast %393 : vector<1x32xf32> to vector<1x1x1x32xf32>
    tpu.vector_store %arg5[%c0_191, %c1_192, %c6_193, %c0_194], %396 {strides = array<i32>} : memref<1x4x16x32xf32, #tpu.memory_space<vmem>>, vector<1x1x1x32xf32>,
    %397 = vector.extract_strided_slice %380 {offsets = [4, 0], sizes = [1, 32], strides = [1, 1]} : vector<8x32xf32> to vector<1x32xf32>
    %c0_195 = arith.constant 0 : index
    %c1_196 = arith.constant 1 : index
    %c8_197 = arith.constant 8 : index
    %c0_198 = arith.constant 0 : index
    %398 = vector.load %arg5[%c0_195, %c1_196, %c8_197, %c0_198] : memref<1x4x16x32xf32, #tpu.memory_space<vmem>>, vector<1x1x1x32xf32>
    %399 = vector.shape_cast %398 : vector<1x1x1x32xf32> to vector<1x32xf32>
    %400 = vector.shape_cast %397 : vector<1x32xf32> to vector<1x1x1x32xf32>
    tpu.vector_store %arg5[%c0_195, %c1_196, %c8_197, %c0_198], %400 {strides = array<i32>} : memref<1x4x16x32xf32, #tpu.memory_space<vmem>>, vector<1x1x1x32xf32>,
    %401 = vector.extract_strided_slice %380 {offsets = [5, 0], sizes = [1, 32], strides = [1, 1]} : vector<8x32xf32> to vector<1x32xf32>
    %c0_199 = arith.constant 0 : index
    %c1_200 = arith.constant 1 : index
    %c10_201 = arith.constant 10 : index
    %c0_202 = arith.constant 0 : index
    %402 = vector.load %arg5[%c0_199, %c1_200, %c10_201, %c0_202] : memref<1x4x16x32xf32, #tpu.memory_space<vmem>>, vector<1x1x1x32xf32>
    %403 = vector.shape_cast %402 : vector<1x1x1x32xf32> to vector<1x32xf32>
    %404 = vector.shape_cast %401 : vector<1x32xf32> to vector<1x1x1x32xf32>
    tpu.vector_store %arg5[%c0_199, %c1_200, %c10_201, %c0_202], %404 {strides = array<i32>} : memref<1x4x16x32xf32, #tpu.memory_space<vmem>>, vector<1x1x1x32xf32>,
    %405 = vector.extract_strided_slice %380 {offsets = [6, 0], sizes = [1, 32], strides = [1, 1]} : vector<8x32xf32> to vector<1x32xf32>
    %c0_203 = arith.constant 0 : index
    %c1_204 = arith.constant 1 : index
    %c12_205 = arith.constant 12 : index
    %c0_206 = arith.constant 0 : index
    %406 = vector.load %arg5[%c0_203, %c1_204, %c12_205, %c0_206] : memref<1x4x16x32xf32, #tpu.memory_space<vmem>>, vector<1x1x1x32xf32>
    %407 = vector.shape_cast %406 : vector<1x1x1x32xf32> to vector<1x32xf32>
    %408 = vector.shape_cast %405 : vector<1x32xf32> to vector<1x1x1x32xf32>
    tpu.vector_store %arg5[%c0_203, %c1_204, %c12_205, %c0_206], %408 {strides = array<i32>} : memref<1x4x16x32xf32, #tpu.memory_space<vmem>>, vector<1x1x1x32xf32>,
    %409 = vector.extract_strided_slice %380 {offsets = [7, 0], sizes = [1, 32], strides = [1, 1]} : vector<8x32xf32> to vector<1x32xf32>
    %c0_207 = arith.constant 0 : index
    %c1_208 = arith.constant 1 : index
    %c14_209 = arith.constant 14 : index
    %c0_210 = arith.constant 0 : index
    %410 = vector.load %arg5[%c0_207, %c1_208, %c14_209, %c0_210] : memref<1x4x16x32xf32, #tpu.memory_space<vmem>>, vector<1x1x1x32xf32>
    %411 = vector.shape_cast %410 : vector<1x1x1x32xf32> to vector<1x32xf32>
    %412 = vector.shape_cast %409 : vector<1x32xf32> to vector<1x1x1x32xf32>
    tpu.vector_store %arg5[%c0_207, %c1_208, %c14_209, %c0_210], %412 {strides = array<i32>} : memref<1x4x16x32xf32, #tpu.memory_space<vmem>>, vector<1x1x1x32xf32>,
    %c2_211 = arith.constant 2 : index
    %413 = memref.load %arg4[%c2_211] : memref<4xf32, #tpu.memory_space<smem>>
    %414 = vector.broadcast %413 : f32 to vector<8x32xf32>
    %c0_i32_212 = arith.constant 0 : i32
    %415 = arith.addi %0, %c0_i32_212 : i32
    %c0_i32_213 = arith.constant 0 : i32
    %416 = arith.addi %415, %c0_i32_213 : i32
    %c2_214 = arith.constant 2 : index
    %417 = memref.load %arg3[%c2_214] : memref<192xf32, #tpu.memory_space<smem>>
    %c0_215 = arith.constant 0 : index
    %c0_216 = arith.constant 0 : index
    %418 = arith.index_cast %416 : i32 to index
    %c0_217 = arith.constant 0 : index
    %419 = vector.load %arg2[%c0_215, %c0_216, %418, %c0_217] : memref<1x4x18x34xf32, #tpu.memory_space<vmem>>, vector<1x1x8x32xf32>
    %420 = vector.shape_cast %419 : vector<1x1x8x32xf32> to vector<8x32xf32>
    %421 = vector.broadcast %417 : f32 to vector<8x32xf32>
    %422 = arith.mulf %421, %420 : vector<8x32xf32>
    %423 = arith.addf %414, %422 : vector<8x32xf32>
    %c6_218 = arith.constant 6 : index
    %424 = memref.load %arg3[%c6_218] : memref<192xf32, #tpu.memory_space<smem>>
    %c0_219 = arith.constant 0 : index
    %c1_220 = arith.constant 1 : index
    %425 = arith.index_cast %416 : i32 to index
    %c0_221 = arith.constant 0 : index
    %426 = vector.load %arg2[%c0_219, %c1_220, %425, %c0_221] : memref<1x4x18x34xf32, #tpu.memory_space<vmem>>, vector<1x1x8x32xf32>
    %427 = vector.shape_cast %426 : vector<1x1x8x32xf32> to vector<8x32xf32>
    %428 = vector.broadcast %424 : f32 to vector<8x32xf32>
    %429 = arith.mulf %428, %427 : vector<8x32xf32>
    %430 = arith.addf %423, %429 : vector<8x32xf32>
    %c10_222 = arith.constant 10 : index
    %431 = memref.load %arg3[%c10_222] : memref<192xf32, #tpu.memory_space<smem>>
    %c0_223 = arith.constant 0 : index
    %c2_224 = arith.constant 2 : index
    %432 = arith.index_cast %416 : i32 to index
    %c0_225 = arith.constant 0 : index
    %433 = vector.load %arg2[%c0_223, %c2_224, %432, %c0_225] : memref<1x4x18x34xf32, #tpu.memory_space<vmem>>, vector<1x1x8x32xf32>
    %434 = vector.shape_cast %433 : vector<1x1x8x32xf32> to vector<8x32xf32>
    %435 = vector.broadcast %431 : f32 to vector<8x32xf32>
    %436 = arith.mulf %435, %434 : vector<8x32xf32>
    %437 = arith.addf %430, %436 : vector<8x32xf32>
    %c14_226 = arith.constant 14 : index
    %438 = memref.load %arg3[%c14_226] : memref<192xf32, #tpu.memory_space<smem>>
    %c0_227 = arith.constant 0 : index
    %c3_228 = arith.constant 3 : index
    %439 = arith.index_cast %416 : i32 to index
    %c0_229 = arith.constant 0 : index
    %440 = vector.load %arg2[%c0_227, %c3_228, %439, %c0_229] : memref<1x4x18x34xf32, #tpu.memory_space<vmem>>, vector<1x1x8x32xf32>
    %441 = vector.shape_cast %440 : vector<1x1x8x32xf32> to vector<8x32xf32>
    %442 = vector.broadcast %438 : f32 to vector<8x32xf32>
    %443 = arith.mulf %442, %441 : vector<8x32xf32>
    %444 = arith.addf %437, %443 : vector<8x32xf32>
    %c18 = arith.constant 18 : index
    %445 = memref.load %arg3[%c18] : memref<192xf32, #tpu.memory_space<smem>>
    %c0_230 = arith.constant 0 : index
    %c0_231 = arith.constant 0 : index
    %446 = arith.index_cast %416 : i32 to index
    %c1_232 = arith.constant 1 : index
    %447 = vector.load %arg2[%c0_230, %c0_231, %446, %c1_232] : memref<1x4x18x34xf32, #tpu.memory_space<vmem>>, vector<1x1x8x32xf32>
    %448 = vector.shape_cast %447 : vector<1x1x8x32xf32> to vector<8x32xf32>
    %449 = vector.broadcast %445 : f32 to vector<8x32xf32>
    %450 = arith.mulf %449, %448 : vector<8x32xf32>
    %451 = arith.addf %444, %450 : vector<8x32xf32>
    %c22 = arith.constant 22 : index
    %452 = memref.load %arg3[%c22] : memref<192xf32, #tpu.memory_space<smem>>
    %c0_233 = arith.constant 0 : index
    %c1_234 = arith.constant 1 : index
    %453 = arith.index_cast %416 : i32 to index
    %c1_235 = arith.constant 1 : index
    %454 = vector.load %arg2[%c0_233, %c1_234, %453, %c1_235] : memref<1x4x18x34xf32, #tpu.memory_space<vmem>>, vector<1x1x8x32xf32>
    %455 = vector.shape_cast %454 : vector<1x1x8x32xf32> to vector<8x32xf32>
    %456 = vector.broadcast %452 : f32 to vector<8x32xf32>
    %457 = arith.mulf %456, %455 : vector<8x32xf32>
    %458 = arith.addf %451, %457 : vector<8x32xf32>
    %c26 = arith.constant 26 : index
    %459 = memref.load %arg3[%c26] : memref<192xf32, #tpu.memory_space<smem>>
    %c0_236 = arith.constant 0 : index
    %c2_237 = arith.constant 2 : index
    %460 = arith.index_cast %416 : i32 to index
    %c1_238 = arith.constant 1 : index
    %461 = vector.load %arg2[%c0_236, %c2_237, %460, %c1_238] : memref<1x4x18x34xf32, #tpu.memory_space<vmem>>, vector<1x1x8x32xf32>
    %462 = vector.shape_cast %461 : vector<1x1x8x32xf32> to vector<8x32xf32>
    %463 = vector.broadcast %459 : f32 to vector<8x32xf32>
    %464 = arith.mulf %463, %462 : vector<8x32xf32>
    %465 = arith.addf %458, %464 : vector<8x32xf32>
    %c30 = arith.constant 30 : index
    %466 = memref.load %arg3[%c30] : memref<192xf32, #tpu.memory_space<smem>>
    %c0_239 = arith.constant 0 : index
    %c3_240 = arith.constant 3 : index
    %467 = arith.index_cast %416 : i32 to index
    %c1_241 = arith.constant 1 : index
    %468 = vector.load %arg2[%c0_239, %c3_240, %467, %c1_241] : memref<1x4x18x34xf32, #tpu.memory_space<vmem>>, vector<1x1x8x32xf32>
    %469 = vector.shape_cast %468 : vector<1x1x8x32xf32> to vector<8x32xf32>
    %470 = vector.broadcast %466 : f32 to vector<8x32xf32>
    %471 = arith.mulf %470, %469 : vector<8x32xf32>
    %472 = arith.addf %465, %471 : vector<8x32xf32>
    %c34 = arith.constant 34 : index
    %473 = memref.load %arg3[%c34] : memref<192xf32, #tpu.memory_space<smem>>
    %c0_242 = arith.constant 0 : index
    %c0_243 = arith.constant 0 : index
    %474 = arith.index_cast %416 : i32 to index
    %c2_244 = arith.constant 2 : index
    %475 = vector.load %arg2[%c0_242, %c0_243, %474, %c2_244] : memref<1x4x18x34xf32, #tpu.memory_space<vmem>>, vector<1x1x8x32xf32>
    %476 = vector.shape_cast %475 : vector<1x1x8x32xf32> to vector<8x32xf32>
    %477 = vector.broadcast %473 : f32 to vector<8x32xf32>
    %478 = arith.mulf %477, %476 : vector<8x32xf32>
    %479 = arith.addf %472, %478 : vector<8x32xf32>
    %c38 = arith.constant 38 : index
    %480 = memref.load %arg3[%c38] : memref<192xf32, #tpu.memory_space<smem>>
    %c0_245 = arith.constant 0 : index
    %c1_246 = arith.constant 1 : index
    %481 = arith.index_cast %416 : i32 to index
    %c2_247 = arith.constant 2 : index
    %482 = vector.load %arg2[%c0_245, %c1_246, %481, %c2_247] : memref<1x4x18x34xf32, #tpu.memory_space<vmem>>, vector<1x1x8x32xf32>
    %483 = vector.shape_cast %482 : vector<1x1x8x32xf32> to vector<8x32xf32>
    %484 = vector.broadcast %480 : f32 to vector<8x32xf32>
    %485 = arith.mulf %484, %483 : vector<8x32xf32>
    %486 = arith.addf %479, %485 : vector<8x32xf32>
    %c42 = arith.constant 42 : index
    %487 = memref.load %arg3[%c42] : memref<192xf32, #tpu.memory_space<smem>>
    %c0_248 = arith.constant 0 : index
    %c2_249 = arith.constant 2 : index
    %488 = arith.index_cast %416 : i32 to index
    %c2_250 = arith.constant 2 : index
    %489 = vector.load %arg2[%c0_248, %c2_249, %488, %c2_250] : memref<1x4x18x34xf32, #tpu.memory_space<vmem>>, vector<1x1x8x32xf32>
    %490 = vector.shape_cast %489 : vector<1x1x8x32xf32> to vector<8x32xf32>
    %491 = vector.broadcast %487 : f32 to vector<8x32xf32>
    %492 = arith.mulf %491, %490 : vector<8x32xf32>
    %493 = arith.addf %486, %492 : vector<8x32xf32>
    %c46 = arith.constant 46 : index
    %494 = memref.load %arg3[%c46] : memref<192xf32, #tpu.memory_space<smem>>
    %c0_251 = arith.constant 0 : index
    %c3_252 = arith.constant 3 : index
    %495 = arith.index_cast %416 : i32 to index
    %c2_253 = arith.constant 2 : index
    %496 = vector.load %arg2[%c0_251, %c3_252, %495, %c2_253] : memref<1x4x18x34xf32, #tpu.memory_space<vmem>>, vector<1x1x8x32xf32>
    %497 = vector.shape_cast %496 : vector<1x1x8x32xf32> to vector<8x32xf32>
    %498 = vector.broadcast %494 : f32 to vector<8x32xf32>
    %499 = arith.mulf %498, %497 : vector<8x32xf32>
    %500 = arith.addf %493, %499 : vector<8x32xf32>
    %c0_i32_254 = arith.constant 0 : i32
    %501 = arith.addi %0, %c0_i32_254 : i32
    %c1_i32_255 = arith.constant 1 : i32
    %502 = arith.addi %501, %c1_i32_255 : i32
    %c50 = arith.constant 50 : index
    %503 = memref.load %arg3[%c50] : memref<192xf32, #tpu.memory_space<smem>>
    %c0_256 = arith.constant 0 : index
    %c0_257 = arith.constant 0 : index
    %504 = arith.index_cast %502 : i32 to index
    %c0_258 = arith.constant 0 : index
    %505 = vector.load %arg2[%c0_256, %c0_257, %504, %c0_258] : memref<1x4x18x34xf32, #tpu.memory_space<vmem>>, vector<1x1x8x32xf32>
    %506 = vector.shape_cast %505 : vector<1x1x8x32xf32> to vector<8x32xf32>
    %507 = vector.broadcast %503 : f32 to vector<8x32xf32>
    %508 = arith.mulf %507, %506 : vector<8x32xf32>
    %509 = arith.addf %500, %508 : vector<8x32xf32>
    %c54 = arith.constant 54 : index
    %510 = memref.load %arg3[%c54] : memref<192xf32, #tpu.memory_space<smem>>
    %c0_259 = arith.constant 0 : index
    %c1_260 = arith.constant 1 : index
    %511 = arith.index_cast %502 : i32 to index
    %c0_261 = arith.constant 0 : index
    %512 = vector.load %arg2[%c0_259, %c1_260, %511, %c0_261] : memref<1x4x18x34xf32, #tpu.memory_space<vmem>>, vector<1x1x8x32xf32>
    %513 = vector.shape_cast %512 : vector<1x1x8x32xf32> to vector<8x32xf32>
    %514 = vector.broadcast %510 : f32 to vector<8x32xf32>
    %515 = arith.mulf %514, %513 : vector<8x32xf32>
    %516 = arith.addf %509, %515 : vector<8x32xf32>
    %c58 = arith.constant 58 : index
    %517 = memref.load %arg3[%c58] : memref<192xf32, #tpu.memory_space<smem>>
    %c0_262 = arith.constant 0 : index
    %c2_263 = arith.constant 2 : index
    %518 = arith.index_cast %502 : i32 to index
    %c0_264 = arith.constant 0 : index
    %519 = vector.load %arg2[%c0_262, %c2_263, %518, %c0_264] : memref<1x4x18x34xf32, #tpu.memory_space<vmem>>, vector<1x1x8x32xf32>
    %520 = vector.shape_cast %519 : vector<1x1x8x32xf32> to vector<8x32xf32>
    %521 = vector.broadcast %517 : f32 to vector<8x32xf32>
    %522 = arith.mulf %521, %520 : vector<8x32xf32>
    %523 = arith.addf %516, %522 : vector<8x32xf32>
    %c62 = arith.constant 62 : index
    %524 = memref.load %arg3[%c62] : memref<192xf32, #tpu.memory_space<smem>>
    %c0_265 = arith.constant 0 : index
    %c3_266 = arith.constant 3 : index
    %525 = arith.index_cast %502 : i32 to index
    %c0_267 = arith.constant 0 : index
    %526 = vector.load %arg2[%c0_265, %c3_266, %525, %c0_267] : memref<1x4x18x34xf32, #tpu.memory_space<vmem>>, vector<1x1x8x32xf32>
    %527 = vector.shape_cast %526 : vector<1x1x8x32xf32> to vector<8x32xf32>
    %528 = vector.broadcast %524 : f32 to vector<8x32xf32>
    %529 = arith.mulf %528, %527 : vector<8x32xf32>
    %530 = arith.addf %523, %529 : vector<8x32xf32>
    %c66 = arith.constant 66 : index
    %531 = memref.load %arg3[%c66] : memref<192xf32, #tpu.memory_space<smem>>
    %c0_268 = arith.constant 0 : index
    %c0_269 = arith.constant 0 : index
    %532 = arith.index_cast %502 : i32 to index
    %c1_270 = arith.constant 1 : index
    %533 = vector.load %arg2[%c0_268, %c0_269, %532, %c1_270] : memref<1x4x18x34xf32, #tpu.memory_space<vmem>>, vector<1x1x8x32xf32>
    %534 = vector.shape_cast %533 : vector<1x1x8x32xf32> to vector<8x32xf32>
    %535 = vector.broadcast %531 : f32 to vector<8x32xf32>
    %536 = arith.mulf %535, %534 : vector<8x32xf32>
    %537 = arith.addf %530, %536 : vector<8x32xf32>
    %c70 = arith.constant 70 : index
    %538 = memref.load %arg3[%c70] : memref<192xf32, #tpu.memory_space<smem>>
    %c0_271 = arith.constant 0 : index
    %c1_272 = arith.constant 1 : index
    %539 = arith.index_cast %502 : i32 to index
    %c1_273 = arith.constant 1 : index
    %540 = vector.load %arg2[%c0_271, %c1_272, %539, %c1_273] : memref<1x4x18x34xf32, #tpu.memory_space<vmem>>, vector<1x1x8x32xf32>
    %541 = vector.shape_cast %540 : vector<1x1x8x32xf32> to vector<8x32xf32>
    %542 = vector.broadcast %538 : f32 to vector<8x32xf32>
    %543 = arith.mulf %542, %541 : vector<8x32xf32>
    %544 = arith.addf %537, %543 : vector<8x32xf32>
    %c74 = arith.constant 74 : index
    %545 = memref.load %arg3[%c74] : memref<192xf32, #tpu.memory_space<smem>>
    %c0_274 = arith.constant 0 : index
    %c2_275 = arith.constant 2 : index
    %546 = arith.index_cast %502 : i32 to index
    %c1_276 = arith.constant 1 : index
    %547 = vector.load %arg2[%c0_274, %c2_275, %546, %c1_276] : memref<1x4x18x34xf32, #tpu.memory_space<vmem>>, vector<1x1x8x32xf32>
    %548 = vector.shape_cast %547 : vector<1x1x8x32xf32> to vector<8x32xf32>
    %549 = vector.broadcast %545 : f32 to vector<8x32xf32>
    %550 = arith.mulf %549, %548 : vector<8x32xf32>
    %551 = arith.addf %544, %550 : vector<8x32xf32>
    %c78 = arith.constant 78 : index
    %552 = memref.load %arg3[%c78] : memref<192xf32, #tpu.memory_space<smem>>
    %c0_277 = arith.constant 0 : index
    %c3_278 = arith.constant 3 : index
    %553 = arith.index_cast %502 : i32 to index
    %c1_279 = arith.constant 1 : index
    %554 = vector.load %arg2[%c0_277, %c3_278, %553, %c1_279] : memref<1x4x18x34xf32, #tpu.memory_space<vmem>>, vector<1x1x8x32xf32>
    %555 = vector.shape_cast %554 : vector<1x1x8x32xf32> to vector<8x32xf32>
    %556 = vector.broadcast %552 : f32 to vector<8x32xf32>
    %557 = arith.mulf %556, %555 : vector<8x32xf32>
    %558 = arith.addf %551, %557 : vector<8x32xf32>
    %c82 = arith.constant 82 : index
    %559 = memref.load %arg3[%c82] : memref<192xf32, #tpu.memory_space<smem>>
    %c0_280 = arith.constant 0 : index
    %c0_281 = arith.constant 0 : index
    %560 = arith.index_cast %502 : i32 to index
    %c2_282 = arith.constant 2 : index
    %561 = vector.load %arg2[%c0_280, %c0_281, %560, %c2_282] : memref<1x4x18x34xf32, #tpu.memory_space<vmem>>, vector<1x1x8x32xf32>
    %562 = vector.shape_cast %561 : vector<1x1x8x32xf32> to vector<8x32xf32>
    %563 = vector.broadcast %559 : f32 to vector<8x32xf32>
    %564 = arith.mulf %563, %562 : vector<8x32xf32>
    %565 = arith.addf %558, %564 : vector<8x32xf32>
    %c86 = arith.constant 86 : index
    %566 = memref.load %arg3[%c86] : memref<192xf32, #tpu.memory_space<smem>>
    %c0_283 = arith.constant 0 : index
    %c1_284 = arith.constant 1 : index
    %567 = arith.index_cast %502 : i32 to index
    %c2_285 = arith.constant 2 : index
    %568 = vector.load %arg2[%c0_283, %c1_284, %567, %c2_285] : memref<1x4x18x34xf32, #tpu.memory_space<vmem>>, vector<1x1x8x32xf32>
    %569 = vector.shape_cast %568 : vector<1x1x8x32xf32> to vector<8x32xf32>
    %570 = vector.broadcast %566 : f32 to vector<8x32xf32>
    %571 = arith.mulf %570, %569 : vector<8x32xf32>
    %572 = arith.addf %565, %571 : vector<8x32xf32>
    %c90 = arith.constant 90 : index
    %573 = memref.load %arg3[%c90] : memref<192xf32, #tpu.memory_space<smem>>
    %c0_286 = arith.constant 0 : index
    %c2_287 = arith.constant 2 : index
    %574 = arith.index_cast %502 : i32 to index
    %c2_288 = arith.constant 2 : index
    %575 = vector.load %arg2[%c0_286, %c2_287, %574, %c2_288] : memref<1x4x18x34xf32, #tpu.memory_space<vmem>>, vector<1x1x8x32xf32>
    %576 = vector.shape_cast %575 : vector<1x1x8x32xf32> to vector<8x32xf32>
    %577 = vector.broadcast %573 : f32 to vector<8x32xf32>
    %578 = arith.mulf %577, %576 : vector<8x32xf32>
    %579 = arith.addf %572, %578 : vector<8x32xf32>
    %c94 = arith.constant 94 : index
    %580 = memref.load %arg3[%c94] : memref<192xf32, #tpu.memory_space<smem>>
    %c0_289 = arith.constant 0 : index
    %c3_290 = arith.constant 3 : index
    %581 = arith.index_cast %502 : i32 to index
    %c2_291 = arith.constant 2 : index
    %582 = vector.load %arg2[%c0_289, %c3_290, %581, %c2_291] : memref<1x4x18x34xf32, #tpu.memory_space<vmem>>, vector<1x1x8x32xf32>
    %583 = vector.shape_cast %582 : vector<1x1x8x32xf32> to vector<8x32xf32>
    %584 = vector.broadcast %580 : f32 to vector<8x32xf32>
    %585 = arith.mulf %584, %583 : vector<8x32xf32>
    %586 = arith.addf %579, %585 : vector<8x32xf32>
    %587 = vector.extract_strided_slice %586 {offsets = [0, 0], sizes = [1, 32], strides = [1, 1]} : vector<8x32xf32> to vector<1x32xf32>
    %c0_292 = arith.constant 0 : index
    %c2_293 = arith.constant 2 : index
    %c0_294 = arith.constant 0 : index
    %c0_295 = arith.constant 0 : index
    %588 = vector.load %arg5[%c0_292, %c2_293, %c0_294, %c0_295] : memref<1x4x16x32xf32, #tpu.memory_space<vmem>>, vector<1x1x1x32xf32>
    %589 = vector.shape_cast %588 : vector<1x1x1x32xf32> to vector<1x32xf32>
    %590 = vector.shape_cast %587 : vector<1x32xf32> to vector<1x1x1x32xf32>
    tpu.vector_store %arg5[%c0_292, %c2_293, %c0_294, %c0_295], %590 {strides = array<i32>} : memref<1x4x16x32xf32, #tpu.memory_space<vmem>>, vector<1x1x1x32xf32>,
    %591 = vector.extract_strided_slice %586 {offsets = [1, 0], sizes = [1, 32], strides = [1, 1]} : vector<8x32xf32> to vector<1x32xf32>
    %c0_296 = arith.constant 0 : index
    %c2_297 = arith.constant 2 : index
    %c2_298 = arith.constant 2 : index
    %c0_299 = arith.constant 0 : index
    %592 = vector.load %arg5[%c0_296, %c2_297, %c2_298, %c0_299] : memref<1x4x16x32xf32, #tpu.memory_space<vmem>>, vector<1x1x1x32xf32>
    %593 = vector.shape_cast %592 : vector<1x1x1x32xf32> to vector<1x32xf32>
    %594 = vector.shape_cast %591 : vector<1x32xf32> to vector<1x1x1x32xf32>
    tpu.vector_store %arg5[%c0_296, %c2_297, %c2_298, %c0_299], %594 {strides = array<i32>} : memref<1x4x16x32xf32, #tpu.memory_space<vmem>>, vector<1x1x1x32xf32>,
    %595 = vector.extract_strided_slice %586 {offsets = [2, 0], sizes = [1, 32], strides = [1, 1]} : vector<8x32xf32> to vector<1x32xf32>
    %c0_300 = arith.constant 0 : index
    %c2_301 = arith.constant 2 : index
    %c4_302 = arith.constant 4 : index
    %c0_303 = arith.constant 0 : index
    %596 = vector.load %arg5[%c0_300, %c2_301, %c4_302, %c0_303] : memref<1x4x16x32xf32, #tpu.memory_space<vmem>>, vector<1x1x1x32xf32>
    %597 = vector.shape_cast %596 : vector<1x1x1x32xf32> to vector<1x32xf32>
    %598 = vector.shape_cast %595 : vector<1x32xf32> to vector<1x1x1x32xf32>
    tpu.vector_store %arg5[%c0_300, %c2_301, %c4_302, %c0_303], %598 {strides = array<i32>} : memref<1x4x16x32xf32, #tpu.memory_space<vmem>>, vector<1x1x1x32xf32>,
    %599 = vector.extract_strided_slice %586 {offsets = [3, 0], sizes = [1, 32], strides = [1, 1]} : vector<8x32xf32> to vector<1x32xf32>
    %c0_304 = arith.constant 0 : index
    %c2_305 = arith.constant 2 : index
    %c6_306 = arith.constant 6 : index
    %c0_307 = arith.constant 0 : index
    %600 = vector.load %arg5[%c0_304, %c2_305, %c6_306, %c0_307] : memref<1x4x16x32xf32, #tpu.memory_space<vmem>>, vector<1x1x1x32xf32>
    %601 = vector.shape_cast %600 : vector<1x1x1x32xf32> to vector<1x32xf32>
    %602 = vector.shape_cast %599 : vector<1x32xf32> to vector<1x1x1x32xf32>
    tpu.vector_store %arg5[%c0_304, %c2_305, %c6_306, %c0_307], %602 {strides = array<i32>} : memref<1x4x16x32xf32, #tpu.memory_space<vmem>>, vector<1x1x1x32xf32>,
    %603 = vector.extract_strided_slice %586 {offsets = [4, 0], sizes = [1, 32], strides = [1, 1]} : vector<8x32xf32> to vector<1x32xf32>
    %c0_308 = arith.constant 0 : index
    %c2_309 = arith.constant 2 : index
    %c8_310 = arith.constant 8 : index
    %c0_311 = arith.constant 0 : index
    %604 = vector.load %arg5[%c0_308, %c2_309, %c8_310, %c0_311] : memref<1x4x16x32xf32, #tpu.memory_space<vmem>>, vector<1x1x1x32xf32>
    %605 = vector.shape_cast %604 : vector<1x1x1x32xf32> to vector<1x32xf32>
    %606 = vector.shape_cast %603 : vector<1x32xf32> to vector<1x1x1x32xf32>
    tpu.vector_store %arg5[%c0_308, %c2_309, %c8_310, %c0_311], %606 {strides = array<i32>} : memref<1x4x16x32xf32, #tpu.memory_space<vmem>>, vector<1x1x1x32xf32>,
    %607 = vector.extract_strided_slice %586 {offsets = [5, 0], sizes = [1, 32], strides = [1, 1]} : vector<8x32xf32> to vector<1x32xf32>
    %c0_312 = arith.constant 0 : index
    %c2_313 = arith.constant 2 : index
    %c10_314 = arith.constant 10 : index
    %c0_315 = arith.constant 0 : index
    %608 = vector.load %arg5[%c0_312, %c2_313, %c10_314, %c0_315] : memref<1x4x16x32xf32, #tpu.memory_space<vmem>>, vector<1x1x1x32xf32>
    %609 = vector.shape_cast %608 : vector<1x1x1x32xf32> to vector<1x32xf32>
    %610 = vector.shape_cast %607 : vector<1x32xf32> to vector<1x1x1x32xf32>
    tpu.vector_store %arg5[%c0_312, %c2_313, %c10_314, %c0_315], %610 {strides = array<i32>} : memref<1x4x16x32xf32, #tpu.memory_space<vmem>>, vector<1x1x1x32xf32>,
    %611 = vector.extract_strided_slice %586 {offsets = [6, 0], sizes = [1, 32], strides = [1, 1]} : vector<8x32xf32> to vector<1x32xf32>
    %c0_316 = arith.constant 0 : index
    %c2_317 = arith.constant 2 : index
    %c12_318 = arith.constant 12 : index
    %c0_319 = arith.constant 0 : index
    %612 = vector.load %arg5[%c0_316, %c2_317, %c12_318, %c0_319] : memref<1x4x16x32xf32, #tpu.memory_space<vmem>>, vector<1x1x1x32xf32>
    %613 = vector.shape_cast %612 : vector<1x1x1x32xf32> to vector<1x32xf32>
    %614 = vector.shape_cast %611 : vector<1x32xf32> to vector<1x1x1x32xf32>
    tpu.vector_store %arg5[%c0_316, %c2_317, %c12_318, %c0_319], %614 {strides = array<i32>} : memref<1x4x16x32xf32, #tpu.memory_space<vmem>>, vector<1x1x1x32xf32>,
    %615 = vector.extract_strided_slice %586 {offsets = [7, 0], sizes = [1, 32], strides = [1, 1]} : vector<8x32xf32> to vector<1x32xf32>
    %c0_320 = arith.constant 0 : index
    %c2_321 = arith.constant 2 : index
    %c14_322 = arith.constant 14 : index
    %c0_323 = arith.constant 0 : index
    %616 = vector.load %arg5[%c0_320, %c2_321, %c14_322, %c0_323] : memref<1x4x16x32xf32, #tpu.memory_space<vmem>>, vector<1x1x1x32xf32>
    %617 = vector.shape_cast %616 : vector<1x1x1x32xf32> to vector<1x32xf32>
    %618 = vector.shape_cast %615 : vector<1x32xf32> to vector<1x1x1x32xf32>
    tpu.vector_store %arg5[%c0_320, %c2_321, %c14_322, %c0_323], %618 {strides = array<i32>} : memref<1x4x16x32xf32, #tpu.memory_space<vmem>>, vector<1x1x1x32xf32>,
    %c3_324 = arith.constant 3 : index
    %619 = memref.load %arg4[%c3_324] : memref<4xf32, #tpu.memory_space<smem>>
    %620 = vector.broadcast %619 : f32 to vector<8x32xf32>
    %c0_i32_325 = arith.constant 0 : i32
    %621 = arith.addi %0, %c0_i32_325 : i32
    %c0_i32_326 = arith.constant 0 : i32
    %622 = arith.addi %621, %c0_i32_326 : i32
    %c3_327 = arith.constant 3 : index
    %623 = memref.load %arg3[%c3_327] : memref<192xf32, #tpu.memory_space<smem>>
    %c0_328 = arith.constant 0 : index
    %c0_329 = arith.constant 0 : index
    %624 = arith.index_cast %622 : i32 to index
    %c0_330 = arith.constant 0 : index
    %625 = vector.load %arg2[%c0_328, %c0_329, %624, %c0_330] : memref<1x4x18x34xf32, #tpu.memory_space<vmem>>, vector<1x1x8x32xf32>
    %626 = vector.shape_cast %625 : vector<1x1x8x32xf32> to vector<8x32xf32>
    %627 = vector.broadcast %623 : f32 to vector<8x32xf32>
    %628 = arith.mulf %627, %626 : vector<8x32xf32>
    %629 = arith.addf %620, %628 : vector<8x32xf32>
    %c7 = arith.constant 7 : index
    %630 = memref.load %arg3[%c7] : memref<192xf32, #tpu.memory_space<smem>>
    %c0_331 = arith.constant 0 : index
    %c1_332 = arith.constant 1 : index
    %631 = arith.index_cast %622 : i32 to index
    %c0_333 = arith.constant 0 : index
    %632 = vector.load %arg2[%c0_331, %c1_332, %631, %c0_333] : memref<1x4x18x34xf32, #tpu.memory_space<vmem>>, vector<1x1x8x32xf32>
    %633 = vector.shape_cast %632 : vector<1x1x8x32xf32> to vector<8x32xf32>
    %634 = vector.broadcast %630 : f32 to vector<8x32xf32>
    %635 = arith.mulf %634, %633 : vector<8x32xf32>
    %636 = arith.addf %629, %635 : vector<8x32xf32>
    %c11 = arith.constant 11 : index
    %637 = memref.load %arg3[%c11] : memref<192xf32, #tpu.memory_space<smem>>
    %c0_334 = arith.constant 0 : index
    %c2_335 = arith.constant 2 : index
    %638 = arith.index_cast %622 : i32 to index
    %c0_336 = arith.constant 0 : index
    %639 = vector.load %arg2[%c0_334, %c2_335, %638, %c0_336] : memref<1x4x18x34xf32, #tpu.memory_space<vmem>>, vector<1x1x8x32xf32>
    %640 = vector.shape_cast %639 : vector<1x1x8x32xf32> to vector<8x32xf32>
    %641 = vector.broadcast %637 : f32 to vector<8x32xf32>
    %642 = arith.mulf %641, %640 : vector<8x32xf32>
    %643 = arith.addf %636, %642 : vector<8x32xf32>
    %c15 = arith.constant 15 : index
    %644 = memref.load %arg3[%c15] : memref<192xf32, #tpu.memory_space<smem>>
    %c0_337 = arith.constant 0 : index
    %c3_338 = arith.constant 3 : index
    %645 = arith.index_cast %622 : i32 to index
    %c0_339 = arith.constant 0 : index
    %646 = vector.load %arg2[%c0_337, %c3_338, %645, %c0_339] : memref<1x4x18x34xf32, #tpu.memory_space<vmem>>, vector<1x1x8x32xf32>
    %647 = vector.shape_cast %646 : vector<1x1x8x32xf32> to vector<8x32xf32>
    %648 = vector.broadcast %644 : f32 to vector<8x32xf32>
    %649 = arith.mulf %648, %647 : vector<8x32xf32>
    %650 = arith.addf %643, %649 : vector<8x32xf32>
    %c19 = arith.constant 19 : index
    %651 = memref.load %arg3[%c19] : memref<192xf32, #tpu.memory_space<smem>>
    %c0_340 = arith.constant 0 : index
    %c0_341 = arith.constant 0 : index
    %652 = arith.index_cast %622 : i32 to index
    %c1_342 = arith.constant 1 : index
    %653 = vector.load %arg2[%c0_340, %c0_341, %652, %c1_342] : memref<1x4x18x34xf32, #tpu.memory_space<vmem>>, vector<1x1x8x32xf32>
    %654 = vector.shape_cast %653 : vector<1x1x8x32xf32> to vector<8x32xf32>
    %655 = vector.broadcast %651 : f32 to vector<8x32xf32>
    %656 = arith.mulf %655, %654 : vector<8x32xf32>
    %657 = arith.addf %650, %656 : vector<8x32xf32>
    %c23 = arith.constant 23 : index
    %658 = memref.load %arg3[%c23] : memref<192xf32, #tpu.memory_space<smem>>
    %c0_343 = arith.constant 0 : index
    %c1_344 = arith.constant 1 : index
    %659 = arith.index_cast %622 : i32 to index
    %c1_345 = arith.constant 1 : index
    %660 = vector.load %arg2[%c0_343, %c1_344, %659, %c1_345] : memref<1x4x18x34xf32, #tpu.memory_space<vmem>>, vector<1x1x8x32xf32>
    %661 = vector.shape_cast %660 : vector<1x1x8x32xf32> to vector<8x32xf32>
    %662 = vector.broadcast %658 : f32 to vector<8x32xf32>
    %663 = arith.mulf %662, %661 : vector<8x32xf32>
    %664 = arith.addf %657, %663 : vector<8x32xf32>
    %c27 = arith.constant 27 : index
    %665 = memref.load %arg3[%c27] : memref<192xf32, #tpu.memory_space<smem>>
    %c0_346 = arith.constant 0 : index
    %c2_347 = arith.constant 2 : index
    %666 = arith.index_cast %622 : i32 to index
    %c1_348 = arith.constant 1 : index
    %667 = vector.load %arg2[%c0_346, %c2_347, %666, %c1_348] : memref<1x4x18x34xf32, #tpu.memory_space<vmem>>, vector<1x1x8x32xf32>
    %668 = vector.shape_cast %667 : vector<1x1x8x32xf32> to vector<8x32xf32>
    %669 = vector.broadcast %665 : f32 to vector<8x32xf32>
    %670 = arith.mulf %669, %668 : vector<8x32xf32>
    %671 = arith.addf %664, %670 : vector<8x32xf32>
    %c31 = arith.constant 31 : index
    %672 = memref.load %arg3[%c31] : memref<192xf32, #tpu.memory_space<smem>>
    %c0_349 = arith.constant 0 : index
    %c3_350 = arith.constant 3 : index
    %673 = arith.index_cast %622 : i32 to index
    %c1_351 = arith.constant 1 : index
    %674 = vector.load %arg2[%c0_349, %c3_350, %673, %c1_351] : memref<1x4x18x34xf32, #tpu.memory_space<vmem>>, vector<1x1x8x32xf32>
    %675 = vector.shape_cast %674 : vector<1x1x8x32xf32> to vector<8x32xf32>
    %676 = vector.broadcast %672 : f32 to vector<8x32xf32>
    %677 = arith.mulf %676, %675 : vector<8x32xf32>
    %678 = arith.addf %671, %677 : vector<8x32xf32>
    %c35 = arith.constant 35 : index
    %679 = memref.load %arg3[%c35] : memref<192xf32, #tpu.memory_space<smem>>
    %c0_352 = arith.constant 0 : index
    %c0_353 = arith.constant 0 : index
    %680 = arith.index_cast %622 : i32 to index
    %c2_354 = arith.constant 2 : index
    %681 = vector.load %arg2[%c0_352, %c0_353, %680, %c2_354] : memref<1x4x18x34xf32, #tpu.memory_space<vmem>>, vector<1x1x8x32xf32>
    %682 = vector.shape_cast %681 : vector<1x1x8x32xf32> to vector<8x32xf32>
    %683 = vector.broadcast %679 : f32 to vector<8x32xf32>
    %684 = arith.mulf %683, %682 : vector<8x32xf32>
    %685 = arith.addf %678, %684 : vector<8x32xf32>
    %c39 = arith.constant 39 : index
    %686 = memref.load %arg3[%c39] : memref<192xf32, #tpu.memory_space<smem>>
    %c0_355 = arith.constant 0 : index
    %c1_356 = arith.constant 1 : index
    %687 = arith.index_cast %622 : i32 to index
    %c2_357 = arith.constant 2 : index
    %688 = vector.load %arg2[%c0_355, %c1_356, %687, %c2_357] : memref<1x4x18x34xf32, #tpu.memory_space<vmem>>, vector<1x1x8x32xf32>
    %689 = vector.shape_cast %688 : vector<1x1x8x32xf32> to vector<8x32xf32>
    %690 = vector.broadcast %686 : f32 to vector<8x32xf32>
    %691 = arith.mulf %690, %689 : vector<8x32xf32>
    %692 = arith.addf %685, %691 : vector<8x32xf32>
    %c43 = arith.constant 43 : index
    %693 = memref.load %arg3[%c43] : memref<192xf32, #tpu.memory_space<smem>>
    %c0_358 = arith.constant 0 : index
    %c2_359 = arith.constant 2 : index
    %694 = arith.index_cast %622 : i32 to index
    %c2_360 = arith.constant 2 : index
    %695 = vector.load %arg2[%c0_358, %c2_359, %694, %c2_360] : memref<1x4x18x34xf32, #tpu.memory_space<vmem>>, vector<1x1x8x32xf32>
    %696 = vector.shape_cast %695 : vector<1x1x8x32xf32> to vector<8x32xf32>
    %697 = vector.broadcast %693 : f32 to vector<8x32xf32>
    %698 = arith.mulf %697, %696 : vector<8x32xf32>
    %699 = arith.addf %692, %698 : vector<8x32xf32>
    %c47 = arith.constant 47 : index
    %700 = memref.load %arg3[%c47] : memref<192xf32, #tpu.memory_space<smem>>
    %c0_361 = arith.constant 0 : index
    %c3_362 = arith.constant 3 : index
    %701 = arith.index_cast %622 : i32 to index
    %c2_363 = arith.constant 2 : index
    %702 = vector.load %arg2[%c0_361, %c3_362, %701, %c2_363] : memref<1x4x18x34xf32, #tpu.memory_space<vmem>>, vector<1x1x8x32xf32>
    %703 = vector.shape_cast %702 : vector<1x1x8x32xf32> to vector<8x32xf32>
    %704 = vector.broadcast %700 : f32 to vector<8x32xf32>
    %705 = arith.mulf %704, %703 : vector<8x32xf32>
    %706 = arith.addf %699, %705 : vector<8x32xf32>
    %c0_i32_364 = arith.constant 0 : i32
    %707 = arith.addi %0, %c0_i32_364 : i32
    %c1_i32_365 = arith.constant 1 : i32
    %708 = arith.addi %707, %c1_i32_365 : i32
    %c51 = arith.constant 51 : index
    %709 = memref.load %arg3[%c51] : memref<192xf32, #tpu.memory_space<smem>>
    %c0_366 = arith.constant 0 : index
    %c0_367 = arith.constant 0 : index
    %710 = arith.index_cast %708 : i32 to index
    %c0_368 = arith.constant 0 : index
    %711 = vector.load %arg2[%c0_366, %c0_367, %710, %c0_368] : memref<1x4x18x34xf32, #tpu.memory_space<vmem>>, vector<1x1x8x32xf32>
    %712 = vector.shape_cast %711 : vector<1x1x8x32xf32> to vector<8x32xf32>
    %713 = vector.broadcast %709 : f32 to vector<8x32xf32>
    %714 = arith.mulf %713, %712 : vector<8x32xf32>
    %715 = arith.addf %706, %714 : vector<8x32xf32>
    %c55 = arith.constant 55 : index
    %716 = memref.load %arg3[%c55] : memref<192xf32, #tpu.memory_space<smem>>
    %c0_369 = arith.constant 0 : index
    %c1_370 = arith.constant 1 : index
    %717 = arith.index_cast %708 : i32 to index
    %c0_371 = arith.constant 0 : index
    %718 = vector.load %arg2[%c0_369, %c1_370, %717, %c0_371] : memref<1x4x18x34xf32, #tpu.memory_space<vmem>>, vector<1x1x8x32xf32>
    %719 = vector.shape_cast %718 : vector<1x1x8x32xf32> to vector<8x32xf32>
    %720 = vector.broadcast %716 : f32 to vector<8x32xf32>
    %721 = arith.mulf %720, %719 : vector<8x32xf32>
    %722 = arith.addf %715, %721 : vector<8x32xf32>
    %c59 = arith.constant 59 : index
    %723 = memref.load %arg3[%c59] : memref<192xf32, #tpu.memory_space<smem>>
    %c0_372 = arith.constant 0 : index
    %c2_373 = arith.constant 2 : index
    %724 = arith.index_cast %708 : i32 to index
    %c0_374 = arith.constant 0 : index
    %725 = vector.load %arg2[%c0_372, %c2_373, %724, %c0_374] : memref<1x4x18x34xf32, #tpu.memory_space<vmem>>, vector<1x1x8x32xf32>
    %726 = vector.shape_cast %725 : vector<1x1x8x32xf32> to vector<8x32xf32>
    %727 = vector.broadcast %723 : f32 to vector<8x32xf32>
    %728 = arith.mulf %727, %726 : vector<8x32xf32>
    %729 = arith.addf %722, %728 : vector<8x32xf32>
    %c63 = arith.constant 63 : index
    %730 = memref.load %arg3[%c63] : memref<192xf32, #tpu.memory_space<smem>>
    %c0_375 = arith.constant 0 : index
    %c3_376 = arith.constant 3 : index
    %731 = arith.index_cast %708 : i32 to index
    %c0_377 = arith.constant 0 : index
    %732 = vector.load %arg2[%c0_375, %c3_376, %731, %c0_377] : memref<1x4x18x34xf32, #tpu.memory_space<vmem>>, vector<1x1x8x32xf32>
    %733 = vector.shape_cast %732 : vector<1x1x8x32xf32> to vector<8x32xf32>
    %734 = vector.broadcast %730 : f32 to vector<8x32xf32>
    %735 = arith.mulf %734, %733 : vector<8x32xf32>
    %736 = arith.addf %729, %735 : vector<8x32xf32>
    %c67 = arith.constant 67 : index
    %737 = memref.load %arg3[%c67] : memref<192xf32, #tpu.memory_space<smem>>
    %c0_378 = arith.constant 0 : index
    %c0_379 = arith.constant 0 : index
    %738 = arith.index_cast %708 : i32 to index
    %c1_380 = arith.constant 1 : index
    %739 = vector.load %arg2[%c0_378, %c0_379, %738, %c1_380] : memref<1x4x18x34xf32, #tpu.memory_space<vmem>>, vector<1x1x8x32xf32>
    %740 = vector.shape_cast %739 : vector<1x1x8x32xf32> to vector<8x32xf32>
    %741 = vector.broadcast %737 : f32 to vector<8x32xf32>
    %742 = arith.mulf %741, %740 : vector<8x32xf32>
    %743 = arith.addf %736, %742 : vector<8x32xf32>
    %c71 = arith.constant 71 : index
    %744 = memref.load %arg3[%c71] : memref<192xf32, #tpu.memory_space<smem>>
    %c0_381 = arith.constant 0 : index
    %c1_382 = arith.constant 1 : index
    %745 = arith.index_cast %708 : i32 to index
    %c1_383 = arith.constant 1 : index
    %746 = vector.load %arg2[%c0_381, %c1_382, %745, %c1_383] : memref<1x4x18x34xf32, #tpu.memory_space<vmem>>, vector<1x1x8x32xf32>
    %747 = vector.shape_cast %746 : vector<1x1x8x32xf32> to vector<8x32xf32>
    %748 = vector.broadcast %744 : f32 to vector<8x32xf32>
    %749 = arith.mulf %748, %747 : vector<8x32xf32>
    %750 = arith.addf %743, %749 : vector<8x32xf32>
    %c75 = arith.constant 75 : index
    %751 = memref.load %arg3[%c75] : memref<192xf32, #tpu.memory_space<smem>>
    %c0_384 = arith.constant 0 : index
    %c2_385 = arith.constant 2 : index
    %752 = arith.index_cast %708 : i32 to index
    %c1_386 = arith.constant 1 : index
    %753 = vector.load %arg2[%c0_384, %c2_385, %752, %c1_386] : memref<1x4x18x34xf32, #tpu.memory_space<vmem>>, vector<1x1x8x32xf32>
    %754 = vector.shape_cast %753 : vector<1x1x8x32xf32> to vector<8x32xf32>
    %755 = vector.broadcast %751 : f32 to vector<8x32xf32>
    %756 = arith.mulf %755, %754 : vector<8x32xf32>
    %757 = arith.addf %750, %756 : vector<8x32xf32>
    %c79 = arith.constant 79 : index
    %758 = memref.load %arg3[%c79] : memref<192xf32, #tpu.memory_space<smem>>
    %c0_387 = arith.constant 0 : index
    %c3_388 = arith.constant 3 : index
    %759 = arith.index_cast %708 : i32 to index
    %c1_389 = arith.constant 1 : index
    %760 = vector.load %arg2[%c0_387, %c3_388, %759, %c1_389] : memref<1x4x18x34xf32, #tpu.memory_space<vmem>>, vector<1x1x8x32xf32>
    %761 = vector.shape_cast %760 : vector<1x1x8x32xf32> to vector<8x32xf32>
    %762 = vector.broadcast %758 : f32 to vector<8x32xf32>
    %763 = arith.mulf %762, %761 : vector<8x32xf32>
    %764 = arith.addf %757, %763 : vector<8x32xf32>
    %c83 = arith.constant 83 : index
    %765 = memref.load %arg3[%c83] : memref<192xf32, #tpu.memory_space<smem>>
    %c0_390 = arith.constant 0 : index
    %c0_391 = arith.constant 0 : index
    %766 = arith.index_cast %708 : i32 to index
    %c2_392 = arith.constant 2 : index
    %767 = vector.load %arg2[%c0_390, %c0_391, %766, %c2_392] : memref<1x4x18x34xf32, #tpu.memory_space<vmem>>, vector<1x1x8x32xf32>
    %768 = vector.shape_cast %767 : vector<1x1x8x32xf32> to vector<8x32xf32>
    %769 = vector.broadcast %765 : f32 to vector<8x32xf32>
    %770 = arith.mulf %769, %768 : vector<8x32xf32>
    %771 = arith.addf %764, %770 : vector<8x32xf32>
    %c87 = arith.constant 87 : index
    %772 = memref.load %arg3[%c87] : memref<192xf32, #tpu.memory_space<smem>>
    %c0_393 = arith.constant 0 : index
    %c1_394 = arith.constant 1 : index
    %773 = arith.index_cast %708 : i32 to index
    %c2_395 = arith.constant 2 : index
    %774 = vector.load %arg2[%c0_393, %c1_394, %773, %c2_395] : memref<1x4x18x34xf32, #tpu.memory_space<vmem>>, vector<1x1x8x32xf32>
    %775 = vector.shape_cast %774 : vector<1x1x8x32xf32> to vector<8x32xf32>
    %776 = vector.broadcast %772 : f32 to vector<8x32xf32>
    %777 = arith.mulf %776, %775 : vector<8x32xf32>
    %778 = arith.addf %771, %777 : vector<8x32xf32>
    %c91 = arith.constant 91 : index
    %779 = memref.load %arg3[%c91] : memref<192xf32, #tpu.memory_space<smem>>
    %c0_396 = arith.constant 0 : index
    %c2_397 = arith.constant 2 : index
    %780 = arith.index_cast %708 : i32 to index
    %c2_398 = arith.constant 2 : index
    %781 = vector.load %arg2[%c0_396, %c2_397, %780, %c2_398] : memref<1x4x18x34xf32, #tpu.memory_space<vmem>>, vector<1x1x8x32xf32>
    %782 = vector.shape_cast %781 : vector<1x1x8x32xf32> to vector<8x32xf32>
    %783 = vector.broadcast %779 : f32 to vector<8x32xf32>
    %784 = arith.mulf %783, %782 : vector<8x32xf32>
    %785 = arith.addf %778, %784 : vector<8x32xf32>
    %c95 = arith.constant 95 : index
    %786 = memref.load %arg3[%c95] : memref<192xf32, #tpu.memory_space<smem>>
    %c0_399 = arith.constant 0 : index
    %c3_400 = arith.constant 3 : index
    %787 = arith.index_cast %708 : i32 to index
    %c2_401 = arith.constant 2 : index
    %788 = vector.load %arg2[%c0_399, %c3_400, %787, %c2_401] : memref<1x4x18x34xf32, #tpu.memory_space<vmem>>, vector<1x1x8x32xf32>
    %789 = vector.shape_cast %788 : vector<1x1x8x32xf32> to vector<8x32xf32>
    %790 = vector.broadcast %786 : f32 to vector<8x32xf32>
    %791 = arith.mulf %790, %789 : vector<8x32xf32>
    %792 = arith.addf %785, %791 : vector<8x32xf32>
    %793 = vector.extract_strided_slice %792 {offsets = [0, 0], sizes = [1, 32], strides = [1, 1]} : vector<8x32xf32> to vector<1x32xf32>
    %c0_402 = arith.constant 0 : index
    %c3_403 = arith.constant 3 : index
    %c0_404 = arith.constant 0 : index
    %c0_405 = arith.constant 0 : index
    %794 = vector.load %arg5[%c0_402, %c3_403, %c0_404, %c0_405] : memref<1x4x16x32xf32, #tpu.memory_space<vmem>>, vector<1x1x1x32xf32>
    %795 = vector.shape_cast %794 : vector<1x1x1x32xf32> to vector<1x32xf32>
    %796 = vector.shape_cast %793 : vector<1x32xf32> to vector<1x1x1x32xf32>
    tpu.vector_store %arg5[%c0_402, %c3_403, %c0_404, %c0_405], %796 {strides = array<i32>} : memref<1x4x16x32xf32, #tpu.memory_space<vmem>>, vector<1x1x1x32xf32>,
    %797 = vector.extract_strided_slice %792 {offsets = [1, 0], sizes = [1, 32], strides = [1, 1]} : vector<8x32xf32> to vector<1x32xf32>
    %c0_406 = arith.constant 0 : index
    %c3_407 = arith.constant 3 : index
    %c2_408 = arith.constant 2 : index
    %c0_409 = arith.constant 0 : index
    %798 = vector.load %arg5[%c0_406, %c3_407, %c2_408, %c0_409] : memref<1x4x16x32xf32, #tpu.memory_space<vmem>>, vector<1x1x1x32xf32>
    %799 = vector.shape_cast %798 : vector<1x1x1x32xf32> to vector<1x32xf32>
    %800 = vector.shape_cast %797 : vector<1x32xf32> to vector<1x1x1x32xf32>
    tpu.vector_store %arg5[%c0_406, %c3_407, %c2_408, %c0_409], %800 {strides = array<i32>} : memref<1x4x16x32xf32, #tpu.memory_space<vmem>>, vector<1x1x1x32xf32>,
    %801 = vector.extract_strided_slice %792 {offsets = [2, 0], sizes = [1, 32], strides = [1, 1]} : vector<8x32xf32> to vector<1x32xf32>
    %c0_410 = arith.constant 0 : index
    %c3_411 = arith.constant 3 : index
    %c4_412 = arith.constant 4 : index
    %c0_413 = arith.constant 0 : index
    %802 = vector.load %arg5[%c0_410, %c3_411, %c4_412, %c0_413] : memref<1x4x16x32xf32, #tpu.memory_space<vmem>>, vector<1x1x1x32xf32>
    %803 = vector.shape_cast %802 : vector<1x1x1x32xf32> to vector<1x32xf32>
    %804 = vector.shape_cast %801 : vector<1x32xf32> to vector<1x1x1x32xf32>
    tpu.vector_store %arg5[%c0_410, %c3_411, %c4_412, %c0_413], %804 {strides = array<i32>} : memref<1x4x16x32xf32, #tpu.memory_space<vmem>>, vector<1x1x1x32xf32>,
    %805 = vector.extract_strided_slice %792 {offsets = [3, 0], sizes = [1, 32], strides = [1, 1]} : vector<8x32xf32> to vector<1x32xf32>
    %c0_414 = arith.constant 0 : index
    %c3_415 = arith.constant 3 : index
    %c6_416 = arith.constant 6 : index
    %c0_417 = arith.constant 0 : index
    %806 = vector.load %arg5[%c0_414, %c3_415, %c6_416, %c0_417] : memref<1x4x16x32xf32, #tpu.memory_space<vmem>>, vector<1x1x1x32xf32>
    %807 = vector.shape_cast %806 : vector<1x1x1x32xf32> to vector<1x32xf32>
    %808 = vector.shape_cast %805 : vector<1x32xf32> to vector<1x1x1x32xf32>
    tpu.vector_store %arg5[%c0_414, %c3_415, %c6_416, %c0_417], %808 {strides = array<i32>} : memref<1x4x16x32xf32, #tpu.memory_space<vmem>>, vector<1x1x1x32xf32>,
    %809 = vector.extract_strided_slice %792 {offsets = [4, 0], sizes = [1, 32], strides = [1, 1]} : vector<8x32xf32> to vector<1x32xf32>
    %c0_418 = arith.constant 0 : index
    %c3_419 = arith.constant 3 : index
    %c8_420 = arith.constant 8 : index
    %c0_421 = arith.constant 0 : index
    %810 = vector.load %arg5[%c0_418, %c3_419, %c8_420, %c0_421] : memref<1x4x16x32xf32, #tpu.memory_space<vmem>>, vector<1x1x1x32xf32>
    %811 = vector.shape_cast %810 : vector<1x1x1x32xf32> to vector<1x32xf32>
    %812 = vector.shape_cast %809 : vector<1x32xf32> to vector<1x1x1x32xf32>
    tpu.vector_store %arg5[%c0_418, %c3_419, %c8_420, %c0_421], %812 {strides = array<i32>} : memref<1x4x16x32xf32, #tpu.memory_space<vmem>>, vector<1x1x1x32xf32>,
    %813 = vector.extract_strided_slice %792 {offsets = [5, 0], sizes = [1, 32], strides = [1, 1]} : vector<8x32xf32> to vector<1x32xf32>
    %c0_422 = arith.constant 0 : index
    %c3_423 = arith.constant 3 : index
    %c10_424 = arith.constant 10 : index
    %c0_425 = arith.constant 0 : index
    %814 = vector.load %arg5[%c0_422, %c3_423, %c10_424, %c0_425] : memref<1x4x16x32xf32, #tpu.memory_space<vmem>>, vector<1x1x1x32xf32>
    %815 = vector.shape_cast %814 : vector<1x1x1x32xf32> to vector<1x32xf32>
    %816 = vector.shape_cast %813 : vector<1x32xf32> to vector<1x1x1x32xf32>
    tpu.vector_store %arg5[%c0_422, %c3_423, %c10_424, %c0_425], %816 {strides = array<i32>} : memref<1x4x16x32xf32, #tpu.memory_space<vmem>>, vector<1x1x1x32xf32>,
    %817 = vector.extract_strided_slice %792 {offsets = [6, 0], sizes = [1, 32], strides = [1, 1]} : vector<8x32xf32> to vector<1x32xf32>
    %c0_426 = arith.constant 0 : index
    %c3_427 = arith.constant 3 : index
    %c12_428 = arith.constant 12 : index
    %c0_429 = arith.constant 0 : index
    %818 = vector.load %arg5[%c0_426, %c3_427, %c12_428, %c0_429] : memref<1x4x16x32xf32, #tpu.memory_space<vmem>>, vector<1x1x1x32xf32>
    %819 = vector.shape_cast %818 : vector<1x1x1x32xf32> to vector<1x32xf32>
    %820 = vector.shape_cast %817 : vector<1x32xf32> to vector<1x1x1x32xf32>
    tpu.vector_store %arg5[%c0_426, %c3_427, %c12_428, %c0_429], %820 {strides = array<i32>} : memref<1x4x16x32xf32, #tpu.memory_space<vmem>>, vector<1x1x1x32xf32>,
    %821 = vector.extract_strided_slice %792 {offsets = [7, 0], sizes = [1, 32], strides = [1, 1]} : vector<8x32xf32> to vector<1x32xf32>
    %c0_430 = arith.constant 0 : index
    %c3_431 = arith.constant 3 : index
    %c14_432 = arith.constant 14 : index
    %c0_433 = arith.constant 0 : index
    %822 = vector.load %arg5[%c0_430, %c3_431, %c14_432, %c0_433] : memref<1x4x16x32xf32, #tpu.memory_space<vmem>>, vector<1x1x1x32xf32>
    %823 = vector.shape_cast %822 : vector<1x1x1x32xf32> to vector<1x32xf32>
    %824 = vector.shape_cast %821 : vector<1x32xf32> to vector<1x1x1x32xf32>
    tpu.vector_store %arg5[%c0_430, %c3_431, %c14_432, %c0_433], %824 {strides = array<i32>} : memref<1x4x16x32xf32, #tpu.memory_space<vmem>>, vector<1x1x1x32xf32>,
    %c0_434 = arith.constant 0 : index
    %825 = memref.load %arg4[%c0_434] : memref<4xf32, #tpu.memory_space<smem>>
    %826 = vector.broadcast %825 : f32 to vector<8x32xf32>
    %c1_i32_435 = arith.constant 1 : i32
    %827 = arith.addi %0, %c1_i32_435 : i32
    %c0_i32_436 = arith.constant 0 : i32
    %828 = arith.addi %827, %c0_i32_436 : i32
    %c96 = arith.constant 96 : index
    %829 = memref.load %arg3[%c96] : memref<192xf32, #tpu.memory_space<smem>>
    %c0_437 = arith.constant 0 : index
    %c0_438 = arith.constant 0 : index
    %830 = arith.index_cast %828 : i32 to index
    %c0_439 = arith.constant 0 : index
    %831 = vector.load %arg2[%c0_437, %c0_438, %830, %c0_439] : memref<1x4x18x34xf32, #tpu.memory_space<vmem>>, vector<1x1x8x32xf32>
    %832 = vector.shape_cast %831 : vector<1x1x8x32xf32> to vector<8x32xf32>
    %833 = vector.broadcast %829 : f32 to vector<8x32xf32>
    %834 = arith.mulf %833, %832 : vector<8x32xf32>
    %835 = arith.addf %826, %834 : vector<8x32xf32>
    %c100 = arith.constant 100 : index
    %836 = memref.load %arg3[%c100] : memref<192xf32, #tpu.memory_space<smem>>
    %c0_440 = arith.constant 0 : index
    %c1_441 = arith.constant 1 : index
    %837 = arith.index_cast %828 : i32 to index
    %c0_442 = arith.constant 0 : index
    %838 = vector.load %arg2[%c0_440, %c1_441, %837, %c0_442] : memref<1x4x18x34xf32, #tpu.memory_space<vmem>>, vector<1x1x8x32xf32>
    %839 = vector.shape_cast %838 : vector<1x1x8x32xf32> to vector<8x32xf32>
    %840 = vector.broadcast %836 : f32 to vector<8x32xf32>
    %841 = arith.mulf %840, %839 : vector<8x32xf32>
    %842 = arith.addf %835, %841 : vector<8x32xf32>
    %c104 = arith.constant 104 : index
    %843 = memref.load %arg3[%c104] : memref<192xf32, #tpu.memory_space<smem>>
    %c0_443 = arith.constant 0 : index
    %c2_444 = arith.constant 2 : index
    %844 = arith.index_cast %828 : i32 to index
    %c0_445 = arith.constant 0 : index
    %845 = vector.load %arg2[%c0_443, %c2_444, %844, %c0_445] : memref<1x4x18x34xf32, #tpu.memory_space<vmem>>, vector<1x1x8x32xf32>
    %846 = vector.shape_cast %845 : vector<1x1x8x32xf32> to vector<8x32xf32>
    %847 = vector.broadcast %843 : f32 to vector<8x32xf32>
    %848 = arith.mulf %847, %846 : vector<8x32xf32>
    %849 = arith.addf %842, %848 : vector<8x32xf32>
    %c108 = arith.constant 108 : index
    %850 = memref.load %arg3[%c108] : memref<192xf32, #tpu.memory_space<smem>>
    %c0_446 = arith.constant 0 : index
    %c3_447 = arith.constant 3 : index
    %851 = arith.index_cast %828 : i32 to index
    %c0_448 = arith.constant 0 : index
    %852 = vector.load %arg2[%c0_446, %c3_447, %851, %c0_448] : memref<1x4x18x34xf32, #tpu.memory_space<vmem>>, vector<1x1x8x32xf32>
    %853 = vector.shape_cast %852 : vector<1x1x8x32xf32> to vector<8x32xf32>
    %854 = vector.broadcast %850 : f32 to vector<8x32xf32>
    %855 = arith.mulf %854, %853 : vector<8x32xf32>
    %856 = arith.addf %849, %855 : vector<8x32xf32>
    %c112 = arith.constant 112 : index
    %857 = memref.load %arg3[%c112] : memref<192xf32, #tpu.memory_space<smem>>
    %c0_449 = arith.constant 0 : index
    %c0_450 = arith.constant 0 : index
    %858 = arith.index_cast %828 : i32 to index
    %c1_451 = arith.constant 1 : index
    %859 = vector.load %arg2[%c0_449, %c0_450, %858, %c1_451] : memref<1x4x18x34xf32, #tpu.memory_space<vmem>>, vector<1x1x8x32xf32>
    %860 = vector.shape_cast %859 : vector<1x1x8x32xf32> to vector<8x32xf32>
    %861 = vector.broadcast %857 : f32 to vector<8x32xf32>
    %862 = arith.mulf %861, %860 : vector<8x32xf32>
    %863 = arith.addf %856, %862 : vector<8x32xf32>
    %c116 = arith.constant 116 : index
    %864 = memref.load %arg3[%c116] : memref<192xf32, #tpu.memory_space<smem>>
    %c0_452 = arith.constant 0 : index
    %c1_453 = arith.constant 1 : index
    %865 = arith.index_cast %828 : i32 to index
    %c1_454 = arith.constant 1 : index
    %866 = vector.load %arg2[%c0_452, %c1_453, %865, %c1_454] : memref<1x4x18x34xf32, #tpu.memory_space<vmem>>, vector<1x1x8x32xf32>
    %867 = vector.shape_cast %866 : vector<1x1x8x32xf32> to vector<8x32xf32>
    %868 = vector.broadcast %864 : f32 to vector<8x32xf32>
    %869 = arith.mulf %868, %867 : vector<8x32xf32>
    %870 = arith.addf %863, %869 : vector<8x32xf32>
    %c120 = arith.constant 120 : index
    %871 = memref.load %arg3[%c120] : memref<192xf32, #tpu.memory_space<smem>>
    %c0_455 = arith.constant 0 : index
    %c2_456 = arith.constant 2 : index
    %872 = arith.index_cast %828 : i32 to index
    %c1_457 = arith.constant 1 : index
    %873 = vector.load %arg2[%c0_455, %c2_456, %872, %c1_457] : memref<1x4x18x34xf32, #tpu.memory_space<vmem>>, vector<1x1x8x32xf32>
    %874 = vector.shape_cast %873 : vector<1x1x8x32xf32> to vector<8x32xf32>
    %875 = vector.broadcast %871 : f32 to vector<8x32xf32>
    %876 = arith.mulf %875, %874 : vector<8x32xf32>
    %877 = arith.addf %870, %876 : vector<8x32xf32>
    %c124 = arith.constant 124 : index
    %878 = memref.load %arg3[%c124] : memref<192xf32, #tpu.memory_space<smem>>
    %c0_458 = arith.constant 0 : index
    %c3_459 = arith.constant 3 : index
    %879 = arith.index_cast %828 : i32 to index
    %c1_460 = arith.constant 1 : index
    %880 = vector.load %arg2[%c0_458, %c3_459, %879, %c1_460] : memref<1x4x18x34xf32, #tpu.memory_space<vmem>>, vector<1x1x8x32xf32>
    %881 = vector.shape_cast %880 : vector<1x1x8x32xf32> to vector<8x32xf32>
    %882 = vector.broadcast %878 : f32 to vector<8x32xf32>
    %883 = arith.mulf %882, %881 : vector<8x32xf32>
    %884 = arith.addf %877, %883 : vector<8x32xf32>
    %c128 = arith.constant 128 : index
    %885 = memref.load %arg3[%c128] : memref<192xf32, #tpu.memory_space<smem>>
    %c0_461 = arith.constant 0 : index
    %c0_462 = arith.constant 0 : index
    %886 = arith.index_cast %828 : i32 to index
    %c2_463 = arith.constant 2 : index
    %887 = vector.load %arg2[%c0_461, %c0_462, %886, %c2_463] : memref<1x4x18x34xf32, #tpu.memory_space<vmem>>, vector<1x1x8x32xf32>
    %888 = vector.shape_cast %887 : vector<1x1x8x32xf32> to vector<8x32xf32>
    %889 = vector.broadcast %885 : f32 to vector<8x32xf32>
    %890 = arith.mulf %889, %888 : vector<8x32xf32>
    %891 = arith.addf %884, %890 : vector<8x32xf32>
    %c132 = arith.constant 132 : index
    %892 = memref.load %arg3[%c132] : memref<192xf32, #tpu.memory_space<smem>>
    %c0_464 = arith.constant 0 : index
    %c1_465 = arith.constant 1 : index
    %893 = arith.index_cast %828 : i32 to index
    %c2_466 = arith.constant 2 : index
    %894 = vector.load %arg2[%c0_464, %c1_465, %893, %c2_466] : memref<1x4x18x34xf32, #tpu.memory_space<vmem>>, vector<1x1x8x32xf32>
    %895 = vector.shape_cast %894 : vector<1x1x8x32xf32> to vector<8x32xf32>
    %896 = vector.broadcast %892 : f32 to vector<8x32xf32>
    %897 = arith.mulf %896, %895 : vector<8x32xf32>
    %898 = arith.addf %891, %897 : vector<8x32xf32>
    %c136 = arith.constant 136 : index
    %899 = memref.load %arg3[%c136] : memref<192xf32, #tpu.memory_space<smem>>
    %c0_467 = arith.constant 0 : index
    %c2_468 = arith.constant 2 : index
    %900 = arith.index_cast %828 : i32 to index
    %c2_469 = arith.constant 2 : index
    %901 = vector.load %arg2[%c0_467, %c2_468, %900, %c2_469] : memref<1x4x18x34xf32, #tpu.memory_space<vmem>>, vector<1x1x8x32xf32>
    %902 = vector.shape_cast %901 : vector<1x1x8x32xf32> to vector<8x32xf32>
    %903 = vector.broadcast %899 : f32 to vector<8x32xf32>
    %904 = arith.mulf %903, %902 : vector<8x32xf32>
    %905 = arith.addf %898, %904 : vector<8x32xf32>
    %c140 = arith.constant 140 : index
    %906 = memref.load %arg3[%c140] : memref<192xf32, #tpu.memory_space<smem>>
    %c0_470 = arith.constant 0 : index
    %c3_471 = arith.constant 3 : index
    %907 = arith.index_cast %828 : i32 to index
    %c2_472 = arith.constant 2 : index
    %908 = vector.load %arg2[%c0_470, %c3_471, %907, %c2_472] : memref<1x4x18x34xf32, #tpu.memory_space<vmem>>, vector<1x1x8x32xf32>
    %909 = vector.shape_cast %908 : vector<1x1x8x32xf32> to vector<8x32xf32>
    %910 = vector.broadcast %906 : f32 to vector<8x32xf32>
    %911 = arith.mulf %910, %909 : vector<8x32xf32>
    %912 = arith.addf %905, %911 : vector<8x32xf32>
    %c1_i32_473 = arith.constant 1 : i32
    %913 = arith.addi %0, %c1_i32_473 : i32
    %c1_i32_474 = arith.constant 1 : i32
    %914 = arith.addi %913, %c1_i32_474 : i32
    %c144 = arith.constant 144 : index
    %915 = memref.load %arg3[%c144] : memref<192xf32, #tpu.memory_space<smem>>
    %c0_475 = arith.constant 0 : index
    %c0_476 = arith.constant 0 : index
    %916 = arith.index_cast %914 : i32 to index
    %c0_477 = arith.constant 0 : index
    %917 = vector.load %arg2[%c0_475, %c0_476, %916, %c0_477] : memref<1x4x18x34xf32, #tpu.memory_space<vmem>>, vector<1x1x8x32xf32>
    %918 = vector.shape_cast %917 : vector<1x1x8x32xf32> to vector<8x32xf32>
    %919 = vector.broadcast %915 : f32 to vector<8x32xf32>
    %920 = arith.mulf %919, %918 : vector<8x32xf32>
    %921 = arith.addf %912, %920 : vector<8x32xf32>
    %c148 = arith.constant 148 : index
    %922 = memref.load %arg3[%c148] : memref<192xf32, #tpu.memory_space<smem>>
    %c0_478 = arith.constant 0 : index
    %c1_479 = arith.constant 1 : index
    %923 = arith.index_cast %914 : i32 to index
    %c0_480 = arith.constant 0 : index
    %924 = vector.load %arg2[%c0_478, %c1_479, %923, %c0_480] : memref<1x4x18x34xf32, #tpu.memory_space<vmem>>, vector<1x1x8x32xf32>
    %925 = vector.shape_cast %924 : vector<1x1x8x32xf32> to vector<8x32xf32>
    %926 = vector.broadcast %922 : f32 to vector<8x32xf32>
    %927 = arith.mulf %926, %925 : vector<8x32xf32>
    %928 = arith.addf %921, %927 : vector<8x32xf32>
    %c152 = arith.constant 152 : index
    %929 = memref.load %arg3[%c152] : memref<192xf32, #tpu.memory_space<smem>>
    %c0_481 = arith.constant 0 : index
    %c2_482 = arith.constant 2 : index
    %930 = arith.index_cast %914 : i32 to index
    %c0_483 = arith.constant 0 : index
    %931 = vector.load %arg2[%c0_481, %c2_482, %930, %c0_483] : memref<1x4x18x34xf32, #tpu.memory_space<vmem>>, vector<1x1x8x32xf32>
    %932 = vector.shape_cast %931 : vector<1x1x8x32xf32> to vector<8x32xf32>
    %933 = vector.broadcast %929 : f32 to vector<8x32xf32>
    %934 = arith.mulf %933, %932 : vector<8x32xf32>
    %935 = arith.addf %928, %934 : vector<8x32xf32>
    %c156 = arith.constant 156 : index
    %936 = memref.load %arg3[%c156] : memref<192xf32, #tpu.memory_space<smem>>
    %c0_484 = arith.constant 0 : index
    %c3_485 = arith.constant 3 : index
    %937 = arith.index_cast %914 : i32 to index
    %c0_486 = arith.constant 0 : index
    %938 = vector.load %arg2[%c0_484, %c3_485, %937, %c0_486] : memref<1x4x18x34xf32, #tpu.memory_space<vmem>>, vector<1x1x8x32xf32>
    %939 = vector.shape_cast %938 : vector<1x1x8x32xf32> to vector<8x32xf32>
    %940 = vector.broadcast %936 : f32 to vector<8x32xf32>
    %941 = arith.mulf %940, %939 : vector<8x32xf32>
    %942 = arith.addf %935, %941 : vector<8x32xf32>
    %c160 = arith.constant 160 : index
    %943 = memref.load %arg3[%c160] : memref<192xf32, #tpu.memory_space<smem>>
    %c0_487 = arith.constant 0 : index
    %c0_488 = arith.constant 0 : index
    %944 = arith.index_cast %914 : i32 to index
    %c1_489 = arith.constant 1 : index
    %945 = vector.load %arg2[%c0_487, %c0_488, %944, %c1_489] : memref<1x4x18x34xf32, #tpu.memory_space<vmem>>, vector<1x1x8x32xf32>
    %946 = vector.shape_cast %945 : vector<1x1x8x32xf32> to vector<8x32xf32>
    %947 = vector.broadcast %943 : f32 to vector<8x32xf32>
    %948 = arith.mulf %947, %946 : vector<8x32xf32>
    %949 = arith.addf %942, %948 : vector<8x32xf32>
    %c164 = arith.constant 164 : index
    %950 = memref.load %arg3[%c164] : memref<192xf32, #tpu.memory_space<smem>>
    %c0_490 = arith.constant 0 : index
    %c1_491 = arith.constant 1 : index
    %951 = arith.index_cast %914 : i32 to index
    %c1_492 = arith.constant 1 : index
    %952 = vector.load %arg2[%c0_490, %c1_491, %951, %c1_492] : memref<1x4x18x34xf32, #tpu.memory_space<vmem>>, vector<1x1x8x32xf32>
    %953 = vector.shape_cast %952 : vector<1x1x8x32xf32> to vector<8x32xf32>
    %954 = vector.broadcast %950 : f32 to vector<8x32xf32>
    %955 = arith.mulf %954, %953 : vector<8x32xf32>
    %956 = arith.addf %949, %955 : vector<8x32xf32>
    %c168 = arith.constant 168 : index
    %957 = memref.load %arg3[%c168] : memref<192xf32, #tpu.memory_space<smem>>
    %c0_493 = arith.constant 0 : index
    %c2_494 = arith.constant 2 : index
    %958 = arith.index_cast %914 : i32 to index
    %c1_495 = arith.constant 1 : index
    %959 = vector.load %arg2[%c0_493, %c2_494, %958, %c1_495] : memref<1x4x18x34xf32, #tpu.memory_space<vmem>>, vector<1x1x8x32xf32>
    %960 = vector.shape_cast %959 : vector<1x1x8x32xf32> to vector<8x32xf32>
    %961 = vector.broadcast %957 : f32 to vector<8x32xf32>
    %962 = arith.mulf %961, %960 : vector<8x32xf32>
    %963 = arith.addf %956, %962 : vector<8x32xf32>
    %c172 = arith.constant 172 : index
    %964 = memref.load %arg3[%c172] : memref<192xf32, #tpu.memory_space<smem>>
    %c0_496 = arith.constant 0 : index
    %c3_497 = arith.constant 3 : index
    %965 = arith.index_cast %914 : i32 to index
    %c1_498 = arith.constant 1 : index
    %966 = vector.load %arg2[%c0_496, %c3_497, %965, %c1_498] : memref<1x4x18x34xf32, #tpu.memory_space<vmem>>, vector<1x1x8x32xf32>
    %967 = vector.shape_cast %966 : vector<1x1x8x32xf32> to vector<8x32xf32>
    %968 = vector.broadcast %964 : f32 to vector<8x32xf32>
    %969 = arith.mulf %968, %967 : vector<8x32xf32>
    %970 = arith.addf %963, %969 : vector<8x32xf32>
    %c176 = arith.constant 176 : index
    %971 = memref.load %arg3[%c176] : memref<192xf32, #tpu.memory_space<smem>>
    %c0_499 = arith.constant 0 : index
    %c0_500 = arith.constant 0 : index
    %972 = arith.index_cast %914 : i32 to index
    %c2_501 = arith.constant 2 : index
    %973 = vector.load %arg2[%c0_499, %c0_500, %972, %c2_501] : memref<1x4x18x34xf32, #tpu.memory_space<vmem>>, vector<1x1x8x32xf32>
    %974 = vector.shape_cast %973 : vector<1x1x8x32xf32> to vector<8x32xf32>
    %975 = vector.broadcast %971 : f32 to vector<8x32xf32>
    %976 = arith.mulf %975, %974 : vector<8x32xf32>
    %977 = arith.addf %970, %976 : vector<8x32xf32>
    %c180 = arith.constant 180 : index
    %978 = memref.load %arg3[%c180] : memref<192xf32, #tpu.memory_space<smem>>
    %c0_502 = arith.constant 0 : index
    %c1_503 = arith.constant 1 : index
    %979 = arith.index_cast %914 : i32 to index
    %c2_504 = arith.constant 2 : index
    %980 = vector.load %arg2[%c0_502, %c1_503, %979, %c2_504] : memref<1x4x18x34xf32, #tpu.memory_space<vmem>>, vector<1x1x8x32xf32>
    %981 = vector.shape_cast %980 : vector<1x1x8x32xf32> to vector<8x32xf32>
    %982 = vector.broadcast %978 : f32 to vector<8x32xf32>
    %983 = arith.mulf %982, %981 : vector<8x32xf32>
    %984 = arith.addf %977, %983 : vector<8x32xf32>
    %c184 = arith.constant 184 : index
    %985 = memref.load %arg3[%c184] : memref<192xf32, #tpu.memory_space<smem>>
    %c0_505 = arith.constant 0 : index
    %c2_506 = arith.constant 2 : index
    %986 = arith.index_cast %914 : i32 to index
    %c2_507 = arith.constant 2 : index
    %987 = vector.load %arg2[%c0_505, %c2_506, %986, %c2_507] : memref<1x4x18x34xf32, #tpu.memory_space<vmem>>, vector<1x1x8x32xf32>
    %988 = vector.shape_cast %987 : vector<1x1x8x32xf32> to vector<8x32xf32>
    %989 = vector.broadcast %985 : f32 to vector<8x32xf32>
    %990 = arith.mulf %989, %988 : vector<8x32xf32>
    %991 = arith.addf %984, %990 : vector<8x32xf32>
    %c188 = arith.constant 188 : index
    %992 = memref.load %arg3[%c188] : memref<192xf32, #tpu.memory_space<smem>>
    %c0_508 = arith.constant 0 : index
    %c3_509 = arith.constant 3 : index
    %993 = arith.index_cast %914 : i32 to index
    %c2_510 = arith.constant 2 : index
    %994 = vector.load %arg2[%c0_508, %c3_509, %993, %c2_510] : memref<1x4x18x34xf32, #tpu.memory_space<vmem>>, vector<1x1x8x32xf32>
    %995 = vector.shape_cast %994 : vector<1x1x8x32xf32> to vector<8x32xf32>
    %996 = vector.broadcast %992 : f32 to vector<8x32xf32>
    %997 = arith.mulf %996, %995 : vector<8x32xf32>
    %998 = arith.addf %991, %997 : vector<8x32xf32>
    %999 = vector.extract_strided_slice %998 {offsets = [0, 0], sizes = [1, 32], strides = [1, 1]} : vector<8x32xf32> to vector<1x32xf32>
    %c0_511 = arith.constant 0 : index
    %c0_512 = arith.constant 0 : index
    %c1_513 = arith.constant 1 : index
    %c0_514 = arith.constant 0 : index
    %1000 = vector.load %arg5[%c0_511, %c0_512, %c1_513, %c0_514] : memref<1x4x16x32xf32, #tpu.memory_space<vmem>>, vector<1x1x1x32xf32>
    %1001 = vector.shape_cast %1000 : vector<1x1x1x32xf32> to vector<1x32xf32>
    %1002 = vector.shape_cast %999 : vector<1x32xf32> to vector<1x1x1x32xf32>
    tpu.vector_store %arg5[%c0_511, %c0_512, %c1_513, %c0_514], %1002 {strides = array<i32>} : memref<1x4x16x32xf32, #tpu.memory_space<vmem>>, vector<1x1x1x32xf32>,
    %1003 = vector.extract_strided_slice %998 {offsets = [1, 0], sizes = [1, 32], strides = [1, 1]} : vector<8x32xf32> to vector<1x32xf32>
    %c0_515 = arith.constant 0 : index
    %c0_516 = arith.constant 0 : index
    %c3_517 = arith.constant 3 : index
    %c0_518 = arith.constant 0 : index
    %1004 = vector.load %arg5[%c0_515, %c0_516, %c3_517, %c0_518] : memref<1x4x16x32xf32, #tpu.memory_space<vmem>>, vector<1x1x1x32xf32>
    %1005 = vector.shape_cast %1004 : vector<1x1x1x32xf32> to vector<1x32xf32>
    %1006 = vector.shape_cast %1003 : vector<1x32xf32> to vector<1x1x1x32xf32>
    tpu.vector_store %arg5[%c0_515, %c0_516, %c3_517, %c0_518], %1006 {strides = array<i32>} : memref<1x4x16x32xf32, #tpu.memory_space<vmem>>, vector<1x1x1x32xf32>,
    %1007 = vector.extract_strided_slice %998 {offsets = [2, 0], sizes = [1, 32], strides = [1, 1]} : vector<8x32xf32> to vector<1x32xf32>
    %c0_519 = arith.constant 0 : index
    %c0_520 = arith.constant 0 : index
    %c5_521 = arith.constant 5 : index
    %c0_522 = arith.constant 0 : index
    %1008 = vector.load %arg5[%c0_519, %c0_520, %c5_521, %c0_522] : memref<1x4x16x32xf32, #tpu.memory_space<vmem>>, vector<1x1x1x32xf32>
    %1009 = vector.shape_cast %1008 : vector<1x1x1x32xf32> to vector<1x32xf32>
    %1010 = vector.shape_cast %1007 : vector<1x32xf32> to vector<1x1x1x32xf32>
    tpu.vector_store %arg5[%c0_519, %c0_520, %c5_521, %c0_522], %1010 {strides = array<i32>} : memref<1x4x16x32xf32, #tpu.memory_space<vmem>>, vector<1x1x1x32xf32>,
    %1011 = vector.extract_strided_slice %998 {offsets = [3, 0], sizes = [1, 32], strides = [1, 1]} : vector<8x32xf32> to vector<1x32xf32>
    %c0_523 = arith.constant 0 : index
    %c0_524 = arith.constant 0 : index
    %c7_525 = arith.constant 7 : index
    %c0_526 = arith.constant 0 : index
    %1012 = vector.load %arg5[%c0_523, %c0_524, %c7_525, %c0_526] : memref<1x4x16x32xf32, #tpu.memory_space<vmem>>, vector<1x1x1x32xf32>
    %1013 = vector.shape_cast %1012 : vector<1x1x1x32xf32> to vector<1x32xf32>
    %1014 = vector.shape_cast %1011 : vector<1x32xf32> to vector<1x1x1x32xf32>
    tpu.vector_store %arg5[%c0_523, %c0_524, %c7_525, %c0_526], %1014 {strides = array<i32>} : memref<1x4x16x32xf32, #tpu.memory_space<vmem>>, vector<1x1x1x32xf32>,
    %1015 = vector.extract_strided_slice %998 {offsets = [4, 0], sizes = [1, 32], strides = [1, 1]} : vector<8x32xf32> to vector<1x32xf32>
    %c0_527 = arith.constant 0 : index
    %c0_528 = arith.constant 0 : index
    %c9_529 = arith.constant 9 : index
    %c0_530 = arith.constant 0 : index
    %1016 = vector.load %arg5[%c0_527, %c0_528, %c9_529, %c0_530] : memref<1x4x16x32xf32, #tpu.memory_space<vmem>>, vector<1x1x1x32xf32>
    %1017 = vector.shape_cast %1016 : vector<1x1x1x32xf32> to vector<1x32xf32>
    %1018 = vector.shape_cast %1015 : vector<1x32xf32> to vector<1x1x1x32xf32>
    tpu.vector_store %arg5[%c0_527, %c0_528, %c9_529, %c0_530], %1018 {strides = array<i32>} : memref<1x4x16x32xf32, #tpu.memory_space<vmem>>, vector<1x1x1x32xf32>,
    %1019 = vector.extract_strided_slice %998 {offsets = [5, 0], sizes = [1, 32], strides = [1, 1]} : vector<8x32xf32> to vector<1x32xf32>
    %c0_531 = arith.constant 0 : index
    %c0_532 = arith.constant 0 : index
    %c11_533 = arith.constant 11 : index
    %c0_534 = arith.constant 0 : index
    %1020 = vector.load %arg5[%c0_531, %c0_532, %c11_533, %c0_534] : memref<1x4x16x32xf32, #tpu.memory_space<vmem>>, vector<1x1x1x32xf32>
    %1021 = vector.shape_cast %1020 : vector<1x1x1x32xf32> to vector<1x32xf32>
    %1022 = vector.shape_cast %1019 : vector<1x32xf32> to vector<1x1x1x32xf32>
    tpu.vector_store %arg5[%c0_531, %c0_532, %c11_533, %c0_534], %1022 {strides = array<i32>} : memref<1x4x16x32xf32, #tpu.memory_space<vmem>>, vector<1x1x1x32xf32>,
    %1023 = vector.extract_strided_slice %998 {offsets = [6, 0], sizes = [1, 32], strides = [1, 1]} : vector<8x32xf32> to vector<1x32xf32>
    %c0_535 = arith.constant 0 : index
    %c0_536 = arith.constant 0 : index
    %c13_537 = arith.constant 13 : index
    %c0_538 = arith.constant 0 : index
    %1024 = vector.load %arg5[%c0_535, %c0_536, %c13_537, %c0_538] : memref<1x4x16x32xf32, #tpu.memory_space<vmem>>, vector<1x1x1x32xf32>
    %1025 = vector.shape_cast %1024 : vector<1x1x1x32xf32> to vector<1x32xf32>
    %1026 = vector.shape_cast %1023 : vector<1x32xf32> to vector<1x1x1x32xf32>
    tpu.vector_store %arg5[%c0_535, %c0_536, %c13_537, %c0_538], %1026 {strides = array<i32>} : memref<1x4x16x32xf32, #tpu.memory_space<vmem>>, vector<1x1x1x32xf32>,
    %1027 = vector.extract_strided_slice %998 {offsets = [7, 0], sizes = [1, 32], strides = [1, 1]} : vector<8x32xf32> to vector<1x32xf32>
    %c0_539 = arith.constant 0 : index
    %c0_540 = arith.constant 0 : index
    %c15_541 = arith.constant 15 : index
    %c0_542 = arith.constant 0 : index
    %1028 = vector.load %arg5[%c0_539, %c0_540, %c15_541, %c0_542] : memref<1x4x16x32xf32, #tpu.memory_space<vmem>>, vector<1x1x1x32xf32>
    %1029 = vector.shape_cast %1028 : vector<1x1x1x32xf32> to vector<1x32xf32>
    %1030 = vector.shape_cast %1027 : vector<1x32xf32> to vector<1x1x1x32xf32>
    tpu.vector_store %arg5[%c0_539, %c0_540, %c15_541, %c0_542], %1030 {strides = array<i32>} : memref<1x4x16x32xf32, #tpu.memory_space<vmem>>, vector<1x1x1x32xf32>,
    %c1_543 = arith.constant 1 : index
    %1031 = memref.load %arg4[%c1_543] : memref<4xf32, #tpu.memory_space<smem>>
    %1032 = vector.broadcast %1031 : f32 to vector<8x32xf32>
    %c1_i32_544 = arith.constant 1 : i32
    %1033 = arith.addi %0, %c1_i32_544 : i32
    %c0_i32_545 = arith.constant 0 : i32
    %1034 = arith.addi %1033, %c0_i32_545 : i32
    %c97 = arith.constant 97 : index
    %1035 = memref.load %arg3[%c97] : memref<192xf32, #tpu.memory_space<smem>>
    %c0_546 = arith.constant 0 : index
    %c0_547 = arith.constant 0 : index
    %1036 = arith.index_cast %1034 : i32 to index
    %c0_548 = arith.constant 0 : index
    %1037 = vector.load %arg2[%c0_546, %c0_547, %1036, %c0_548] : memref<1x4x18x34xf32, #tpu.memory_space<vmem>>, vector<1x1x8x32xf32>
    %1038 = vector.shape_cast %1037 : vector<1x1x8x32xf32> to vector<8x32xf32>
    %1039 = vector.broadcast %1035 : f32 to vector<8x32xf32>
    %1040 = arith.mulf %1039, %1038 : vector<8x32xf32>
    %1041 = arith.addf %1032, %1040 : vector<8x32xf32>
    %c101 = arith.constant 101 : index
    %1042 = memref.load %arg3[%c101] : memref<192xf32, #tpu.memory_space<smem>>
    %c0_549 = arith.constant 0 : index
    %c1_550 = arith.constant 1 : index
    %1043 = arith.index_cast %1034 : i32 to index
    %c0_551 = arith.constant 0 : index
    %1044 = vector.load %arg2[%c0_549, %c1_550, %1043, %c0_551] : memref<1x4x18x34xf32, #tpu.memory_space<vmem>>, vector<1x1x8x32xf32>
    %1045 = vector.shape_cast %1044 : vector<1x1x8x32xf32> to vector<8x32xf32>
    %1046 = vector.broadcast %1042 : f32 to vector<8x32xf32>
    %1047 = arith.mulf %1046, %1045 : vector<8x32xf32>
    %1048 = arith.addf %1041, %1047 : vector<8x32xf32>
    %c105 = arith.constant 105 : index
    %1049 = memref.load %arg3[%c105] : memref<192xf32, #tpu.memory_space<smem>>
    %c0_552 = arith.constant 0 : index
    %c2_553 = arith.constant 2 : index
    %1050 = arith.index_cast %1034 : i32 to index
    %c0_554 = arith.constant 0 : index
    %1051 = vector.load %arg2[%c0_552, %c2_553, %1050, %c0_554] : memref<1x4x18x34xf32, #tpu.memory_space<vmem>>, vector<1x1x8x32xf32>
    %1052 = vector.shape_cast %1051 : vector<1x1x8x32xf32> to vector<8x32xf32>
    %1053 = vector.broadcast %1049 : f32 to vector<8x32xf32>
    %1054 = arith.mulf %1053, %1052 : vector<8x32xf32>
    %1055 = arith.addf %1048, %1054 : vector<8x32xf32>
    %c109 = arith.constant 109 : index
    %1056 = memref.load %arg3[%c109] : memref<192xf32, #tpu.memory_space<smem>>
    %c0_555 = arith.constant 0 : index
    %c3_556 = arith.constant 3 : index
    %1057 = arith.index_cast %1034 : i32 to index
    %c0_557 = arith.constant 0 : index
    %1058 = vector.load %arg2[%c0_555, %c3_556, %1057, %c0_557] : memref<1x4x18x34xf32, #tpu.memory_space<vmem>>, vector<1x1x8x32xf32>
    %1059 = vector.shape_cast %1058 : vector<1x1x8x32xf32> to vector<8x32xf32>
    %1060 = vector.broadcast %1056 : f32 to vector<8x32xf32>
    %1061 = arith.mulf %1060, %1059 : vector<8x32xf32>
    %1062 = arith.addf %1055, %1061 : vector<8x32xf32>
    %c113 = arith.constant 113 : index
    %1063 = memref.load %arg3[%c113] : memref<192xf32, #tpu.memory_space<smem>>
    %c0_558 = arith.constant 0 : index
    %c0_559 = arith.constant 0 : index
    %1064 = arith.index_cast %1034 : i32 to index
    %c1_560 = arith.constant 1 : index
    %1065 = vector.load %arg2[%c0_558, %c0_559, %1064, %c1_560] : memref<1x4x18x34xf32, #tpu.memory_space<vmem>>, vector<1x1x8x32xf32>
    %1066 = vector.shape_cast %1065 : vector<1x1x8x32xf32> to vector<8x32xf32>
    %1067 = vector.broadcast %1063 : f32 to vector<8x32xf32>
    %1068 = arith.mulf %1067, %1066 : vector<8x32xf32>
    %1069 = arith.addf %1062, %1068 : vector<8x32xf32>
    %c117 = arith.constant 117 : index
    %1070 = memref.load %arg3[%c117] : memref<192xf32, #tpu.memory_space<smem>>
    %c0_561 = arith.constant 0 : index
    %c1_562 = arith.constant 1 : index
    %1071 = arith.index_cast %1034 : i32 to index
    %c1_563 = arith.constant 1 : index
    %1072 = vector.load %arg2[%c0_561, %c1_562, %1071, %c1_563] : memref<1x4x18x34xf32, #tpu.memory_space<vmem>>, vector<1x1x8x32xf32>
    %1073 = vector.shape_cast %1072 : vector<1x1x8x32xf32> to vector<8x32xf32>
    %1074 = vector.broadcast %1070 : f32 to vector<8x32xf32>
    %1075 = arith.mulf %1074, %1073 : vector<8x32xf32>
    %1076 = arith.addf %1069, %1075 : vector<8x32xf32>
    %c121 = arith.constant 121 : index
    %1077 = memref.load %arg3[%c121] : memref<192xf32, #tpu.memory_space<smem>>
    %c0_564 = arith.constant 0 : index
    %c2_565 = arith.constant 2 : index
    %1078 = arith.index_cast %1034 : i32 to index
    %c1_566 = arith.constant 1 : index
    %1079 = vector.load %arg2[%c0_564, %c2_565, %1078, %c1_566] : memref<1x4x18x34xf32, #tpu.memory_space<vmem>>, vector<1x1x8x32xf32>
    %1080 = vector.shape_cast %1079 : vector<1x1x8x32xf32> to vector<8x32xf32>
    %1081 = vector.broadcast %1077 : f32 to vector<8x32xf32>
    %1082 = arith.mulf %1081, %1080 : vector<8x32xf32>
    %1083 = arith.addf %1076, %1082 : vector<8x32xf32>
    %c125 = arith.constant 125 : index
    %1084 = memref.load %arg3[%c125] : memref<192xf32, #tpu.memory_space<smem>>
    %c0_567 = arith.constant 0 : index
    %c3_568 = arith.constant 3 : index
    %1085 = arith.index_cast %1034 : i32 to index
    %c1_569 = arith.constant 1 : index
    %1086 = vector.load %arg2[%c0_567, %c3_568, %1085, %c1_569] : memref<1x4x18x34xf32, #tpu.memory_space<vmem>>, vector<1x1x8x32xf32>
    %1087 = vector.shape_cast %1086 : vector<1x1x8x32xf32> to vector<8x32xf32>
    %1088 = vector.broadcast %1084 : f32 to vector<8x32xf32>
    %1089 = arith.mulf %1088, %1087 : vector<8x32xf32>
    %1090 = arith.addf %1083, %1089 : vector<8x32xf32>
    %c129 = arith.constant 129 : index
    %1091 = memref.load %arg3[%c129] : memref<192xf32, #tpu.memory_space<smem>>
    %c0_570 = arith.constant 0 : index
    %c0_571 = arith.constant 0 : index
    %1092 = arith.index_cast %1034 : i32 to index
    %c2_572 = arith.constant 2 : index
    %1093 = vector.load %arg2[%c0_570, %c0_571, %1092, %c2_572] : memref<1x4x18x34xf32, #tpu.memory_space<vmem>>, vector<1x1x8x32xf32>
    %1094 = vector.shape_cast %1093 : vector<1x1x8x32xf32> to vector<8x32xf32>
    %1095 = vector.broadcast %1091 : f32 to vector<8x32xf32>
    %1096 = arith.mulf %1095, %1094 : vector<8x32xf32>
    %1097 = arith.addf %1090, %1096 : vector<8x32xf32>
    %c133 = arith.constant 133 : index
    %1098 = memref.load %arg3[%c133] : memref<192xf32, #tpu.memory_space<smem>>
    %c0_573 = arith.constant 0 : index
    %c1_574 = arith.constant 1 : index
    %1099 = arith.index_cast %1034 : i32 to index
    %c2_575 = arith.constant 2 : index
    %1100 = vector.load %arg2[%c0_573, %c1_574, %1099, %c2_575] : memref<1x4x18x34xf32, #tpu.memory_space<vmem>>, vector<1x1x8x32xf32>
    %1101 = vector.shape_cast %1100 : vector<1x1x8x32xf32> to vector<8x32xf32>
    %1102 = vector.broadcast %1098 : f32 to vector<8x32xf32>
    %1103 = arith.mulf %1102, %1101 : vector<8x32xf32>
    %1104 = arith.addf %1097, %1103 : vector<8x32xf32>
    %c137 = arith.constant 137 : index
    %1105 = memref.load %arg3[%c137] : memref<192xf32, #tpu.memory_space<smem>>
    %c0_576 = arith.constant 0 : index
    %c2_577 = arith.constant 2 : index
    %1106 = arith.index_cast %1034 : i32 to index
    %c2_578 = arith.constant 2 : index
    %1107 = vector.load %arg2[%c0_576, %c2_577, %1106, %c2_578] : memref<1x4x18x34xf32, #tpu.memory_space<vmem>>, vector<1x1x8x32xf32>
    %1108 = vector.shape_cast %1107 : vector<1x1x8x32xf32> to vector<8x32xf32>
    %1109 = vector.broadcast %1105 : f32 to vector<8x32xf32>
    %1110 = arith.mulf %1109, %1108 : vector<8x32xf32>
    %1111 = arith.addf %1104, %1110 : vector<8x32xf32>
    %c141 = arith.constant 141 : index
    %1112 = memref.load %arg3[%c141] : memref<192xf32, #tpu.memory_space<smem>>
    %c0_579 = arith.constant 0 : index
    %c3_580 = arith.constant 3 : index
    %1113 = arith.index_cast %1034 : i32 to index
    %c2_581 = arith.constant 2 : index
    %1114 = vector.load %arg2[%c0_579, %c3_580, %1113, %c2_581] : memref<1x4x18x34xf32, #tpu.memory_space<vmem>>, vector<1x1x8x32xf32>
    %1115 = vector.shape_cast %1114 : vector<1x1x8x32xf32> to vector<8x32xf32>
    %1116 = vector.broadcast %1112 : f32 to vector<8x32xf32>
    %1117 = arith.mulf %1116, %1115 : vector<8x32xf32>
    %1118 = arith.addf %1111, %1117 : vector<8x32xf32>
    %c1_i32_582 = arith.constant 1 : i32
    %1119 = arith.addi %0, %c1_i32_582 : i32
    %c1_i32_583 = arith.constant 1 : i32
    %1120 = arith.addi %1119, %c1_i32_583 : i32
    %c145 = arith.constant 145 : index
    %1121 = memref.load %arg3[%c145] : memref<192xf32, #tpu.memory_space<smem>>
    %c0_584 = arith.constant 0 : index
    %c0_585 = arith.constant 0 : index
    %1122 = arith.index_cast %1120 : i32 to index
    %c0_586 = arith.constant 0 : index
    %1123 = vector.load %arg2[%c0_584, %c0_585, %1122, %c0_586] : memref<1x4x18x34xf32, #tpu.memory_space<vmem>>, vector<1x1x8x32xf32>
    %1124 = vector.shape_cast %1123 : vector<1x1x8x32xf32> to vector<8x32xf32>
    %1125 = vector.broadcast %1121 : f32 to vector<8x32xf32>
    %1126 = arith.mulf %1125, %1124 : vector<8x32xf32>
    %1127 = arith.addf %1118, %1126 : vector<8x32xf32>
    %c149 = arith.constant 149 : index
    %1128 = memref.load %arg3[%c149] : memref<192xf32, #tpu.memory_space<smem>>
    %c0_587 = arith.constant 0 : index
    %c1_588 = arith.constant 1 : index
    %1129 = arith.index_cast %1120 : i32 to index
    %c0_589 = arith.constant 0 : index
    %1130 = vector.load %arg2[%c0_587, %c1_588, %1129, %c0_589] : memref<1x4x18x34xf32, #tpu.memory_space<vmem>>, vector<1x1x8x32xf32>
    %1131 = vector.shape_cast %1130 : vector<1x1x8x32xf32> to vector<8x32xf32>
    %1132 = vector.broadcast %1128 : f32 to vector<8x32xf32>
    %1133 = arith.mulf %1132, %1131 : vector<8x32xf32>
    %1134 = arith.addf %1127, %1133 : vector<8x32xf32>
    %c153 = arith.constant 153 : index
    %1135 = memref.load %arg3[%c153] : memref<192xf32, #tpu.memory_space<smem>>
    %c0_590 = arith.constant 0 : index
    %c2_591 = arith.constant 2 : index
    %1136 = arith.index_cast %1120 : i32 to index
    %c0_592 = arith.constant 0 : index
    %1137 = vector.load %arg2[%c0_590, %c2_591, %1136, %c0_592] : memref<1x4x18x34xf32, #tpu.memory_space<vmem>>, vector<1x1x8x32xf32>
    %1138 = vector.shape_cast %1137 : vector<1x1x8x32xf32> to vector<8x32xf32>
    %1139 = vector.broadcast %1135 : f32 to vector<8x32xf32>
    %1140 = arith.mulf %1139, %1138 : vector<8x32xf32>
    %1141 = arith.addf %1134, %1140 : vector<8x32xf32>
    %c157 = arith.constant 157 : index
    %1142 = memref.load %arg3[%c157] : memref<192xf32, #tpu.memory_space<smem>>
    %c0_593 = arith.constant 0 : index
    %c3_594 = arith.constant 3 : index
    %1143 = arith.index_cast %1120 : i32 to index
    %c0_595 = arith.constant 0 : index
    %1144 = vector.load %arg2[%c0_593, %c3_594, %1143, %c0_595] : memref<1x4x18x34xf32, #tpu.memory_space<vmem>>, vector<1x1x8x32xf32>
    %1145 = vector.shape_cast %1144 : vector<1x1x8x32xf32> to vector<8x32xf32>
    %1146 = vector.broadcast %1142 : f32 to vector<8x32xf32>
    %1147 = arith.mulf %1146, %1145 : vector<8x32xf32>
    %1148 = arith.addf %1141, %1147 : vector<8x32xf32>
    %c161 = arith.constant 161 : index
    %1149 = memref.load %arg3[%c161] : memref<192xf32, #tpu.memory_space<smem>>
    %c0_596 = arith.constant 0 : index
    %c0_597 = arith.constant 0 : index
    %1150 = arith.index_cast %1120 : i32 to index
    %c1_598 = arith.constant 1 : index
    %1151 = vector.load %arg2[%c0_596, %c0_597, %1150, %c1_598] : memref<1x4x18x34xf32, #tpu.memory_space<vmem>>, vector<1x1x8x32xf32>
    %1152 = vector.shape_cast %1151 : vector<1x1x8x32xf32> to vector<8x32xf32>
    %1153 = vector.broadcast %1149 : f32 to vector<8x32xf32>
    %1154 = arith.mulf %1153, %1152 : vector<8x32xf32>
    %1155 = arith.addf %1148, %1154 : vector<8x32xf32>
    %c165 = arith.constant 165 : index
    %1156 = memref.load %arg3[%c165] : memref<192xf32, #tpu.memory_space<smem>>
    %c0_599 = arith.constant 0 : index
    %c1_600 = arith.constant 1 : index
    %1157 = arith.index_cast %1120 : i32 to index
    %c1_601 = arith.constant 1 : index
    %1158 = vector.load %arg2[%c0_599, %c1_600, %1157, %c1_601] : memref<1x4x18x34xf32, #tpu.memory_space<vmem>>, vector<1x1x8x32xf32>
    %1159 = vector.shape_cast %1158 : vector<1x1x8x32xf32> to vector<8x32xf32>
    %1160 = vector.broadcast %1156 : f32 to vector<8x32xf32>
    %1161 = arith.mulf %1160, %1159 : vector<8x32xf32>
    %1162 = arith.addf %1155, %1161 : vector<8x32xf32>
    %c169 = arith.constant 169 : index
    %1163 = memref.load %arg3[%c169] : memref<192xf32, #tpu.memory_space<smem>>
    %c0_602 = arith.constant 0 : index
    %c2_603 = arith.constant 2 : index
    %1164 = arith.index_cast %1120 : i32 to index
    %c1_604 = arith.constant 1 : index
    %1165 = vector.load %arg2[%c0_602, %c2_603, %1164, %c1_604] : memref<1x4x18x34xf32, #tpu.memory_space<vmem>>, vector<1x1x8x32xf32>
    %1166 = vector.shape_cast %1165 : vector<1x1x8x32xf32> to vector<8x32xf32>
    %1167 = vector.broadcast %1163 : f32 to vector<8x32xf32>
    %1168 = arith.mulf %1167, %1166 : vector<8x32xf32>
    %1169 = arith.addf %1162, %1168 : vector<8x32xf32>
    %c173 = arith.constant 173 : index
    %1170 = memref.load %arg3[%c173] : memref<192xf32, #tpu.memory_space<smem>>
    %c0_605 = arith.constant 0 : index
    %c3_606 = arith.constant 3 : index
    %1171 = arith.index_cast %1120 : i32 to index
    %c1_607 = arith.constant 1 : index
    %1172 = vector.load %arg2[%c0_605, %c3_606, %1171, %c1_607] : memref<1x4x18x34xf32, #tpu.memory_space<vmem>>, vector<1x1x8x32xf32>
    %1173 = vector.shape_cast %1172 : vector<1x1x8x32xf32> to vector<8x32xf32>
    %1174 = vector.broadcast %1170 : f32 to vector<8x32xf32>
    %1175 = arith.mulf %1174, %1173 : vector<8x32xf32>
    %1176 = arith.addf %1169, %1175 : vector<8x32xf32>
    %c177 = arith.constant 177 : index
    %1177 = memref.load %arg3[%c177] : memref<192xf32, #tpu.memory_space<smem>>
    %c0_608 = arith.constant 0 : index
    %c0_609 = arith.constant 0 : index
    %1178 = arith.index_cast %1120 : i32 to index
    %c2_610 = arith.constant 2 : index
    %1179 = vector.load %arg2[%c0_608, %c0_609, %1178, %c2_610] : memref<1x4x18x34xf32, #tpu.memory_space<vmem>>, vector<1x1x8x32xf32>
    %1180 = vector.shape_cast %1179 : vector<1x1x8x32xf32> to vector<8x32xf32>
    %1181 = vector.broadcast %1177 : f32 to vector<8x32xf32>
    %1182 = arith.mulf %1181, %1180 : vector<8x32xf32>
    %1183 = arith.addf %1176, %1182 : vector<8x32xf32>
    %c181 = arith.constant 181 : index
    %1184 = memref.load %arg3[%c181] : memref<192xf32, #tpu.memory_space<smem>>
    %c0_611 = arith.constant 0 : index
    %c1_612 = arith.constant 1 : index
    %1185 = arith.index_cast %1120 : i32 to index
    %c2_613 = arith.constant 2 : index
    %1186 = vector.load %arg2[%c0_611, %c1_612, %1185, %c2_613] : memref<1x4x18x34xf32, #tpu.memory_space<vmem>>, vector<1x1x8x32xf32>
    %1187 = vector.shape_cast %1186 : vector<1x1x8x32xf32> to vector<8x32xf32>
    %1188 = vector.broadcast %1184 : f32 to vector<8x32xf32>
    %1189 = arith.mulf %1188, %1187 : vector<8x32xf32>
    %1190 = arith.addf %1183, %1189 : vector<8x32xf32>
    %c185 = arith.constant 185 : index
    %1191 = memref.load %arg3[%c185] : memref<192xf32, #tpu.memory_space<smem>>
    %c0_614 = arith.constant 0 : index
    %c2_615 = arith.constant 2 : index
    %1192 = arith.index_cast %1120 : i32 to index
    %c2_616 = arith.constant 2 : index
    %1193 = vector.load %arg2[%c0_614, %c2_615, %1192, %c2_616] : memref<1x4x18x34xf32, #tpu.memory_space<vmem>>, vector<1x1x8x32xf32>
    %1194 = vector.shape_cast %1193 : vector<1x1x8x32xf32> to vector<8x32xf32>
    %1195 = vector.broadcast %1191 : f32 to vector<8x32xf32>
    %1196 = arith.mulf %1195, %1194 : vector<8x32xf32>
    %1197 = arith.addf %1190, %1196 : vector<8x32xf32>
    %c189 = arith.constant 189 : index
    %1198 = memref.load %arg3[%c189] : memref<192xf32, #tpu.memory_space<smem>>
    %c0_617 = arith.constant 0 : index
    %c3_618 = arith.constant 3 : index
    %1199 = arith.index_cast %1120 : i32 to index
    %c2_619 = arith.constant 2 : index
    %1200 = vector.load %arg2[%c0_617, %c3_618, %1199, %c2_619] : memref<1x4x18x34xf32, #tpu.memory_space<vmem>>, vector<1x1x8x32xf32>
    %1201 = vector.shape_cast %1200 : vector<1x1x8x32xf32> to vector<8x32xf32>
    %1202 = vector.broadcast %1198 : f32 to vector<8x32xf32>
    %1203 = arith.mulf %1202, %1201 : vector<8x32xf32>
    %1204 = arith.addf %1197, %1203 : vector<8x32xf32>
    %1205 = vector.extract_strided_slice %1204 {offsets = [0, 0], sizes = [1, 32], strides = [1, 1]} : vector<8x32xf32> to vector<1x32xf32>
    %c0_620 = arith.constant 0 : index
    %c1_621 = arith.constant 1 : index
    %c1_622 = arith.constant 1 : index
    %c0_623 = arith.constant 0 : index
    %1206 = vector.load %arg5[%c0_620, %c1_621, %c1_622, %c0_623] : memref<1x4x16x32xf32, #tpu.memory_space<vmem>>, vector<1x1x1x32xf32>
    %1207 = vector.shape_cast %1206 : vector<1x1x1x32xf32> to vector<1x32xf32>
    %1208 = vector.shape_cast %1205 : vector<1x32xf32> to vector<1x1x1x32xf32>
    tpu.vector_store %arg5[%c0_620, %c1_621, %c1_622, %c0_623], %1208 {strides = array<i32>} : memref<1x4x16x32xf32, #tpu.memory_space<vmem>>, vector<1x1x1x32xf32>,
    %1209 = vector.extract_strided_slice %1204 {offsets = [1, 0], sizes = [1, 32], strides = [1, 1]} : vector<8x32xf32> to vector<1x32xf32>
    %c0_624 = arith.constant 0 : index
    %c1_625 = arith.constant 1 : index
    %c3_626 = arith.constant 3 : index
    %c0_627 = arith.constant 0 : index
    %1210 = vector.load %arg5[%c0_624, %c1_625, %c3_626, %c0_627] : memref<1x4x16x32xf32, #tpu.memory_space<vmem>>, vector<1x1x1x32xf32>
    %1211 = vector.shape_cast %1210 : vector<1x1x1x32xf32> to vector<1x32xf32>
    %1212 = vector.shape_cast %1209 : vector<1x32xf32> to vector<1x1x1x32xf32>
    tpu.vector_store %arg5[%c0_624, %c1_625, %c3_626, %c0_627], %1212 {strides = array<i32>} : memref<1x4x16x32xf32, #tpu.memory_space<vmem>>, vector<1x1x1x32xf32>,
    %1213 = vector.extract_strided_slice %1204 {offsets = [2, 0], sizes = [1, 32], strides = [1, 1]} : vector<8x32xf32> to vector<1x32xf32>
    %c0_628 = arith.constant 0 : index
    %c1_629 = arith.constant 1 : index
    %c5_630 = arith.constant 5 : index
    %c0_631 = arith.constant 0 : index
    %1214 = vector.load %arg5[%c0_628, %c1_629, %c5_630, %c0_631] : memref<1x4x16x32xf32, #tpu.memory_space<vmem>>, vector<1x1x1x32xf32>
    %1215 = vector.shape_cast %1214 : vector<1x1x1x32xf32> to vector<1x32xf32>
    %1216 = vector.shape_cast %1213 : vector<1x32xf32> to vector<1x1x1x32xf32>
    tpu.vector_store %arg5[%c0_628, %c1_629, %c5_630, %c0_631], %1216 {strides = array<i32>} : memref<1x4x16x32xf32, #tpu.memory_space<vmem>>, vector<1x1x1x32xf32>,
    %1217 = vector.extract_strided_slice %1204 {offsets = [3, 0], sizes = [1, 32], strides = [1, 1]} : vector<8x32xf32> to vector<1x32xf32>
    %c0_632 = arith.constant 0 : index
    %c1_633 = arith.constant 1 : index
    %c7_634 = arith.constant 7 : index
    %c0_635 = arith.constant 0 : index
    %1218 = vector.load %arg5[%c0_632, %c1_633, %c7_634, %c0_635] : memref<1x4x16x32xf32, #tpu.memory_space<vmem>>, vector<1x1x1x32xf32>
    %1219 = vector.shape_cast %1218 : vector<1x1x1x32xf32> to vector<1x32xf32>
    %1220 = vector.shape_cast %1217 : vector<1x32xf32> to vector<1x1x1x32xf32>
    tpu.vector_store %arg5[%c0_632, %c1_633, %c7_634, %c0_635], %1220 {strides = array<i32>} : memref<1x4x16x32xf32, #tpu.memory_space<vmem>>, vector<1x1x1x32xf32>,
    %1221 = vector.extract_strided_slice %1204 {offsets = [4, 0], sizes = [1, 32], strides = [1, 1]} : vector<8x32xf32> to vector<1x32xf32>
    %c0_636 = arith.constant 0 : index
    %c1_637 = arith.constant 1 : index
    %c9_638 = arith.constant 9 : index
    %c0_639 = arith.constant 0 : index
    %1222 = vector.load %arg5[%c0_636, %c1_637, %c9_638, %c0_639] : memref<1x4x16x32xf32, #tpu.memory_space<vmem>>, vector<1x1x1x32xf32>
    %1223 = vector.shape_cast %1222 : vector<1x1x1x32xf32> to vector<1x32xf32>
    %1224 = vector.shape_cast %1221 : vector<1x32xf32> to vector<1x1x1x32xf32>
    tpu.vector_store %arg5[%c0_636, %c1_637, %c9_638, %c0_639], %1224 {strides = array<i32>} : memref<1x4x16x32xf32, #tpu.memory_space<vmem>>, vector<1x1x1x32xf32>,
    %1225 = vector.extract_strided_slice %1204 {offsets = [5, 0], sizes = [1, 32], strides = [1, 1]} : vector<8x32xf32> to vector<1x32xf32>
    %c0_640 = arith.constant 0 : index
    %c1_641 = arith.constant 1 : index
    %c11_642 = arith.constant 11 : index
    %c0_643 = arith.constant 0 : index
    %1226 = vector.load %arg5[%c0_640, %c1_641, %c11_642, %c0_643] : memref<1x4x16x32xf32, #tpu.memory_space<vmem>>, vector<1x1x1x32xf32>
    %1227 = vector.shape_cast %1226 : vector<1x1x1x32xf32> to vector<1x32xf32>
    %1228 = vector.shape_cast %1225 : vector<1x32xf32> to vector<1x1x1x32xf32>
    tpu.vector_store %arg5[%c0_640, %c1_641, %c11_642, %c0_643], %1228 {strides = array<i32>} : memref<1x4x16x32xf32, #tpu.memory_space<vmem>>, vector<1x1x1x32xf32>,
    %1229 = vector.extract_strided_slice %1204 {offsets = [6, 0], sizes = [1, 32], strides = [1, 1]} : vector<8x32xf32> to vector<1x32xf32>
    %c0_644 = arith.constant 0 : index
    %c1_645 = arith.constant 1 : index
    %c13_646 = arith.constant 13 : index
    %c0_647 = arith.constant 0 : index
    %1230 = vector.load %arg5[%c0_644, %c1_645, %c13_646, %c0_647] : memref<1x4x16x32xf32, #tpu.memory_space<vmem>>, vector<1x1x1x32xf32>
    %1231 = vector.shape_cast %1230 : vector<1x1x1x32xf32> to vector<1x32xf32>
    %1232 = vector.shape_cast %1229 : vector<1x32xf32> to vector<1x1x1x32xf32>
    tpu.vector_store %arg5[%c0_644, %c1_645, %c13_646, %c0_647], %1232 {strides = array<i32>} : memref<1x4x16x32xf32, #tpu.memory_space<vmem>>, vector<1x1x1x32xf32>,
    %1233 = vector.extract_strided_slice %1204 {offsets = [7, 0], sizes = [1, 32], strides = [1, 1]} : vector<8x32xf32> to vector<1x32xf32>
    %c0_648 = arith.constant 0 : index
    %c1_649 = arith.constant 1 : index
    %c15_650 = arith.constant 15 : index
    %c0_651 = arith.constant 0 : index
    %1234 = vector.load %arg5[%c0_648, %c1_649, %c15_650, %c0_651] : memref<1x4x16x32xf32, #tpu.memory_space<vmem>>, vector<1x1x1x32xf32>
    %1235 = vector.shape_cast %1234 : vector<1x1x1x32xf32> to vector<1x32xf32>
    %1236 = vector.shape_cast %1233 : vector<1x32xf32> to vector<1x1x1x32xf32>
    tpu.vector_store %arg5[%c0_648, %c1_649, %c15_650, %c0_651], %1236 {strides = array<i32>} : memref<1x4x16x32xf32, #tpu.memory_space<vmem>>, vector<1x1x1x32xf32>,
    %c2_652 = arith.constant 2 : index
    %1237 = memref.load %arg4[%c2_652] : memref<4xf32, #tpu.memory_space<smem>>
    %1238 = vector.broadcast %1237 : f32 to vector<8x32xf32>
    %c1_i32_653 = arith.constant 1 : i32
    %1239 = arith.addi %0, %c1_i32_653 : i32
    %c0_i32_654 = arith.constant 0 : i32
    %1240 = arith.addi %1239, %c0_i32_654 : i32
    %c98 = arith.constant 98 : index
    %1241 = memref.load %arg3[%c98] : memref<192xf32, #tpu.memory_space<smem>>
    %c0_655 = arith.constant 0 : index
    %c0_656 = arith.constant 0 : index
    %1242 = arith.index_cast %1240 : i32 to index
    %c0_657 = arith.constant 0 : index
    %1243 = vector.load %arg2[%c0_655, %c0_656, %1242, %c0_657] : memref<1x4x18x34xf32, #tpu.memory_space<vmem>>, vector<1x1x8x32xf32>
    %1244 = vector.shape_cast %1243 : vector<1x1x8x32xf32> to vector<8x32xf32>
    %1245 = vector.broadcast %1241 : f32 to vector<8x32xf32>
    %1246 = arith.mulf %1245, %1244 : vector<8x32xf32>
    %1247 = arith.addf %1238, %1246 : vector<8x32xf32>
    %c102 = arith.constant 102 : index
    %1248 = memref.load %arg3[%c102] : memref<192xf32, #tpu.memory_space<smem>>
    %c0_658 = arith.constant 0 : index
    %c1_659 = arith.constant 1 : index
    %1249 = arith.index_cast %1240 : i32 to index
    %c0_660 = arith.constant 0 : index
    %1250 = vector.load %arg2[%c0_658, %c1_659, %1249, %c0_660] : memref<1x4x18x34xf32, #tpu.memory_space<vmem>>, vector<1x1x8x32xf32>
    %1251 = vector.shape_cast %1250 : vector<1x1x8x32xf32> to vector<8x32xf32>
    %1252 = vector.broadcast %1248 : f32 to vector<8x32xf32>
    %1253 = arith.mulf %1252, %1251 : vector<8x32xf32>
    %1254 = arith.addf %1247, %1253 : vector<8x32xf32>
    %c106 = arith.constant 106 : index
    %1255 = memref.load %arg3[%c106] : memref<192xf32, #tpu.memory_space<smem>>
    %c0_661 = arith.constant 0 : index
    %c2_662 = arith.constant 2 : index
    %1256 = arith.index_cast %1240 : i32 to index
    %c0_663 = arith.constant 0 : index
    %1257 = vector.load %arg2[%c0_661, %c2_662, %1256, %c0_663] : memref<1x4x18x34xf32, #tpu.memory_space<vmem>>, vector<1x1x8x32xf32>
    %1258 = vector.shape_cast %1257 : vector<1x1x8x32xf32> to vector<8x32xf32>
    %1259 = vector.broadcast %1255 : f32 to vector<8x32xf32>
    %1260 = arith.mulf %1259, %1258 : vector<8x32xf32>
    %1261 = arith.addf %1254, %1260 : vector<8x32xf32>
    %c110 = arith.constant 110 : index
    %1262 = memref.load %arg3[%c110] : memref<192xf32, #tpu.memory_space<smem>>
    %c0_664 = arith.constant 0 : index
    %c3_665 = arith.constant 3 : index
    %1263 = arith.index_cast %1240 : i32 to index
    %c0_666 = arith.constant 0 : index
    %1264 = vector.load %arg2[%c0_664, %c3_665, %1263, %c0_666] : memref<1x4x18x34xf32, #tpu.memory_space<vmem>>, vector<1x1x8x32xf32>
    %1265 = vector.shape_cast %1264 : vector<1x1x8x32xf32> to vector<8x32xf32>
    %1266 = vector.broadcast %1262 : f32 to vector<8x32xf32>
    %1267 = arith.mulf %1266, %1265 : vector<8x32xf32>
    %1268 = arith.addf %1261, %1267 : vector<8x32xf32>
    %c114 = arith.constant 114 : index
    %1269 = memref.load %arg3[%c114] : memref<192xf32, #tpu.memory_space<smem>>
    %c0_667 = arith.constant 0 : index
    %c0_668 = arith.constant 0 : index
    %1270 = arith.index_cast %1240 : i32 to index
    %c1_669 = arith.constant 1 : index
    %1271 = vector.load %arg2[%c0_667, %c0_668, %1270, %c1_669] : memref<1x4x18x34xf32, #tpu.memory_space<vmem>>, vector<1x1x8x32xf32>
    %1272 = vector.shape_cast %1271 : vector<1x1x8x32xf32> to vector<8x32xf32>
    %1273 = vector.broadcast %1269 : f32 to vector<8x32xf32>
    %1274 = arith.mulf %1273, %1272 : vector<8x32xf32>
    %1275 = arith.addf %1268, %1274 : vector<8x32xf32>
    %c118 = arith.constant 118 : index
    %1276 = memref.load %arg3[%c118] : memref<192xf32, #tpu.memory_space<smem>>
    %c0_670 = arith.constant 0 : index
    %c1_671 = arith.constant 1 : index
    %1277 = arith.index_cast %1240 : i32 to index
    %c1_672 = arith.constant 1 : index
    %1278 = vector.load %arg2[%c0_670, %c1_671, %1277, %c1_672] : memref<1x4x18x34xf32, #tpu.memory_space<vmem>>, vector<1x1x8x32xf32>
    %1279 = vector.shape_cast %1278 : vector<1x1x8x32xf32> to vector<8x32xf32>
    %1280 = vector.broadcast %1276 : f32 to vector<8x32xf32>
    %1281 = arith.mulf %1280, %1279 : vector<8x32xf32>
    %1282 = arith.addf %1275, %1281 : vector<8x32xf32>
    %c122 = arith.constant 122 : index
    %1283 = memref.load %arg3[%c122] : memref<192xf32, #tpu.memory_space<smem>>
    %c0_673 = arith.constant 0 : index
    %c2_674 = arith.constant 2 : index
    %1284 = arith.index_cast %1240 : i32 to index
    %c1_675 = arith.constant 1 : index
    %1285 = vector.load %arg2[%c0_673, %c2_674, %1284, %c1_675] : memref<1x4x18x34xf32, #tpu.memory_space<vmem>>, vector<1x1x8x32xf32>
    %1286 = vector.shape_cast %1285 : vector<1x1x8x32xf32> to vector<8x32xf32>
    %1287 = vector.broadcast %1283 : f32 to vector<8x32xf32>
    %1288 = arith.mulf %1287, %1286 : vector<8x32xf32>
    %1289 = arith.addf %1282, %1288 : vector<8x32xf32>
    %c126 = arith.constant 126 : index
    %1290 = memref.load %arg3[%c126] : memref<192xf32, #tpu.memory_space<smem>>
    %c0_676 = arith.constant 0 : index
    %c3_677 = arith.constant 3 : index
    %1291 = arith.index_cast %1240 : i32 to index
    %c1_678 = arith.constant 1 : index
    %1292 = vector.load %arg2[%c0_676, %c3_677, %1291, %c1_678] : memref<1x4x18x34xf32, #tpu.memory_space<vmem>>, vector<1x1x8x32xf32>
    %1293 = vector.shape_cast %1292 : vector<1x1x8x32xf32> to vector<8x32xf32>
    %1294 = vector.broadcast %1290 : f32 to vector<8x32xf32>
    %1295 = arith.mulf %1294, %1293 : vector<8x32xf32>
    %1296 = arith.addf %1289, %1295 : vector<8x32xf32>
    %c130 = arith.constant 130 : index
    %1297 = memref.load %arg3[%c130] : memref<192xf32, #tpu.memory_space<smem>>
    %c0_679 = arith.constant 0 : index
    %c0_680 = arith.constant 0 : index
    %1298 = arith.index_cast %1240 : i32 to index
    %c2_681 = arith.constant 2 : index
    %1299 = vector.load %arg2[%c0_679, %c0_680, %1298, %c2_681] : memref<1x4x18x34xf32, #tpu.memory_space<vmem>>, vector<1x1x8x32xf32>
    %1300 = vector.shape_cast %1299 : vector<1x1x8x32xf32> to vector<8x32xf32>
    %1301 = vector.broadcast %1297 : f32 to vector<8x32xf32>
    %1302 = arith.mulf %1301, %1300 : vector<8x32xf32>
    %1303 = arith.addf %1296, %1302 : vector<8x32xf32>
    %c134 = arith.constant 134 : index
    %1304 = memref.load %arg3[%c134] : memref<192xf32, #tpu.memory_space<smem>>
    %c0_682 = arith.constant 0 : index
    %c1_683 = arith.constant 1 : index
    %1305 = arith.index_cast %1240 : i32 to index
    %c2_684 = arith.constant 2 : index
    %1306 = vector.load %arg2[%c0_682, %c1_683, %1305, %c2_684] : memref<1x4x18x34xf32, #tpu.memory_space<vmem>>, vector<1x1x8x32xf32>
    %1307 = vector.shape_cast %1306 : vector<1x1x8x32xf32> to vector<8x32xf32>
    %1308 = vector.broadcast %1304 : f32 to vector<8x32xf32>
    %1309 = arith.mulf %1308, %1307 : vector<8x32xf32>
    %1310 = arith.addf %1303, %1309 : vector<8x32xf32>
    %c138 = arith.constant 138 : index
    %1311 = memref.load %arg3[%c138] : memref<192xf32, #tpu.memory_space<smem>>
    %c0_685 = arith.constant 0 : index
    %c2_686 = arith.constant 2 : index
    %1312 = arith.index_cast %1240 : i32 to index
    %c2_687 = arith.constant 2 : index
    %1313 = vector.load %arg2[%c0_685, %c2_686, %1312, %c2_687] : memref<1x4x18x34xf32, #tpu.memory_space<vmem>>, vector<1x1x8x32xf32>
    %1314 = vector.shape_cast %1313 : vector<1x1x8x32xf32> to vector<8x32xf32>
    %1315 = vector.broadcast %1311 : f32 to vector<8x32xf32>
    %1316 = arith.mulf %1315, %1314 : vector<8x32xf32>
    %1317 = arith.addf %1310, %1316 : vector<8x32xf32>
    %c142 = arith.constant 142 : index
    %1318 = memref.load %arg3[%c142] : memref<192xf32, #tpu.memory_space<smem>>
    %c0_688 = arith.constant 0 : index
    %c3_689 = arith.constant 3 : index
    %1319 = arith.index_cast %1240 : i32 to index
    %c2_690 = arith.constant 2 : index
    %1320 = vector.load %arg2[%c0_688, %c3_689, %1319, %c2_690] : memref<1x4x18x34xf32, #tpu.memory_space<vmem>>, vector<1x1x8x32xf32>
    %1321 = vector.shape_cast %1320 : vector<1x1x8x32xf32> to vector<8x32xf32>
    %1322 = vector.broadcast %1318 : f32 to vector<8x32xf32>
    %1323 = arith.mulf %1322, %1321 : vector<8x32xf32>
    %1324 = arith.addf %1317, %1323 : vector<8x32xf32>
    %c1_i32_691 = arith.constant 1 : i32
    %1325 = arith.addi %0, %c1_i32_691 : i32
    %c1_i32_692 = arith.constant 1 : i32
    %1326 = arith.addi %1325, %c1_i32_692 : i32
    %c146 = arith.constant 146 : index
    %1327 = memref.load %arg3[%c146] : memref<192xf32, #tpu.memory_space<smem>>
    %c0_693 = arith.constant 0 : index
    %c0_694 = arith.constant 0 : index
    %1328 = arith.index_cast %1326 : i32 to index
    %c0_695 = arith.constant 0 : index
    %1329 = vector.load %arg2[%c0_693, %c0_694, %1328, %c0_695] : memref<1x4x18x34xf32, #tpu.memory_space<vmem>>, vector<1x1x8x32xf32>
    %1330 = vector.shape_cast %1329 : vector<1x1x8x32xf32> to vector<8x32xf32>
    %1331 = vector.broadcast %1327 : f32 to vector<8x32xf32>
    %1332 = arith.mulf %1331, %1330 : vector<8x32xf32>
    %1333 = arith.addf %1324, %1332 : vector<8x32xf32>
    %c150 = arith.constant 150 : index
    %1334 = memref.load %arg3[%c150] : memref<192xf32, #tpu.memory_space<smem>>
    %c0_696 = arith.constant 0 : index
    %c1_697 = arith.constant 1 : index
    %1335 = arith.index_cast %1326 : i32 to index
    %c0_698 = arith.constant 0 : index
    %1336 = vector.load %arg2[%c0_696, %c1_697, %1335, %c0_698] : memref<1x4x18x34xf32, #tpu.memory_space<vmem>>, vector<1x1x8x32xf32>
    %1337 = vector.shape_cast %1336 : vector<1x1x8x32xf32> to vector<8x32xf32>
    %1338 = vector.broadcast %1334 : f32 to vector<8x32xf32>
    %1339 = arith.mulf %1338, %1337 : vector<8x32xf32>
    %1340 = arith.addf %1333, %1339 : vector<8x32xf32>
    %c154 = arith.constant 154 : index
    %1341 = memref.load %arg3[%c154] : memref<192xf32, #tpu.memory_space<smem>>
    %c0_699 = arith.constant 0 : index
    %c2_700 = arith.constant 2 : index
    %1342 = arith.index_cast %1326 : i32 to index
    %c0_701 = arith.constant 0 : index
    %1343 = vector.load %arg2[%c0_699, %c2_700, %1342, %c0_701] : memref<1x4x18x34xf32, #tpu.memory_space<vmem>>, vector<1x1x8x32xf32>
    %1344 = vector.shape_cast %1343 : vector<1x1x8x32xf32> to vector<8x32xf32>
    %1345 = vector.broadcast %1341 : f32 to vector<8x32xf32>
    %1346 = arith.mulf %1345, %1344 : vector<8x32xf32>
    %1347 = arith.addf %1340, %1346 : vector<8x32xf32>
    %c158 = arith.constant 158 : index
    %1348 = memref.load %arg3[%c158] : memref<192xf32, #tpu.memory_space<smem>>
    %c0_702 = arith.constant 0 : index
    %c3_703 = arith.constant 3 : index
    %1349 = arith.index_cast %1326 : i32 to index
    %c0_704 = arith.constant 0 : index
    %1350 = vector.load %arg2[%c0_702, %c3_703, %1349, %c0_704] : memref<1x4x18x34xf32, #tpu.memory_space<vmem>>, vector<1x1x8x32xf32>
    %1351 = vector.shape_cast %1350 : vector<1x1x8x32xf32> to vector<8x32xf32>
    %1352 = vector.broadcast %1348 : f32 to vector<8x32xf32>
    %1353 = arith.mulf %1352, %1351 : vector<8x32xf32>
    %1354 = arith.addf %1347, %1353 : vector<8x32xf32>
    %c162 = arith.constant 162 : index
    %1355 = memref.load %arg3[%c162] : memref<192xf32, #tpu.memory_space<smem>>
    %c0_705 = arith.constant 0 : index
    %c0_706 = arith.constant 0 : index
    %1356 = arith.index_cast %1326 : i32 to index
    %c1_707 = arith.constant 1 : index
    %1357 = vector.load %arg2[%c0_705, %c0_706, %1356, %c1_707] : memref<1x4x18x34xf32, #tpu.memory_space<vmem>>, vector<1x1x8x32xf32>
    %1358 = vector.shape_cast %1357 : vector<1x1x8x32xf32> to vector<8x32xf32>
    %1359 = vector.broadcast %1355 : f32 to vector<8x32xf32>
    %1360 = arith.mulf %1359, %1358 : vector<8x32xf32>
    %1361 = arith.addf %1354, %1360 : vector<8x32xf32>
    %c166 = arith.constant 166 : index
    %1362 = memref.load %arg3[%c166] : memref<192xf32, #tpu.memory_space<smem>>
    %c0_708 = arith.constant 0 : index
    %c1_709 = arith.constant 1 : index
    %1363 = arith.index_cast %1326 : i32 to index
    %c1_710 = arith.constant 1 : index
    %1364 = vector.load %arg2[%c0_708, %c1_709, %1363, %c1_710] : memref<1x4x18x34xf32, #tpu.memory_space<vmem>>, vector<1x1x8x32xf32>
    %1365 = vector.shape_cast %1364 : vector<1x1x8x32xf32> to vector<8x32xf32>
    %1366 = vector.broadcast %1362 : f32 to vector<8x32xf32>
    %1367 = arith.mulf %1366, %1365 : vector<8x32xf32>
    %1368 = arith.addf %1361, %1367 : vector<8x32xf32>
    %c170 = arith.constant 170 : index
    %1369 = memref.load %arg3[%c170] : memref<192xf32, #tpu.memory_space<smem>>
    %c0_711 = arith.constant 0 : index
    %c2_712 = arith.constant 2 : index
    %1370 = arith.index_cast %1326 : i32 to index
    %c1_713 = arith.constant 1 : index
    %1371 = vector.load %arg2[%c0_711, %c2_712, %1370, %c1_713] : memref<1x4x18x34xf32, #tpu.memory_space<vmem>>, vector<1x1x8x32xf32>
    %1372 = vector.shape_cast %1371 : vector<1x1x8x32xf32> to vector<8x32xf32>
    %1373 = vector.broadcast %1369 : f32 to vector<8x32xf32>
    %1374 = arith.mulf %1373, %1372 : vector<8x32xf32>
    %1375 = arith.addf %1368, %1374 : vector<8x32xf32>
    %c174 = arith.constant 174 : index
    %1376 = memref.load %arg3[%c174] : memref<192xf32, #tpu.memory_space<smem>>
    %c0_714 = arith.constant 0 : index
    %c3_715 = arith.constant 3 : index
    %1377 = arith.index_cast %1326 : i32 to index
    %c1_716 = arith.constant 1 : index
    %1378 = vector.load %arg2[%c0_714, %c3_715, %1377, %c1_716] : memref<1x4x18x34xf32, #tpu.memory_space<vmem>>, vector<1x1x8x32xf32>
    %1379 = vector.shape_cast %1378 : vector<1x1x8x32xf32> to vector<8x32xf32>
    %1380 = vector.broadcast %1376 : f32 to vector<8x32xf32>
    %1381 = arith.mulf %1380, %1379 : vector<8x32xf32>
    %1382 = arith.addf %1375, %1381 : vector<8x32xf32>
    %c178 = arith.constant 178 : index
    %1383 = memref.load %arg3[%c178] : memref<192xf32, #tpu.memory_space<smem>>
    %c0_717 = arith.constant 0 : index
    %c0_718 = arith.constant 0 : index
    %1384 = arith.index_cast %1326 : i32 to index
    %c2_719 = arith.constant 2 : index
    %1385 = vector.load %arg2[%c0_717, %c0_718, %1384, %c2_719] : memref<1x4x18x34xf32, #tpu.memory_space<vmem>>, vector<1x1x8x32xf32>
    %1386 = vector.shape_cast %1385 : vector<1x1x8x32xf32> to vector<8x32xf32>
    %1387 = vector.broadcast %1383 : f32 to vector<8x32xf32>
    %1388 = arith.mulf %1387, %1386 : vector<8x32xf32>
    %1389 = arith.addf %1382, %1388 : vector<8x32xf32>
    %c182 = arith.constant 182 : index
    %1390 = memref.load %arg3[%c182] : memref<192xf32, #tpu.memory_space<smem>>
    %c0_720 = arith.constant 0 : index
    %c1_721 = arith.constant 1 : index
    %1391 = arith.index_cast %1326 : i32 to index
    %c2_722 = arith.constant 2 : index
    %1392 = vector.load %arg2[%c0_720, %c1_721, %1391, %c2_722] : memref<1x4x18x34xf32, #tpu.memory_space<vmem>>, vector<1x1x8x32xf32>
    %1393 = vector.shape_cast %1392 : vector<1x1x8x32xf32> to vector<8x32xf32>
    %1394 = vector.broadcast %1390 : f32 to vector<8x32xf32>
    %1395 = arith.mulf %1394, %1393 : vector<8x32xf32>
    %1396 = arith.addf %1389, %1395 : vector<8x32xf32>
    %c186 = arith.constant 186 : index
    %1397 = memref.load %arg3[%c186] : memref<192xf32, #tpu.memory_space<smem>>
    %c0_723 = arith.constant 0 : index
    %c2_724 = arith.constant 2 : index
    %1398 = arith.index_cast %1326 : i32 to index
    %c2_725 = arith.constant 2 : index
    %1399 = vector.load %arg2[%c0_723, %c2_724, %1398, %c2_725] : memref<1x4x18x34xf32, #tpu.memory_space<vmem>>, vector<1x1x8x32xf32>
    %1400 = vector.shape_cast %1399 : vector<1x1x8x32xf32> to vector<8x32xf32>
    %1401 = vector.broadcast %1397 : f32 to vector<8x32xf32>
    %1402 = arith.mulf %1401, %1400 : vector<8x32xf32>
    %1403 = arith.addf %1396, %1402 : vector<8x32xf32>
    %c190 = arith.constant 190 : index
    %1404 = memref.load %arg3[%c190] : memref<192xf32, #tpu.memory_space<smem>>
    %c0_726 = arith.constant 0 : index
    %c3_727 = arith.constant 3 : index
    %1405 = arith.index_cast %1326 : i32 to index
    %c2_728 = arith.constant 2 : index
    %1406 = vector.load %arg2[%c0_726, %c3_727, %1405, %c2_728] : memref<1x4x18x34xf32, #tpu.memory_space<vmem>>, vector<1x1x8x32xf32>
    %1407 = vector.shape_cast %1406 : vector<1x1x8x32xf32> to vector<8x32xf32>
    %1408 = vector.broadcast %1404 : f32 to vector<8x32xf32>
    %1409 = arith.mulf %1408, %1407 : vector<8x32xf32>
    %1410 = arith.addf %1403, %1409 : vector<8x32xf32>
    %1411 = vector.extract_strided_slice %1410 {offsets = [0, 0], sizes = [1, 32], strides = [1, 1]} : vector<8x32xf32> to vector<1x32xf32>
    %c0_729 = arith.constant 0 : index
    %c2_730 = arith.constant 2 : index
    %c1_731 = arith.constant 1 : index
    %c0_732 = arith.constant 0 : index
    %1412 = vector.load %arg5[%c0_729, %c2_730, %c1_731, %c0_732] : memref<1x4x16x32xf32, #tpu.memory_space<vmem>>, vector<1x1x1x32xf32>
    %1413 = vector.shape_cast %1412 : vector<1x1x1x32xf32> to vector<1x32xf32>
    %1414 = vector.shape_cast %1411 : vector<1x32xf32> to vector<1x1x1x32xf32>
    tpu.vector_store %arg5[%c0_729, %c2_730, %c1_731, %c0_732], %1414 {strides = array<i32>} : memref<1x4x16x32xf32, #tpu.memory_space<vmem>>, vector<1x1x1x32xf32>,
    %1415 = vector.extract_strided_slice %1410 {offsets = [1, 0], sizes = [1, 32], strides = [1, 1]} : vector<8x32xf32> to vector<1x32xf32>
    %c0_733 = arith.constant 0 : index
    %c2_734 = arith.constant 2 : index
    %c3_735 = arith.constant 3 : index
    %c0_736 = arith.constant 0 : index
    %1416 = vector.load %arg5[%c0_733, %c2_734, %c3_735, %c0_736] : memref<1x4x16x32xf32, #tpu.memory_space<vmem>>, vector<1x1x1x32xf32>
    %1417 = vector.shape_cast %1416 : vector<1x1x1x32xf32> to vector<1x32xf32>
    %1418 = vector.shape_cast %1415 : vector<1x32xf32> to vector<1x1x1x32xf32>
    tpu.vector_store %arg5[%c0_733, %c2_734, %c3_735, %c0_736], %1418 {strides = array<i32>} : memref<1x4x16x32xf32, #tpu.memory_space<vmem>>, vector<1x1x1x32xf32>,
    %1419 = vector.extract_strided_slice %1410 {offsets = [2, 0], sizes = [1, 32], strides = [1, 1]} : vector<8x32xf32> to vector<1x32xf32>
    %c0_737 = arith.constant 0 : index
    %c2_738 = arith.constant 2 : index
    %c5_739 = arith.constant 5 : index
    %c0_740 = arith.constant 0 : index
    %1420 = vector.load %arg5[%c0_737, %c2_738, %c5_739, %c0_740] : memref<1x4x16x32xf32, #tpu.memory_space<vmem>>, vector<1x1x1x32xf32>
    %1421 = vector.shape_cast %1420 : vector<1x1x1x32xf32> to vector<1x32xf32>
    %1422 = vector.shape_cast %1419 : vector<1x32xf32> to vector<1x1x1x32xf32>
    tpu.vector_store %arg5[%c0_737, %c2_738, %c5_739, %c0_740], %1422 {strides = array<i32>} : memref<1x4x16x32xf32, #tpu.memory_space<vmem>>, vector<1x1x1x32xf32>,
    %1423 = vector.extract_strided_slice %1410 {offsets = [3, 0], sizes = [1, 32], strides = [1, 1]} : vector<8x32xf32> to vector<1x32xf32>
    %c0_741 = arith.constant 0 : index
    %c2_742 = arith.constant 2 : index
    %c7_743 = arith.constant 7 : index
    %c0_744 = arith.constant 0 : index
    %1424 = vector.load %arg5[%c0_741, %c2_742, %c7_743, %c0_744] : memref<1x4x16x32xf32, #tpu.memory_space<vmem>>, vector<1x1x1x32xf32>
    %1425 = vector.shape_cast %1424 : vector<1x1x1x32xf32> to vector<1x32xf32>
    %1426 = vector.shape_cast %1423 : vector<1x32xf32> to vector<1x1x1x32xf32>
    tpu.vector_store %arg5[%c0_741, %c2_742, %c7_743, %c0_744], %1426 {strides = array<i32>} : memref<1x4x16x32xf32, #tpu.memory_space<vmem>>, vector<1x1x1x32xf32>,
    %1427 = vector.extract_strided_slice %1410 {offsets = [4, 0], sizes = [1, 32], strides = [1, 1]} : vector<8x32xf32> to vector<1x32xf32>
    %c0_745 = arith.constant 0 : index
    %c2_746 = arith.constant 2 : index
    %c9_747 = arith.constant 9 : index
    %c0_748 = arith.constant 0 : index
    %1428 = vector.load %arg5[%c0_745, %c2_746, %c9_747, %c0_748] : memref<1x4x16x32xf32, #tpu.memory_space<vmem>>, vector<1x1x1x32xf32>
    %1429 = vector.shape_cast %1428 : vector<1x1x1x32xf32> to vector<1x32xf32>
    %1430 = vector.shape_cast %1427 : vector<1x32xf32> to vector<1x1x1x32xf32>
    tpu.vector_store %arg5[%c0_745, %c2_746, %c9_747, %c0_748], %1430 {strides = array<i32>} : memref<1x4x16x32xf32, #tpu.memory_space<vmem>>, vector<1x1x1x32xf32>,
    %1431 = vector.extract_strided_slice %1410 {offsets = [5, 0], sizes = [1, 32], strides = [1, 1]} : vector<8x32xf32> to vector<1x32xf32>
    %c0_749 = arith.constant 0 : index
    %c2_750 = arith.constant 2 : index
    %c11_751 = arith.constant 11 : index
    %c0_752 = arith.constant 0 : index
    %1432 = vector.load %arg5[%c0_749, %c2_750, %c11_751, %c0_752] : memref<1x4x16x32xf32, #tpu.memory_space<vmem>>, vector<1x1x1x32xf32>
    %1433 = vector.shape_cast %1432 : vector<1x1x1x32xf32> to vector<1x32xf32>
    %1434 = vector.shape_cast %1431 : vector<1x32xf32> to vector<1x1x1x32xf32>
    tpu.vector_store %arg5[%c0_749, %c2_750, %c11_751, %c0_752], %1434 {strides = array<i32>} : memref<1x4x16x32xf32, #tpu.memory_space<vmem>>, vector<1x1x1x32xf32>,
    %1435 = vector.extract_strided_slice %1410 {offsets = [6, 0], sizes = [1, 32], strides = [1, 1]} : vector<8x32xf32> to vector<1x32xf32>
    %c0_753 = arith.constant 0 : index
    %c2_754 = arith.constant 2 : index
    %c13_755 = arith.constant 13 : index
    %c0_756 = arith.constant 0 : index
    %1436 = vector.load %arg5[%c0_753, %c2_754, %c13_755, %c0_756] : memref<1x4x16x32xf32, #tpu.memory_space<vmem>>, vector<1x1x1x32xf32>
    %1437 = vector.shape_cast %1436 : vector<1x1x1x32xf32> to vector<1x32xf32>
    %1438 = vector.shape_cast %1435 : vector<1x32xf32> to vector<1x1x1x32xf32>
    tpu.vector_store %arg5[%c0_753, %c2_754, %c13_755, %c0_756], %1438 {strides = array<i32>} : memref<1x4x16x32xf32, #tpu.memory_space<vmem>>, vector<1x1x1x32xf32>,
    %1439 = vector.extract_strided_slice %1410 {offsets = [7, 0], sizes = [1, 32], strides = [1, 1]} : vector<8x32xf32> to vector<1x32xf32>
    %c0_757 = arith.constant 0 : index
    %c2_758 = arith.constant 2 : index
    %c15_759 = arith.constant 15 : index
    %c0_760 = arith.constant 0 : index
    %1440 = vector.load %arg5[%c0_757, %c2_758, %c15_759, %c0_760] : memref<1x4x16x32xf32, #tpu.memory_space<vmem>>, vector<1x1x1x32xf32>
    %1441 = vector.shape_cast %1440 : vector<1x1x1x32xf32> to vector<1x32xf32>
    %1442 = vector.shape_cast %1439 : vector<1x32xf32> to vector<1x1x1x32xf32>
    tpu.vector_store %arg5[%c0_757, %c2_758, %c15_759, %c0_760], %1442 {strides = array<i32>} : memref<1x4x16x32xf32, #tpu.memory_space<vmem>>, vector<1x1x1x32xf32>,
    %c3_761 = arith.constant 3 : index
    %1443 = memref.load %arg4[%c3_761] : memref<4xf32, #tpu.memory_space<smem>>
    %1444 = vector.broadcast %1443 : f32 to vector<8x32xf32>
    %c1_i32_762 = arith.constant 1 : i32
    %1445 = arith.addi %0, %c1_i32_762 : i32
    %c0_i32_763 = arith.constant 0 : i32
    %1446 = arith.addi %1445, %c0_i32_763 : i32
    %c99 = arith.constant 99 : index
    %1447 = memref.load %arg3[%c99] : memref<192xf32, #tpu.memory_space<smem>>
    %c0_764 = arith.constant 0 : index
    %c0_765 = arith.constant 0 : index
    %1448 = arith.index_cast %1446 : i32 to index
    %c0_766 = arith.constant 0 : index
    %1449 = vector.load %arg2[%c0_764, %c0_765, %1448, %c0_766] : memref<1x4x18x34xf32, #tpu.memory_space<vmem>>, vector<1x1x8x32xf32>
    %1450 = vector.shape_cast %1449 : vector<1x1x8x32xf32> to vector<8x32xf32>
    %1451 = vector.broadcast %1447 : f32 to vector<8x32xf32>
    %1452 = arith.mulf %1451, %1450 : vector<8x32xf32>
    %1453 = arith.addf %1444, %1452 : vector<8x32xf32>
    %c103 = arith.constant 103 : index
    %1454 = memref.load %arg3[%c103] : memref<192xf32, #tpu.memory_space<smem>>
    %c0_767 = arith.constant 0 : index
    %c1_768 = arith.constant 1 : index
    %1455 = arith.index_cast %1446 : i32 to index
    %c0_769 = arith.constant 0 : index
    %1456 = vector.load %arg2[%c0_767, %c1_768, %1455, %c0_769] : memref<1x4x18x34xf32, #tpu.memory_space<vmem>>, vector<1x1x8x32xf32>
    %1457 = vector.shape_cast %1456 : vector<1x1x8x32xf32> to vector<8x32xf32>
    %1458 = vector.broadcast %1454 : f32 to vector<8x32xf32>
    %1459 = arith.mulf %1458, %1457 : vector<8x32xf32>
    %1460 = arith.addf %1453, %1459 : vector<8x32xf32>
    %c107 = arith.constant 107 : index
    %1461 = memref.load %arg3[%c107] : memref<192xf32, #tpu.memory_space<smem>>
    %c0_770 = arith.constant 0 : index
    %c2_771 = arith.constant 2 : index
    %1462 = arith.index_cast %1446 : i32 to index
    %c0_772 = arith.constant 0 : index
    %1463 = vector.load %arg2[%c0_770, %c2_771, %1462, %c0_772] : memref<1x4x18x34xf32, #tpu.memory_space<vmem>>, vector<1x1x8x32xf32>
    %1464 = vector.shape_cast %1463 : vector<1x1x8x32xf32> to vector<8x32xf32>
    %1465 = vector.broadcast %1461 : f32 to vector<8x32xf32>
    %1466 = arith.mulf %1465, %1464 : vector<8x32xf32>
    %1467 = arith.addf %1460, %1466 : vector<8x32xf32>
    %c111 = arith.constant 111 : index
    %1468 = memref.load %arg3[%c111] : memref<192xf32, #tpu.memory_space<smem>>
    %c0_773 = arith.constant 0 : index
    %c3_774 = arith.constant 3 : index
    %1469 = arith.index_cast %1446 : i32 to index
    %c0_775 = arith.constant 0 : index
    %1470 = vector.load %arg2[%c0_773, %c3_774, %1469, %c0_775] : memref<1x4x18x34xf32, #tpu.memory_space<vmem>>, vector<1x1x8x32xf32>
    %1471 = vector.shape_cast %1470 : vector<1x1x8x32xf32> to vector<8x32xf32>
    %1472 = vector.broadcast %1468 : f32 to vector<8x32xf32>
    %1473 = arith.mulf %1472, %1471 : vector<8x32xf32>
    %1474 = arith.addf %1467, %1473 : vector<8x32xf32>
    %c115 = arith.constant 115 : index
    %1475 = memref.load %arg3[%c115] : memref<192xf32, #tpu.memory_space<smem>>
    %c0_776 = arith.constant 0 : index
    %c0_777 = arith.constant 0 : index
    %1476 = arith.index_cast %1446 : i32 to index
    %c1_778 = arith.constant 1 : index
    %1477 = vector.load %arg2[%c0_776, %c0_777, %1476, %c1_778] : memref<1x4x18x34xf32, #tpu.memory_space<vmem>>, vector<1x1x8x32xf32>
    %1478 = vector.shape_cast %1477 : vector<1x1x8x32xf32> to vector<8x32xf32>
    %1479 = vector.broadcast %1475 : f32 to vector<8x32xf32>
    %1480 = arith.mulf %1479, %1478 : vector<8x32xf32>
    %1481 = arith.addf %1474, %1480 : vector<8x32xf32>
    %c119 = arith.constant 119 : index
    %1482 = memref.load %arg3[%c119] : memref<192xf32, #tpu.memory_space<smem>>
    %c0_779 = arith.constant 0 : index
    %c1_780 = arith.constant 1 : index
    %1483 = arith.index_cast %1446 : i32 to index
    %c1_781 = arith.constant 1 : index
    %1484 = vector.load %arg2[%c0_779, %c1_780, %1483, %c1_781] : memref<1x4x18x34xf32, #tpu.memory_space<vmem>>, vector<1x1x8x32xf32>
    %1485 = vector.shape_cast %1484 : vector<1x1x8x32xf32> to vector<8x32xf32>
    %1486 = vector.broadcast %1482 : f32 to vector<8x32xf32>
    %1487 = arith.mulf %1486, %1485 : vector<8x32xf32>
    %1488 = arith.addf %1481, %1487 : vector<8x32xf32>
    %c123 = arith.constant 123 : index
    %1489 = memref.load %arg3[%c123] : memref<192xf32, #tpu.memory_space<smem>>
    %c0_782 = arith.constant 0 : index
    %c2_783 = arith.constant 2 : index
    %1490 = arith.index_cast %1446 : i32 to index
    %c1_784 = arith.constant 1 : index
    %1491 = vector.load %arg2[%c0_782, %c2_783, %1490, %c1_784] : memref<1x4x18x34xf32, #tpu.memory_space<vmem>>, vector<1x1x8x32xf32>
    %1492 = vector.shape_cast %1491 : vector<1x1x8x32xf32> to vector<8x32xf32>
    %1493 = vector.broadcast %1489 : f32 to vector<8x32xf32>
    %1494 = arith.mulf %1493, %1492 : vector<8x32xf32>
    %1495 = arith.addf %1488, %1494 : vector<8x32xf32>
    %c127 = arith.constant 127 : index
    %1496 = memref.load %arg3[%c127] : memref<192xf32, #tpu.memory_space<smem>>
    %c0_785 = arith.constant 0 : index
    %c3_786 = arith.constant 3 : index
    %1497 = arith.index_cast %1446 : i32 to index
    %c1_787 = arith.constant 1 : index
    %1498 = vector.load %arg2[%c0_785, %c3_786, %1497, %c1_787] : memref<1x4x18x34xf32, #tpu.memory_space<vmem>>, vector<1x1x8x32xf32>
    %1499 = vector.shape_cast %1498 : vector<1x1x8x32xf32> to vector<8x32xf32>
    %1500 = vector.broadcast %1496 : f32 to vector<8x32xf32>
    %1501 = arith.mulf %1500, %1499 : vector<8x32xf32>
    %1502 = arith.addf %1495, %1501 : vector<8x32xf32>
    %c131 = arith.constant 131 : index
    %1503 = memref.load %arg3[%c131] : memref<192xf32, #tpu.memory_space<smem>>
    %c0_788 = arith.constant 0 : index
    %c0_789 = arith.constant 0 : index
    %1504 = arith.index_cast %1446 : i32 to index
    %c2_790 = arith.constant 2 : index
    %1505 = vector.load %arg2[%c0_788, %c0_789, %1504, %c2_790] : memref<1x4x18x34xf32, #tpu.memory_space<vmem>>, vector<1x1x8x32xf32>
    %1506 = vector.shape_cast %1505 : vector<1x1x8x32xf32> to vector<8x32xf32>
    %1507 = vector.broadcast %1503 : f32 to vector<8x32xf32>
    %1508 = arith.mulf %1507, %1506 : vector<8x32xf32>
    %1509 = arith.addf %1502, %1508 : vector<8x32xf32>
    %c135 = arith.constant 135 : index
    %1510 = memref.load %arg3[%c135] : memref<192xf32, #tpu.memory_space<smem>>
    %c0_791 = arith.constant 0 : index
    %c1_792 = arith.constant 1 : index
    %1511 = arith.index_cast %1446 : i32 to index
    %c2_793 = arith.constant 2 : index
    %1512 = vector.load %arg2[%c0_791, %c1_792, %1511, %c2_793] : memref<1x4x18x34xf32, #tpu.memory_space<vmem>>, vector<1x1x8x32xf32>
    %1513 = vector.shape_cast %1512 : vector<1x1x8x32xf32> to vector<8x32xf32>
    %1514 = vector.broadcast %1510 : f32 to vector<8x32xf32>
    %1515 = arith.mulf %1514, %1513 : vector<8x32xf32>
    %1516 = arith.addf %1509, %1515 : vector<8x32xf32>
    %c139 = arith.constant 139 : index
    %1517 = memref.load %arg3[%c139] : memref<192xf32, #tpu.memory_space<smem>>
    %c0_794 = arith.constant 0 : index
    %c2_795 = arith.constant 2 : index
    %1518 = arith.index_cast %1446 : i32 to index
    %c2_796 = arith.constant 2 : index
    %1519 = vector.load %arg2[%c0_794, %c2_795, %1518, %c2_796] : memref<1x4x18x34xf32, #tpu.memory_space<vmem>>, vector<1x1x8x32xf32>
    %1520 = vector.shape_cast %1519 : vector<1x1x8x32xf32> to vector<8x32xf32>
    %1521 = vector.broadcast %1517 : f32 to vector<8x32xf32>
    %1522 = arith.mulf %1521, %1520 : vector<8x32xf32>
    %1523 = arith.addf %1516, %1522 : vector<8x32xf32>
    %c143 = arith.constant 143 : index
    %1524 = memref.load %arg3[%c143] : memref<192xf32, #tpu.memory_space<smem>>
    %c0_797 = arith.constant 0 : index
    %c3_798 = arith.constant 3 : index
    %1525 = arith.index_cast %1446 : i32 to index
    %c2_799 = arith.constant 2 : index
    %1526 = vector.load %arg2[%c0_797, %c3_798, %1525, %c2_799] : memref<1x4x18x34xf32, #tpu.memory_space<vmem>>, vector<1x1x8x32xf32>
    %1527 = vector.shape_cast %1526 : vector<1x1x8x32xf32> to vector<8x32xf32>
    %1528 = vector.broadcast %1524 : f32 to vector<8x32xf32>
    %1529 = arith.mulf %1528, %1527 : vector<8x32xf32>
    %1530 = arith.addf %1523, %1529 : vector<8x32xf32>
    %c1_i32_800 = arith.constant 1 : i32
    %1531 = arith.addi %0, %c1_i32_800 : i32
    %c1_i32_801 = arith.constant 1 : i32
    %1532 = arith.addi %1531, %c1_i32_801 : i32
    %c147 = arith.constant 147 : index
    %1533 = memref.load %arg3[%c147] : memref<192xf32, #tpu.memory_space<smem>>
    %c0_802 = arith.constant 0 : index
    %c0_803 = arith.constant 0 : index
    %1534 = arith.index_cast %1532 : i32 to index
    %c0_804 = arith.constant 0 : index
    %1535 = vector.load %arg2[%c0_802, %c0_803, %1534, %c0_804] : memref<1x4x18x34xf32, #tpu.memory_space<vmem>>, vector<1x1x8x32xf32>
    %1536 = vector.shape_cast %1535 : vector<1x1x8x32xf32> to vector<8x32xf32>
    %1537 = vector.broadcast %1533 : f32 to vector<8x32xf32>
    %1538 = arith.mulf %1537, %1536 : vector<8x32xf32>
    %1539 = arith.addf %1530, %1538 : vector<8x32xf32>
    %c151 = arith.constant 151 : index
    %1540 = memref.load %arg3[%c151] : memref<192xf32, #tpu.memory_space<smem>>
    %c0_805 = arith.constant 0 : index
    %c1_806 = arith.constant 1 : index
    %1541 = arith.index_cast %1532 : i32 to index
    %c0_807 = arith.constant 0 : index
    %1542 = vector.load %arg2[%c0_805, %c1_806, %1541, %c0_807] : memref<1x4x18x34xf32, #tpu.memory_space<vmem>>, vector<1x1x8x32xf32>
    %1543 = vector.shape_cast %1542 : vector<1x1x8x32xf32> to vector<8x32xf32>
    %1544 = vector.broadcast %1540 : f32 to vector<8x32xf32>
    %1545 = arith.mulf %1544, %1543 : vector<8x32xf32>
    %1546 = arith.addf %1539, %1545 : vector<8x32xf32>
    %c155 = arith.constant 155 : index
    %1547 = memref.load %arg3[%c155] : memref<192xf32, #tpu.memory_space<smem>>
    %c0_808 = arith.constant 0 : index
    %c2_809 = arith.constant 2 : index
    %1548 = arith.index_cast %1532 : i32 to index
    %c0_810 = arith.constant 0 : index
    %1549 = vector.load %arg2[%c0_808, %c2_809, %1548, %c0_810] : memref<1x4x18x34xf32, #tpu.memory_space<vmem>>, vector<1x1x8x32xf32>
    %1550 = vector.shape_cast %1549 : vector<1x1x8x32xf32> to vector<8x32xf32>
    %1551 = vector.broadcast %1547 : f32 to vector<8x32xf32>
    %1552 = arith.mulf %1551, %1550 : vector<8x32xf32>
    %1553 = arith.addf %1546, %1552 : vector<8x32xf32>
    %c159 = arith.constant 159 : index
    %1554 = memref.load %arg3[%c159] : memref<192xf32, #tpu.memory_space<smem>>
    %c0_811 = arith.constant 0 : index
    %c3_812 = arith.constant 3 : index
    %1555 = arith.index_cast %1532 : i32 to index
    %c0_813 = arith.constant 0 : index
    %1556 = vector.load %arg2[%c0_811, %c3_812, %1555, %c0_813] : memref<1x4x18x34xf32, #tpu.memory_space<vmem>>, vector<1x1x8x32xf32>
    %1557 = vector.shape_cast %1556 : vector<1x1x8x32xf32> to vector<8x32xf32>
    %1558 = vector.broadcast %1554 : f32 to vector<8x32xf32>
    %1559 = arith.mulf %1558, %1557 : vector<8x32xf32>
    %1560 = arith.addf %1553, %1559 : vector<8x32xf32>
    %c163 = arith.constant 163 : index
    %1561 = memref.load %arg3[%c163] : memref<192xf32, #tpu.memory_space<smem>>
    %c0_814 = arith.constant 0 : index
    %c0_815 = arith.constant 0 : index
    %1562 = arith.index_cast %1532 : i32 to index
    %c1_816 = arith.constant 1 : index
    %1563 = vector.load %arg2[%c0_814, %c0_815, %1562, %c1_816] : memref<1x4x18x34xf32, #tpu.memory_space<vmem>>, vector<1x1x8x32xf32>
    %1564 = vector.shape_cast %1563 : vector<1x1x8x32xf32> to vector<8x32xf32>
    %1565 = vector.broadcast %1561 : f32 to vector<8x32xf32>
    %1566 = arith.mulf %1565, %1564 : vector<8x32xf32>
    %1567 = arith.addf %1560, %1566 : vector<8x32xf32>
    %c167 = arith.constant 167 : index
    %1568 = memref.load %arg3[%c167] : memref<192xf32, #tpu.memory_space<smem>>
    %c0_817 = arith.constant 0 : index
    %c1_818 = arith.constant 1 : index
    %1569 = arith.index_cast %1532 : i32 to index
    %c1_819 = arith.constant 1 : index
    %1570 = vector.load %arg2[%c0_817, %c1_818, %1569, %c1_819] : memref<1x4x18x34xf32, #tpu.memory_space<vmem>>, vector<1x1x8x32xf32>
    %1571 = vector.shape_cast %1570 : vector<1x1x8x32xf32> to vector<8x32xf32>
    %1572 = vector.broadcast %1568 : f32 to vector<8x32xf32>
    %1573 = arith.mulf %1572, %1571 : vector<8x32xf32>
    %1574 = arith.addf %1567, %1573 : vector<8x32xf32>
    %c171 = arith.constant 171 : index
    %1575 = memref.load %arg3[%c171] : memref<192xf32, #tpu.memory_space<smem>>
    %c0_820 = arith.constant 0 : index
    %c2_821 = arith.constant 2 : index
    %1576 = arith.index_cast %1532 : i32 to index
    %c1_822 = arith.constant 1 : index
    %1577 = vector.load %arg2[%c0_820, %c2_821, %1576, %c1_822] : memref<1x4x18x34xf32, #tpu.memory_space<vmem>>, vector<1x1x8x32xf32>
    %1578 = vector.shape_cast %1577 : vector<1x1x8x32xf32> to vector<8x32xf32>
    %1579 = vector.broadcast %1575 : f32 to vector<8x32xf32>
    %1580 = arith.mulf %1579, %1578 : vector<8x32xf32>
    %1581 = arith.addf %1574, %1580 : vector<8x32xf32>
    %c175 = arith.constant 175 : index
    %1582 = memref.load %arg3[%c175] : memref<192xf32, #tpu.memory_space<smem>>
    %c0_823 = arith.constant 0 : index
    %c3_824 = arith.constant 3 : index
    %1583 = arith.index_cast %1532 : i32 to index
    %c1_825 = arith.constant 1 : index
    %1584 = vector.load %arg2[%c0_823, %c3_824, %1583, %c1_825] : memref<1x4x18x34xf32, #tpu.memory_space<vmem>>, vector<1x1x8x32xf32>
    %1585 = vector.shape_cast %1584 : vector<1x1x8x32xf32> to vector<8x32xf32>
    %1586 = vector.broadcast %1582 : f32 to vector<8x32xf32>
    %1587 = arith.mulf %1586, %1585 : vector<8x32xf32>
    %1588 = arith.addf %1581, %1587 : vector<8x32xf32>
    %c179 = arith.constant 179 : index
    %1589 = memref.load %arg3[%c179] : memref<192xf32, #tpu.memory_space<smem>>
    %c0_826 = arith.constant 0 : index
    %c0_827 = arith.constant 0 : index
    %1590 = arith.index_cast %1532 : i32 to index
    %c2_828 = arith.constant 2 : index
    %1591 = vector.load %arg2[%c0_826, %c0_827, %1590, %c2_828] : memref<1x4x18x34xf32, #tpu.memory_space<vmem>>, vector<1x1x8x32xf32>
    %1592 = vector.shape_cast %1591 : vector<1x1x8x32xf32> to vector<8x32xf32>
    %1593 = vector.broadcast %1589 : f32 to vector<8x32xf32>
    %1594 = arith.mulf %1593, %1592 : vector<8x32xf32>
    %1595 = arith.addf %1588, %1594 : vector<8x32xf32>
    %c183 = arith.constant 183 : index
    %1596 = memref.load %arg3[%c183] : memref<192xf32, #tpu.memory_space<smem>>
    %c0_829 = arith.constant 0 : index
    %c1_830 = arith.constant 1 : index
    %1597 = arith.index_cast %1532 : i32 to index
    %c2_831 = arith.constant 2 : index
    %1598 = vector.load %arg2[%c0_829, %c1_830, %1597, %c2_831] : memref<1x4x18x34xf32, #tpu.memory_space<vmem>>, vector<1x1x8x32xf32>
    %1599 = vector.shape_cast %1598 : vector<1x1x8x32xf32> to vector<8x32xf32>
    %1600 = vector.broadcast %1596 : f32 to vector<8x32xf32>
    %1601 = arith.mulf %1600, %1599 : vector<8x32xf32>
    %1602 = arith.addf %1595, %1601 : vector<8x32xf32>
    %c187 = arith.constant 187 : index
    %1603 = memref.load %arg3[%c187] : memref<192xf32, #tpu.memory_space<smem>>
    %c0_832 = arith.constant 0 : index
    %c2_833 = arith.constant 2 : index
    %1604 = arith.index_cast %1532 : i32 to index
    %c2_834 = arith.constant 2 : index
    %1605 = vector.load %arg2[%c0_832, %c2_833, %1604, %c2_834] : memref<1x4x18x34xf32, #tpu.memory_space<vmem>>, vector<1x1x8x32xf32>
    %1606 = vector.shape_cast %1605 : vector<1x1x8x32xf32> to vector<8x32xf32>
    %1607 = vector.broadcast %1603 : f32 to vector<8x32xf32>
    %1608 = arith.mulf %1607, %1606 : vector<8x32xf32>
    %1609 = arith.addf %1602, %1608 : vector<8x32xf32>
    %c191 = arith.constant 191 : index
    %1610 = memref.load %arg3[%c191] : memref<192xf32, #tpu.memory_space<smem>>
    %c0_835 = arith.constant 0 : index
    %c3_836 = arith.constant 3 : index
    %1611 = arith.index_cast %1532 : i32 to index
    %c2_837 = arith.constant 2 : index
    %1612 = vector.load %arg2[%c0_835, %c3_836, %1611, %c2_837] : memref<1x4x18x34xf32, #tpu.memory_space<vmem>>, vector<1x1x8x32xf32>
    %1613 = vector.shape_cast %1612 : vector<1x1x8x32xf32> to vector<8x32xf32>
    %1614 = vector.broadcast %1610 : f32 to vector<8x32xf32>
    %1615 = arith.mulf %1614, %1613 : vector<8x32xf32>
    %1616 = arith.addf %1609, %1615 : vector<8x32xf32>
    %1617 = vector.extract_strided_slice %1616 {offsets = [0, 0], sizes = [1, 32], strides = [1, 1]} : vector<8x32xf32> to vector<1x32xf32>
    %c0_838 = arith.constant 0 : index
    %c3_839 = arith.constant 3 : index
    %c1_840 = arith.constant 1 : index
    %c0_841 = arith.constant 0 : index
    %1618 = vector.load %arg5[%c0_838, %c3_839, %c1_840, %c0_841] : memref<1x4x16x32xf32, #tpu.memory_space<vmem>>, vector<1x1x1x32xf32>
    %1619 = vector.shape_cast %1618 : vector<1x1x1x32xf32> to vector<1x32xf32>
    %1620 = vector.shape_cast %1617 : vector<1x32xf32> to vector<1x1x1x32xf32>
    tpu.vector_store %arg5[%c0_838, %c3_839, %c1_840, %c0_841], %1620 {strides = array<i32>} : memref<1x4x16x32xf32, #tpu.memory_space<vmem>>, vector<1x1x1x32xf32>,
    %1621 = vector.extract_strided_slice %1616 {offsets = [1, 0], sizes = [1, 32], strides = [1, 1]} : vector<8x32xf32> to vector<1x32xf32>
    %c0_842 = arith.constant 0 : index
    %c3_843 = arith.constant 3 : index
    %c3_844 = arith.constant 3 : index
    %c0_845 = arith.constant 0 : index
    %1622 = vector.load %arg5[%c0_842, %c3_843, %c3_844, %c0_845] : memref<1x4x16x32xf32, #tpu.memory_space<vmem>>, vector<1x1x1x32xf32>
    %1623 = vector.shape_cast %1622 : vector<1x1x1x32xf32> to vector<1x32xf32>
    %1624 = vector.shape_cast %1621 : vector<1x32xf32> to vector<1x1x1x32xf32>
    tpu.vector_store %arg5[%c0_842, %c3_843, %c3_844, %c0_845], %1624 {strides = array<i32>} : memref<1x4x16x32xf32, #tpu.memory_space<vmem>>, vector<1x1x1x32xf32>,
    %1625 = vector.extract_strided_slice %1616 {offsets = [2, 0], sizes = [1, 32], strides = [1, 1]} : vector<8x32xf32> to vector<1x32xf32>
    %c0_846 = arith.constant 0 : index
    %c3_847 = arith.constant 3 : index
    %c5_848 = arith.constant 5 : index
    %c0_849 = arith.constant 0 : index
    %1626 = vector.load %arg5[%c0_846, %c3_847, %c5_848, %c0_849] : memref<1x4x16x32xf32, #tpu.memory_space<vmem>>, vector<1x1x1x32xf32>
    %1627 = vector.shape_cast %1626 : vector<1x1x1x32xf32> to vector<1x32xf32>
    %1628 = vector.shape_cast %1625 : vector<1x32xf32> to vector<1x1x1x32xf32>
    tpu.vector_store %arg5[%c0_846, %c3_847, %c5_848, %c0_849], %1628 {strides = array<i32>} : memref<1x4x16x32xf32, #tpu.memory_space<vmem>>, vector<1x1x1x32xf32>,
    %1629 = vector.extract_strided_slice %1616 {offsets = [3, 0], sizes = [1, 32], strides = [1, 1]} : vector<8x32xf32> to vector<1x32xf32>
    %c0_850 = arith.constant 0 : index
    %c3_851 = arith.constant 3 : index
    %c7_852 = arith.constant 7 : index
    %c0_853 = arith.constant 0 : index
    %1630 = vector.load %arg5[%c0_850, %c3_851, %c7_852, %c0_853] : memref<1x4x16x32xf32, #tpu.memory_space<vmem>>, vector<1x1x1x32xf32>
    %1631 = vector.shape_cast %1630 : vector<1x1x1x32xf32> to vector<1x32xf32>
    %1632 = vector.shape_cast %1629 : vector<1x32xf32> to vector<1x1x1x32xf32>
    tpu.vector_store %arg5[%c0_850, %c3_851, %c7_852, %c0_853], %1632 {strides = array<i32>} : memref<1x4x16x32xf32, #tpu.memory_space<vmem>>, vector<1x1x1x32xf32>,
    %1633 = vector.extract_strided_slice %1616 {offsets = [4, 0], sizes = [1, 32], strides = [1, 1]} : vector<8x32xf32> to vector<1x32xf32>
    %c0_854 = arith.constant 0 : index
    %c3_855 = arith.constant 3 : index
    %c9_856 = arith.constant 9 : index
    %c0_857 = arith.constant 0 : index
    %1634 = vector.load %arg5[%c0_854, %c3_855, %c9_856, %c0_857] : memref<1x4x16x32xf32, #tpu.memory_space<vmem>>, vector<1x1x1x32xf32>
    %1635 = vector.shape_cast %1634 : vector<1x1x1x32xf32> to vector<1x32xf32>
    %1636 = vector.shape_cast %1633 : vector<1x32xf32> to vector<1x1x1x32xf32>
    tpu.vector_store %arg5[%c0_854, %c3_855, %c9_856, %c0_857], %1636 {strides = array<i32>} : memref<1x4x16x32xf32, #tpu.memory_space<vmem>>, vector<1x1x1x32xf32>,
    %1637 = vector.extract_strided_slice %1616 {offsets = [5, 0], sizes = [1, 32], strides = [1, 1]} : vector<8x32xf32> to vector<1x32xf32>
    %c0_858 = arith.constant 0 : index
    %c3_859 = arith.constant 3 : index
    %c11_860 = arith.constant 11 : index
    %c0_861 = arith.constant 0 : index
    %1638 = vector.load %arg5[%c0_858, %c3_859, %c11_860, %c0_861] : memref<1x4x16x32xf32, #tpu.memory_space<vmem>>, vector<1x1x1x32xf32>
    %1639 = vector.shape_cast %1638 : vector<1x1x1x32xf32> to vector<1x32xf32>
    %1640 = vector.shape_cast %1637 : vector<1x32xf32> to vector<1x1x1x32xf32>
    tpu.vector_store %arg5[%c0_858, %c3_859, %c11_860, %c0_861], %1640 {strides = array<i32>} : memref<1x4x16x32xf32, #tpu.memory_space<vmem>>, vector<1x1x1x32xf32>,
    %1641 = vector.extract_strided_slice %1616 {offsets = [6, 0], sizes = [1, 32], strides = [1, 1]} : vector<8x32xf32> to vector<1x32xf32>
    %c0_862 = arith.constant 0 : index
    %c3_863 = arith.constant 3 : index
    %c13_864 = arith.constant 13 : index
    %c0_865 = arith.constant 0 : index
    %1642 = vector.load %arg5[%c0_862, %c3_863, %c13_864, %c0_865] : memref<1x4x16x32xf32, #tpu.memory_space<vmem>>, vector<1x1x1x32xf32>
    %1643 = vector.shape_cast %1642 : vector<1x1x1x32xf32> to vector<1x32xf32>
    %1644 = vector.shape_cast %1641 : vector<1x32xf32> to vector<1x1x1x32xf32>
    tpu.vector_store %arg5[%c0_862, %c3_863, %c13_864, %c0_865], %1644 {strides = array<i32>} : memref<1x4x16x32xf32, #tpu.memory_space<vmem>>, vector<1x1x1x32xf32>,
    %1645 = vector.extract_strided_slice %1616 {offsets = [7, 0], sizes = [1, 32], strides = [1, 1]} : vector<8x32xf32> to vector<1x32xf32>
    %c0_866 = arith.constant 0 : index
    %c3_867 = arith.constant 3 : index
    %c15_868 = arith.constant 15 : index
    %c0_869 = arith.constant 0 : index
    %1646 = vector.load %arg5[%c0_866, %c3_867, %c15_868, %c0_869] : memref<1x4x16x32xf32, #tpu.memory_space<vmem>>, vector<1x1x1x32xf32>
    %1647 = vector.shape_cast %1646 : vector<1x1x1x32xf32> to vector<1x32xf32>
    %1648 = vector.shape_cast %1645 : vector<1x32xf32> to vector<1x1x1x32xf32>
    tpu.vector_store %arg5[%c0_866, %c3_867, %c15_868, %c0_869], %1648 {strides = array<i32>} : memref<1x4x16x32xf32, #tpu.memory_space<vmem>>, vector<1x1x1x32xf32>,
    return
  }
  func.func @transform_0(%arg0: i32, %arg1: i32) -> (i32, i32, i32, i32) {
    %c0_i32 = arith.constant 0 : i32
    %c0_i32_0 = arith.constant 0 : i32
    %c0_i32_1 = arith.constant 0 : i32
    %c0_i32_2 = arith.constant 0 : i32
    return %arg0, %c0_i32, %c0_i32_0, %c0_i32_1 : i32, i32, i32, i32
  }
  func.func @transform_1(%arg0: i32, %arg1: i32) -> i32 {
    %c0_i32 = arith.constant 0 : i32
    %c0_i32_0 = arith.constant 0 : i32
    return %c0_i32 : i32
  }
  func.func @transform_2(%arg0: i32, %arg1: i32) -> i32 {
    %c0_i32 = arith.constant 0 : i32
    %c0_i32_0 = arith.constant 0 : i32
    return %c0_i32 : i32
  }
  func.func @transform_3(%arg0: i32, %arg1: i32) -> (i32, i32, i32, i32) {
    %c0_i32 = arith.constant 0 : i32
    %c0_i32_0 = arith.constant 0 : i32
    %c0_i32_1 = arith.constant 0 : i32
    return %arg0, %c0_i32, %arg1, %c0_i32_0 : i32, i32, i32, i32
  }
}

</mosaic_0001>

<llo_original>
// kernel: upsampler2x.1
$region0: #{upsampler2x.1}
  #allocation0 [shape = 'u32[]', space=smem, size = 0x4, offset = 0x4, fixed_abs, tag = 'smem constant byte address 0x4 - core index']
  #allocation1 [shape = 'u32[144,128]{1,0:T(1,128)}', space=vmem, size = 0x12000, scoped, tag = 'internal scratch']
  #allocation8 [shape = 's32[]', space=sflag, size = 0x4, offset = 0, fixed_abs, tag = 'sflag constant byte address 0x0 - dummy sync flag']
  %s0 = inlined_call_operand.vmem [shape: f32[2,4,18,34], index: 0, kind: input, shape index: {}]
  %s1 = inlined_call_operand.vmem [shape: f32[192], index: 1, kind: input, shape index: {}]
  %s2 = inlined_call_operand.vmem [shape: f32[4], index: 2, kind: input, shape index: {}]
  %s3 = inlined_call_operand.hbm [shape: f32[2,4,32,32], index: 3, kind: output, shape index: {}]
  %s4 = sld [smem:[#allocation0]]
  $region53: #{upsampler2x.1} parent=0
    _
  %s6 = ssub.s32 1, %s4
  %s7 = scalar_select 0, %s6, %s4
  $region1: #{upsampler2x.1} parent=0
    #allocation2 [shape = 'u8[1024]{0}', space=smem, size = 0x400, scoped, tag = 'input window, operand 1, single buffered']
    #allocation3 [shape = 's32[2]{0}', space=sflag, size = 0x8, scoped, tag = 'scoped memory for upsampler2x.1']
    #allocation4 [shape = 's32[2]{0}', space=sflag, size = 0x8, scoped, tag = 'scoped memory for upsampler2x.1']
    #allocation5 [shape = 'u8[512]{0}', space=smem, size = 0x200, scoped, tag = 'input window, operand 2, single buffered']
    #allocation6 [shape = 's32[1]{0}', space=sflag, size = 0x4, scoped, tag = 'scoped memory for upsampler2x.1']
    #allocation7 [shape = 'u8[65536]{0}', space=vmem, size = 0x10000, scoped, tag = 'output window, operand 0']
    %8 = vsyncpa [#allocation4], 0
    %9 = vsyncpa [#allocation6], 0
    %10 = vsyncpa [#allocation3], 0
    %s11 = scalar_lea.sflag [#allocation3], 1
    %12 = vsyncpa %s11, 0
    loop: start=0, step=1, limit=6
    $region2: #{upsampler2x.1} parent=1 // loop_pre_header
      _
    $region3: #{upsampler2x.1} parent=1 // loop_header
      %s14 = sphi 0, %s18
      %p15 = scmp.ge.s32.totalorder %s14, 6
      %s21 = sphi 0, %s33
      %s22 = sphi 0, %s29
      %s23 = sphi 0, %s21
      %s24 = sphi 0, %s22
      %s25 = sphi 0, %s23
      %s26 = sphi 0, %s24
      %s36 = sphi 0, %s38
      %s39 = sphi 0, %s36
      %s40 = sphi 0, %s39
      %s56 = sphi 0, %s40
      %s60 = sphi 0, %s60
      %s62 = sphi 0, %s60
      %s63 = sphi 0, %s62
      %s77 = sphi 0, %s63
      %s81 = sphi 0, %s81
      %s83 = sphi 0, %s81
      %s84 = sphi 0, %s83
      %s98 = sphi 0, %s84
      %s106 = sphi 0, %s108
      %s109 = sphi 0, %s106
      %s110 = sphi 0, %s109
      %s126 = sphi 0, %s110
    $region4: #{upsampler2x.1} parent=1 // loop_header_branch
      %17 = sbr.rel (%p15) target = $region8
    $region5: #{upsampler2x.1} parent=1 // loop_body
      %s19 = ssub.s32 %s14, 1
      %s20 = ssub.s32 %s14, 2
      %s27 = sadd.s32 1, %s22
      %p28 = scmp.ge.s32.totalorder %s27, 2
      %s29 = scalar_select %p28, 0, %s27
      %s30 = sadd.s32 1, %s21
      %s31 = scalar_select %p28, %s30, %s21
      %p32 = scmp.ge.s32.totalorder %s31, 2
      %s33 = scalar_select %p32, 0, %s31
      %s34 = ssub.s32 %s21, %s33
      %p35 = scmp.eq.s32.totalorder %s34, 0
      %s37 = sadd.s32 %s36, 1
      %s38 = scalar_select %p35, %s36, %s37
      %p41 = pneg %p35
      %p42 = scmp.eq.s32.totalorder %s14, 3
      %p43 = por %p41, %p42
      %p44 = scmp.ne.s32.totalorder %s36, %s39
      %p45 = scmp.eq.s32.totalorder %s14, 0
      %p46 = por %p44, %p45
      %p47 = scmp.ne.s32.totalorder %s36, %s39
      %p48 = scmp.eq.s32.totalorder %s19, 3
      %p49 = por %p47, %p48
      %p50 = scmp.ne.s32.totalorder %s39, %s40
      %p51 = scmp.eq.s32.totalorder %s19, 0
      %p52 = por %p50, %p51
      %p53 = scmp.ne.s32.totalorder %s39, %s40
      %p54 = scmp.eq.s32.totalorder %s20, 3
      %p55 = por %p53, %p54
      %p57 = scmp.ne.s32.totalorder %s40, %s56
      %p58 = scmp.eq.s32.totalorder %s20, 0
      %p59 = por %p57, %p58
      %s61 = sadd.s32 %s60, 1
      %p64 = scmp.eq.s32.totalorder %s14, 3
      %p65 = scmp.ne.s32.totalorder %s60, %s62
      %p66 = scmp.eq.s32.totalorder %s14, 0
      %p67 = por %p65, %p66
      %p68 = scmp.ne.s32.totalorder %s60, %s62
      %p69 = scmp.eq.s32.totalorder %s19, 3
      %p70 = por %p68, %p69
      %p71 = scmp.ne.s32.totalorder %s62, %s63
      %p72 = scmp.eq.s32.totalorder %s19, 0
      %p73 = por %p71, %p72
      %p74 = scmp.ne.s32.totalorder %s62, %s63
      %p75 = scmp.eq.s32.totalorder %s20, 3
      %p76 = por %p74, %p75
      %p78 = scmp.ne.s32.totalorder %s63, %s77
      %p79 = scmp.eq.s32.totalorder %s20, 0
      %p80 = por %p78, %p79
      %s82 = sadd.s32 %s81, 1
      %p85 = scmp.eq.s32.totalorder %s14, 3
      %p86 = scmp.ne.s32.totalorder %s81, %s83
      %p87 = scmp.eq.s32.totalorder %s14, 0
      %p88 = por %p86, %p87
      %p89 = scmp.ne.s32.totalorder %s81, %s83
      %p90 = scmp.eq.s32.totalorder %s19, 3
      %p91 = por %p89, %p90
      %p92 = scmp.ne.s32.totalorder %s83, %s84
      %p93 = scmp.eq.s32.totalorder %s19, 0
      %p94 = por %p92, %p93
      %p95 = scmp.ne.s32.totalorder %s83, %s84
      %p96 = scmp.eq.s32.totalorder %s20, 3
      %p97 = por %p95, %p96
      %p99 = scmp.ne.s32.totalorder %s84, %s98
      %p100 = scmp.eq.s32.totalorder %s20, 0
      %p101 = por %p99, %p100
      %s102 = ssub.s32 %s21, %s33
      %s103 = ssub.s32 %s22, %s29
      %s104 = sor.u32 %s102, %s103
      %p105 = scmp.eq.s32.totalorder %s104, 0
      %s107 = sadd.s32 %s106, 1
      %s108 = scalar_select %p105, %s106, %s107
      %p111 = pneg %p105
      %p112 = scmp.eq.s32.totalorder %s14, 3
      %p113 = por %p111, %p112
      %p114 = scmp.ne.s32.totalorder %s106, %s109
      %p115 = scmp.eq.s32.totalorder %s14, 0
      %p116 = por %p114, %p115
      %p117 = scmp.ne.s32.totalorder %s106, %s109
      %p118 = scmp.eq.s32.totalorder %s19, 3
      %p119 = por %p117, %p118
      %p120 = scmp.ne.s32.totalorder %s109, %s110
      %p121 = scmp.eq.s32.totalorder %s19, 0
      %p122 = por %p120, %p121
      %p123 = scmp.ne.s32.totalorder %s109, %s110
      %p124 = scmp.eq.s32.totalorder %s20, 3
      %p125 = por %p123, %p124
      %p127 = scmp.ne.s32.totalorder %s110, %s126
      %p128 = scmp.eq.s32.totalorder %s20, 0
      %p129 = por %p127, %p128
      %p130 = scmp.le.s32.totalorder 1, %s14
      %p131 = scmp.lt.s32.totalorder %s14, 5
      %p132 = pnand %p130, %p131
      %p133 = pneg %p132
      // Predicated region
      $region9: #{upsampler2x.1} parent=5 // pred_check
        _
      $region10: #{upsampler2x.1} parent=5 // pred_check_branch
        %135 = sbr.rel (%p132) target = $region12
      $region11: #{upsampler2x.1} parent=5 // pred_region
        %s136 = ssub.s32 %s14, 1
        // Predicated region
        $region13: #{upsampler2x.1} parent=11 // pred_check
          %p137 = pneg %p73
        $region14: #{upsampler2x.1} parent=11 // pred_check_branch
          %139 = sbr.rel (%p137) target = $region16
        $region15: #{upsampler2x.1} parent=11 // pred_region
          %s141 = ssub.s32 32, 32
          %142 = vsyncadd [#allocation4], %s141
          %s144 = sshll.u32 %s1, 4
          %s145 = int_to_ptr.vmem [resolvable:$true] %s144
          %147 = dma.vmem_to_smem %s145, 32, [#allocation2], [#allocation4]
        $region16: #{upsampler2x.1} parent=11 // pred_fallthru
          _
        // Predicated region
        $region17: #{upsampler2x.1} parent=11 // pred_check
          %p148 = pneg %p94
        $region18: #{upsampler2x.1} parent=11 // pred_check_branch
          %150 = sbr.rel (%p148) target = $region20
        $region19: #{upsampler2x.1} parent=11 // pred_region
          %s152 = ssub.s32 16, 16
          %153 = vsyncadd [#allocation6], %s152
          %s155 = sshll.u32 %s2, 4
          %s156 = int_to_ptr.vmem [resolvable:$true] %s155
          %158 = dma.vmem_to_smem %s156, 16, [#allocation5], [#allocation6]
        $region20: #{upsampler2x.1} parent=11 // pred_fallthru
          _
      $region12: #{upsampler2x.1} parent=5 // pred_fallthru
        _
      %p159 = scmp.lt.s32.totalorder %s14, 4
      // Predicated region
      $region21: #{upsampler2x.1} parent=5 // pred_check
        %p160 = pneg %p159
      $region22: #{upsampler2x.1} parent=5 // pred_check_branch
        %162 = sbr.rel (%p160) target = $region24
      $region23: #{upsampler2x.1} parent=5 // pred_region
        // Predicated region
        $region25: #{upsampler2x.1} parent=23 // pred_check
          %p163 = pneg %p46
        $region26: #{upsampler2x.1} parent=23 // pred_check_branch
          %165 = sbr.rel (%p163) target = $region28
        $region27: #{upsampler2x.1} parent=23 // pred_region
          %p166 = scmp.lt.s32.totalorder %s21, 1
          %s167 = scalar_select %p166, %s21, 1
          %s168 = smul.addr %s167, 12
          %s169 = smul.addr %s168, 8
          %s170 = scalar_lea.vmem %s0, %s169
        $region28: #{upsampler2x.1} parent=23 // pred_fallthru
          _
      $region24: #{upsampler2x.1} parent=5 // pred_fallthru
        _
      %p171 = scmp.le.s32.totalorder 1, %s14
      %p172 = scmp.lt.s32.totalorder %s14, 5
      %p173 = pnand %p171, %p172
      %p174 = pneg %p173
      // Predicated region
      $region29: #{upsampler2x.1} parent=5 // pred_check
        _
      $region30: #{upsampler2x.1} parent=5 // pred_check_branch
        %176 = sbr.rel (%p173) target = $region32
      $region31: #{upsampler2x.1} parent=5 // pred_region
        %s177 = ssub.s32 %s14, 1
        // Predicated region
        $region33: #{upsampler2x.1} parent=31 // pred_check
          %p178 = pneg %p73
        $region34: #{upsampler2x.1} parent=31 // pred_check_branch
          %180 = sbr.rel (%p178) target = $region36
        $region35: #{upsampler2x.1} parent=31 // pred_region
          %181 = dma.done [#allocation4], 32
        $region36: #{upsampler2x.1} parent=31 // pred_fallthru
          _
        // Predicated region
        $region37: #{upsampler2x.1} parent=31 // pred_check
          %p182 = pneg %p94
        $region38: #{upsampler2x.1} parent=31 // pred_check_branch
          %184 = sbr.rel (%p182) target = $region40
        $region39: #{upsampler2x.1} parent=31 // pred_region
          %185 = dma.done [#allocation6], 16
        $region40: #{upsampler2x.1} parent=31 // pred_fallthru
          _
        %186 = sfence
        %p187 = scmp.lt.s32.totalorder %s23, 1
        %s188 = scalar_select %p187, %s23, 1
        %s189 = smul.addr %s188, 12
        %s190 = smul.addr %s189, 8
        %s191 = scalar_lea.vmem %s0, %s190
        %p192 = pneg %p52
        %p193 = pneg %p49
        %p194 = pneg %p73
        %p195 = pneg %p70
        %p196 = pneg %p94
        %p197 = pneg %p91
        %p198 = pneg %p122
        %p199 = pneg %p119
        %s200 = sand.u32 %s109, 1
        %s201 = scalar_lea.sflag [#allocation3], %s200
        %s202 = sand.u32 %s109, 1
        %s203 = smul.addr %s202, 64
        %s204 = scalar_lea.vmem [#allocation7], %s203
        %p205 = scmp.lt.s32.totalorder %s23, 1
        %s206 = scalar_select %p205, %s23, 1
        %s207 = smul.addr %s206, 12
        %s208 = smul.addr %s207, 8
        %s209 = scalar_lea.vmem %s0, %s208
        %s210 = smul.u32 2, %s24
        %s211 = smul.u32 %s24, 8
        %s212 = sld [smem:[#allocation5]]
        %v213 = vstv %s212
        %s214 = sld [smem:[#allocation2]]
        %s215 = scalar_lea.vmem %s209, %s211
        %v216 = vld [vmem:[%s215] sm:$0xff]
        %v217 = vstv %s214
        %v218 = vmul.f32 %v217, %v216
        %v219 = vadd.f32 %v213, %v218
        %s220 = sld [smem:[#allocation2 + $0x4]]
        %s221 = sadd.s32 %s211, 24
        %s222 = scalar_lea.vmem %s209, %s221
        %v223 = vld [vmem:[%s222] sm:$0xff]
        %v224 = vstv %s220
        %v225 = vmul.f32 %v224, %v223
        %v226 = vadd.f32 %v219, %v225
        %s227 = sld [smem:[#allocation2 + $0x8]]
        %s228 = sadd.s32 %s211, 48
        %s229 = scalar_lea.vmem %s209, %s228
        %v230 = vld [vmem:[%s229] sm:$0xff]
        %v231 = vstv %s227
        %v232 = vmul.f32 %v231, %v230
        %v233 = vadd.f32 %v226, %v232
        %s234 = sld [smem:[#allocation2 + $0xc]]
        %s235 = sadd.s32 %s211, 72
        %s236 = scalar_lea.vmem %s209, %s235
        %v237 = vld [vmem:[%s236] sm:$0xff]
        %v238 = vstv %s234
        %v239 = vmul.f32 %v238, %v237
        %v240 = vadd.f32 %v233, %v239
        %s241 = sld [smem:[#allocation2 + $0x10]]
        %v242 = vstv %s241
        %v243 = vmul.f32 %v242, %v216
        %245 = vrot.lane.b32.xlu0 %v243, 127
        %v246 = vpop.permute.xlu0 %245
        %v248 = vadd.f32 %v240, %v246
        %s249 = sld [smem:[#allocation2 + $0x14]]
        %v250 = vstv %s249
        %v251 = vmul.f32 %v250, %v223
        %253 = vrot.lane.b32.xlu0 %v251, 127
        %v254 = vpop.permute.xlu0 %253
        %v256 = vadd.f32 %v248, %v254
        %s257 = sld [smem:[#allocation2 + $0x18]]
        %v258 = vstv %s257
        %v259 = vmul.f32 %v258, %v230
        %261 = vrot.lane.b32.xlu0 %v259, 127
        %v262 = vpop.permute.xlu0 %261
        %v264 = vadd.f32 %v256, %v262
        %s265 = sld [smem:[#allocation2 + $0x1c]]
        %v266 = vstv %s265
        %v267 = vmul.f32 %v266, %v237
        %269 = vrot.lane.b32.xlu0 %v267, 127
        %v270 = vpop.permute.xlu0 %269
        %v272 = vadd.f32 %v264, %v270
        %s273 = sld [smem:[#allocation2 + $0x20]]
        %v274 = vstv %s273
        %v275 = vmul.f32 %v274, %v216
        %277 = vrot.lane.b32.xlu0 %v275, 126
        %v278 = vpop.permute.xlu0 %277
        %v280 = vadd.f32 %v272, %v278
        %s281 = sld [smem:[#allocation2 + $0x24]]
        %v282 = vstv %s281
        %v283 = vmul.f32 %v282, %v223
        %285 = vrot.lane.b32.xlu0 %v283, 126
        %v286 = vpop.permute.xlu0 %285
        %v288 = vadd.f32 %v280, %v286
        %s289 = sld [smem:[#allocation2 + $0x28]]
        %v290 = vstv %s289
        %v291 = vmul.f32 %v290, %v230
        %293 = vrot.lane.b32.xlu0 %v291, 126
        %v294 = vpop.permute.xlu0 %293
        %v296 = vadd.f32 %v288, %v294
        %s297 = sld [smem:[#allocation2 + $0x2c]]
        %v298 = vstv %s297
        %v299 = vmul.f32 %v298, %v237
        %301 = vrot.lane.b32.xlu0 %v299, 126
        %v302 = vpop.permute.xlu0 %301
        %v304 = vadd.f32 %v296, %v302
        %s305 = sadd.s32 %s211, 1
        %s306 = sld [smem:[#allocation2 + $0x30]]
        %s307 = scalar_lea.vmem %s209, %s305
        %v308 = vld [vmem:[%s307] sm:$0xff]
        %v309 = vstv %s306
        %v310 = vmul.f32 %v309, %v308
        %v311 = vadd.f32 %v304, %v310
        %s312 = sld [smem:[#allocation2 + $0x34]]
        %s313 = sadd.s32 %s305, 24
        %s314 = scalar_lea.vmem %s209, %s313
        %v315 = vld [vmem:[%s314] sm:$0xff]
        %v316 = vstv %s312
        %v317 = vmul.f32 %v316, %v315
        %v318 = vadd.f32 %v311, %v317
        %s319 = sld [smem:[#allocation2 + $0x38]]
        %s320 = sadd.s32 %s305, 48
        %s321 = scalar_lea.vmem %s209, %s320
        %v322 = vld [vmem:[%s321] sm:$0xff]
        %v323 = vstv %s319
        %v324 = vmul.f32 %v323, %v322
        %v325 = vadd.f32 %v318, %v324
        %s326 = sld [smem:[#allocation2 + $0x3c]]
        %s327 = sadd.s32 %s305, 72
        %s328 = scalar_lea.vmem %s209, %s327
        %v329 = vld [vmem:[%s328] sm:$0xff]
        %v330 = vstv %s326
        %v331 = vmul.f32 %v330, %v329
        %v332 = vadd.f32 %v325, %v331
        %s333 = sld [smem:[#allocation2 + $0x40]]
        %v334 = vstv %s333
        %v335 = vmul.f32 %v334, %v308
        %337 = vrot.lane.b32.xlu0 %v335, 127
        %v338 = vpop.permute.xlu0 %337
        %v340 = vadd.f32 %v332, %v338
        %s341 = sld [smem:[#allocation2 + $0x44]]
        %v342 = vstv %s341
        %v343 = vmul.f32 %v342, %v315
        %345 = vrot.lane.b32.xlu0 %v343, 127
        %v346 = vpop.permute.xlu0 %345
        %v348 = vadd.f32 %v340, %v346
        %s349 = sld [smem:[#allocation2 + $0x48]]
        %v350 = vstv %s349
        %v351 = vmul.f32 %v350, %v322
        %353 = vrot.lane.b32.xlu0 %v351, 127
        %v354 = vpop.permute.xlu0 %353
        %v356 = vadd.f32 %v348, %v354
        %s357 = sld [smem:[#allocation2 + $0x4c]]
        %v358 = vstv %s357
        %v359 = vmul.f32 %v358, %v329
        %361 = vrot.lane.b32.xlu0 %v359, 127
        %v362 = vpop.permute.xlu0 %361
        %v364 = vadd.f32 %v356, %v362
        %s365 = sld [smem:[#allocation2 + $0x50]]
        %v366 = vstv %s365
        %v367 = vmul.f32 %v366, %v308
        %369 = vrot.lane.b32.xlu0 %v367, 126
        %v370 = vpop.permute.xlu0 %369
        %v372 = vadd.f32 %v364, %v370
        %s373 = sld [smem:[#allocation2 + $0x54]]
        %v374 = vstv %s373
        %v375 = vmul.f32 %v374, %v315
        %377 = vrot.lane.b32.xlu0 %v375, 126
        %v378 = vpop.permute.xlu0 %377
        %v380 = vadd.f32 %v372, %v378
        %s381 = sld [smem:[#allocation2 + $0x58]]
        %v382 = vstv %s381
        %v383 = vmul.f32 %v382, %v322
        %385 = vrot.lane.b32.xlu0 %v383, 126
        %v386 = vpop.permute.xlu0 %385
        %v388 = vadd.f32 %v380, %v386
        %s389 = sld [smem:[#allocation2 + $0x5c]]
        %v390 = vstv %s389
        %v391 = vmul.f32 %v390, %v329
        %393 = vrot.lane.b32.xlu0 %v391, 126
        %v394 = vpop.permute.xlu0 %393
        %v396 = vadd.f32 %v388, %v394
        %vm397 = vcmask 253952
        %398 = vst.msk [vmem:[%s204] sm:$0x1] %vm397, %v396
        %vm399 = vcmask 254977
        %400 = vst.msk [vmem:[%s204 + $0x1] sm:$0x2] %vm399, %v396
        %vm401 = vcmask 256002
        %402 = vst.msk [vmem:[%s204 + $0x2] sm:$0x4] %vm401, %v396
        %vm403 = vcmask 257027
        %404 = vst.msk [vmem:[%s204 + $0x3] sm:$0x8] %vm403, %v396
        %vm405 = vcmask 258052
        %406 = vst.msk [vmem:[%s204 + $0x4] sm:$0x10] %vm405, %v396
        %vm407 = vcmask 259077
        %408 = vst.msk [vmem:[%s204 + $0x5] sm:$0x20] %vm407, %v396
        %vm409 = vcmask 260102
        %410 = vst.msk [vmem:[%s204 + $0x6] sm:$0x40] %vm409, %v396
        %vm411 = vcmask 261127
        %412 = vst.msk [vmem:[%s204 + $0x7] sm:$0x80] %vm411, %v396
        %s413 = sld [smem:[#allocation5 + $0x1]]
        %v414 = vstv %s413
        %s415 = sld [smem:[#allocation2 + $0x1]]
        %v416 = vld [vmem:[%s215] sm:$0xff]
        %v417 = vstv %s415
        %v418 = vmul.f32 %v417, %v416
        %v419 = vadd.f32 %v414, %v418
        %s420 = sld [smem:[#allocation2 + $0x5]]
        %v421 = vld [vmem:[%s222] sm:$0xff]
        %v422 = vstv %s420
        %v423 = vmul.f32 %v422, %v421
        %v424 = vadd.f32 %v419, %v423
        %s425 = sld [smem:[#allocation2 + $0x9]]
        %v426 = vld [vmem:[%s229] sm:$0xff]
        %v427 = vstv %s425
        %v428 = vmul.f32 %v427, %v426
        %v429 = vadd.f32 %v424, %v428
        %s430 = sld [smem:[#allocation2 + $0xd]]
        %v431 = vld [vmem:[%s236] sm:$0xff]
        %v432 = vstv %s430
        %v433 = vmul.f32 %v432, %v431
        %v434 = vadd.f32 %v429, %v433
        %s435 = sld [smem:[#allocation2 + $0x11]]
        %v436 = vstv %s435
        %v437 = vmul.f32 %v436, %v416
        %439 = vrot.lane.b32.xlu0 %v437, 127
        %v440 = vpop.permute.xlu0 %439
        %v442 = vadd.f32 %v434, %v440
        %s443 = sld [smem:[#allocation2 + $0x15]]
        %v444 = vstv %s443
        %v445 = vmul.f32 %v444, %v421
        %447 = vrot.lane.b32.xlu0 %v445, 127
        %v448 = vpop.permute.xlu0 %447
        %v450 = vadd.f32 %v442, %v448
        %s451 = sld [smem:[#allocation2 + $0x19]]
        %v452 = vstv %s451
        %v453 = vmul.f32 %v452, %v426
        %455 = vrot.lane.b32.xlu0 %v453, 127
        %v456 = vpop.permute.xlu0 %455
        %v458 = vadd.f32 %v450, %v456
        %s459 = sld [smem:[#allocation2 + $0x1d]]
        %v460 = vstv %s459
        %v461 = vmul.f32 %v460, %v431
        %463 = vrot.lane.b32.xlu0 %v461, 127
        %v464 = vpop.permute.xlu0 %463
        %v466 = vadd.f32 %v458, %v464
        %s467 = sld [smem:[#allocation2 + $0x21]]
        %v468 = vstv %s467
        %v469 = vmul.f32 %v468, %v416
        %471 = vrot.lane.b32.xlu0 %v469, 126
        %v472 = vpop.permute.xlu0 %471
        %v474 = vadd.f32 %v466, %v472
        %s475 = sld [smem:[#allocation2 + $0x25]]
        %v476 = vstv %s475
        %v477 = vmul.f32 %v476, %v421
        %479 = vrot.lane.b32.xlu0 %v477, 126
        %v480 = vpop.permute.xlu0 %479
        %v482 = vadd.f32 %v474, %v480
        %s483 = sld [smem:[#allocation2 + $0x29]]
        %v484 = vstv %s483
        %v485 = vmul.f32 %v484, %v426
        %487 = vrot.lane.b32.xlu0 %v485, 126
        %v488 = vpop.permute.xlu0 %487
        %v490 = vadd.f32 %v482, %v488
        %s491 = sld [smem:[#allocation2 + $0x2d]]
        %v492 = vstv %s491
        %v493 = vmul.f32 %v492, %v431
        %495 = vrot.lane.b32.xlu0 %v493, 126
        %v496 = vpop.permute.xlu0 %495
        %v498 = vadd.f32 %v490, %v496
        %s499 = sld [smem:[#allocation2 + $0x31]]
        %v500 = vld [vmem:[%s307] sm:$0xff]
        %v501 = vstv %s499
        %v502 = vmul.f32 %v501, %v500
        %v503 = vadd.f32 %v498, %v502
        %s504 = sld [smem:[#allocation2 + $0x35]]
        %v505 = vld [vmem:[%s314] sm:$0xff]
        %v506 = vstv %s504
        %v507 = vmul.f32 %v506, %v505
        %v508 = vadd.f32 %v503, %v507
        %s509 = sld [smem:[#allocation2 + $0x39]]
        %v510 = vld [vmem:[%s321] sm:$0xff]
        %v511 = vstv %s509
        %v512 = vmul.f32 %v511, %v510
        %v513 = vadd.f32 %v508, %v512
        %s514 = sld [smem:[#allocation2 + $0x3d]]
        %v515 = vld [vmem:[%s328] sm:$0xff]
        %v516 = vstv %s514
        %v517 = vmul.f32 %v516, %v515
        %v518 = vadd.f32 %v513, %v517
        %s519 = sld [smem:[#allocation2 + $0x41]]
        %v520 = vstv %s519
        %v521 = vmul.f32 %v520, %v500
        %523 = vrot.lane.b32.xlu0 %v521, 127
        %v524 = vpop.permute.xlu0 %523
        %v526 = vadd.f32 %v518, %v524
        %s527 = sld [smem:[#allocation2 + $0x45]]
        %v528 = vstv %s527
        %v529 = vmul.f32 %v528, %v505
        %531 = vrot.lane.b32.xlu0 %v529, 127
        %v532 = vpop.permute.xlu0 %531
        %v534 = vadd.f32 %v526, %v532
        %s535 = sld [smem:[#allocation2 + $0x49]]
        %v536 = vstv %s535
        %v537 = vmul.f32 %v536, %v510
        %539 = vrot.lane.b32.xlu0 %v537, 127
        %v540 = vpop.permute.xlu0 %539
        %v542 = vadd.f32 %v534, %v540
        %s543 = sld [smem:[#allocation2 + $0x4d]]
        %v544 = vstv %s543
        %v545 = vmul.f32 %v544, %v515
        %547 = vrot.lane.b32.xlu0 %v545, 127
        %v548 = vpop.permute.xlu0 %547
        %v550 = vadd.f32 %v542, %v548
        %s551 = sld [smem:[#allocation2 + $0x51]]
        %v552 = vstv %s551
        %v553 = vmul.f32 %v552, %v500
        %555 = vrot.lane.b32.xlu0 %v553, 126
        %v556 = vpop.permute.xlu0 %555
        %v558 = vadd.f32 %v550, %v556
        %s559 = sld [smem:[#allocation2 + $0x55]]
        %v560 = vstv %s559
        %v561 = vmul.f32 %v560, %v505
        %563 = vrot.lane.b32.xlu0 %v561, 126
        %v564 = vpop.permute.xlu0 %563
        %v566 = vadd.f32 %v558, %v564
        %s567 = sld [smem:[#allocation2 + $0x59]]
        %v568 = vstv %s567
        %v569 = vmul.f32 %v568, %v510
        %571 = vrot.lane.b32.xlu0 %v569, 126
        %v572 = vpop.permute.xlu0 %571
        %v574 = vadd.f32 %v566, %v572
        %s575 = sld [smem:[#allocation2 + $0x5d]]
        %v576 = vstv %s575
        %v577 = vmul.f32 %v576, %v515
        %579 = vrot.lane.b32.xlu0 %v577, 126
        %v580 = vpop.permute.xlu0 %579
        %v582 = vadd.f32 %v574, %v580
        %s583 = scalar_lea.vmem %s204, 16 [#allocation7]
        %584 = vst.msk [vmem:[%s583] sm:$0x1] %vm397, %v582
        %585 = vst.msk [vmem:[%s583 + $0x1] sm:$0x2] %vm399, %v582
        %586 = vst.msk [vmem:[%s583 + $0x2] sm:$0x4] %vm401, %v582
        %587 = vst.msk [vmem:[%s583 + $0x3] sm:$0x8] %vm403, %v582
        %588 = vst.msk [vmem:[%s583 + $0x4] sm:$0x10] %vm405, %v582
        %589 = vst.msk [vmem:[%s583 + $0x5] sm:$0x20] %vm407, %v582
        %590 = vst.msk [vmem:[%s583 + $0x6] sm:$0x40] %vm409, %v582
        %591 = vst.msk [vmem:[%s583 + $0x7] sm:$0x80] %vm411, %v582
        %s592 = sld [smem:[#allocation5 + $0x2]]
        %v593 = vstv %s592
        %s594 = sld [smem:[#allocation2 + $0x2]]
        %v595 = vld [vmem:[%s215] sm:$0xff]
        %v596 = vstv %s594
        %v597 = vmul.f32 %v596, %v595
        %v598 = vadd.f32 %v593, %v597
        %s599 = sld [smem:[#allocation2 + $0x6]]
        %v600 = vld [vmem:[%s222] sm:$0xff]
        %v601 = vstv %s599
        %v602 = vmul.f32 %v601, %v600
        %v603 = vadd.f32 %v598, %v602
        %s604 = sld [smem:[#allocation2 + $0xa]]
        %v605 = vld [vmem:[%s229] sm:$0xff]
        %v606 = vstv %s604
        %v607 = vmul.f32 %v606, %v605
        %v608 = vadd.f32 %v603, %v607
        %s609 = sld [smem:[#allocation2 + $0xe]]
        %v610 = vld [vmem:[%s236] sm:$0xff]
        %v611 = vstv %s609
        %v612 = vmul.f32 %v611, %v610
        %v613 = vadd.f32 %v608, %v612
        %s614 = sld [smem:[#allocation2 + $0x12]]
        %v615 = vstv %s614
        %v616 = vmul.f32 %v615, %v595
        %618 = vrot.lane.b32.xlu0 %v616, 127
        %v619 = vpop.permute.xlu0 %618
        %v621 = vadd.f32 %v613, %v619
        %s622 = sld [smem:[#allocation2 + $0x16]]
        %v623 = vstv %s622
        %v624 = vmul.f32 %v623, %v600
        %626 = vrot.lane.b32.xlu0 %v624, 127
        %v627 = vpop.permute.xlu0 %626
        %v629 = vadd.f32 %v621, %v627
        %s630 = sld [smem:[#allocation2 + $0x1a]]
        %v631 = vstv %s630
        %v632 = vmul.f32 %v631, %v605
        %634 = vrot.lane.b32.xlu0 %v632, 127
        %v635 = vpop.permute.xlu0 %634
        %v637 = vadd.f32 %v629, %v635
        %s638 = sld [smem:[#allocation2 + $0x1e]]
        %v639 = vstv %s638
        %v640 = vmul.f32 %v639, %v610
        %642 = vrot.lane.b32.xlu0 %v640, 127
        %v643 = vpop.permute.xlu0 %642
        %v645 = vadd.f32 %v637, %v643
        %s646 = sld [smem:[#allocation2 + $0x22]]
        %v647 = vstv %s646
        %v648 = vmul.f32 %v647, %v595
        %650 = vrot.lane.b32.xlu0 %v648, 126
        %v651 = vpop.permute.xlu0 %650
        %v653 = vadd.f32 %v645, %v651
        %s654 = sld [smem:[#allocation2 + $0x26]]
        %v655 = vstv %s654
        %v656 = vmul.f32 %v655, %v600
        %658 = vrot.lane.b32.xlu0 %v656, 126
        %v659 = vpop.permute.xlu0 %658
        %v661 = vadd.f32 %v653, %v659
        %s662 = sld [smem:[#allocation2 + $0x2a]]
        %v663 = vstv %s662
        %v664 = vmul.f32 %v663, %v605
        %666 = vrot.lane.b32.xlu0 %v664, 126
        %v667 = vpop.permute.xlu0 %666
        %v669 = vadd.f32 %v661, %v667
        %s670 = sld [smem:[#allocation2 + $0x2e]]
        %v671 = vstv %s670
        %v672 = vmul.f32 %v671, %v610
        %674 = vrot.lane.b32.xlu0 %v672, 126
        %v675 = vpop.permute.xlu0 %674
        %v677 = vadd.f32 %v669, %v675
        %s678 = sld [smem:[#allocation2 + $0x32]]
        %v679 = vld [vmem:[%s307] sm:$0xff]
        %v680 = vstv %s678
        %v681 = vmul.f32 %v680, %v679
        %v682 = vadd.f32 %v677, %v681
        %s683 = sld [smem:[#allocation2 + $0x36]]
        %v684 = vld [vmem:[%s314] sm:$0xff]
        %v685 = vstv %s683
        %v686 = vmul.f32 %v685, %v684
        %v687 = vadd.f32 %v682, %v686
        %s688 = sld [smem:[#allocation2 + $0x3a]]
        %v689 = vld [vmem:[%s321] sm:$0xff]
        %v690 = vstv %s688
        %v691 = vmul.f32 %v690, %v689
        %v692 = vadd.f32 %v687, %v691
        %s693 = sld [smem:[#allocation2 + $0x3e]]
        %v694 = vld [vmem:[%s328] sm:$0xff]
        %v695 = vstv %s693
        %v696 = vmul.f32 %v695, %v694
        %v697 = vadd.f32 %v692, %v696
        %s698 = sld [smem:[#allocation2 + $0x42]]
        %v699 = vstv %s698
        %v700 = vmul.f32 %v699, %v679
        %702 = vrot.lane.b32.xlu0 %v700, 127
        %v703 = vpop.permute.xlu0 %702
        %v705 = vadd.f32 %v697, %v703
        %s706 = sld [smem:[#allocation2 + $0x46]]
        %v707 = vstv %s706
        %v708 = vmul.f32 %v707, %v684
        %710 = vrot.lane.b32.xlu0 %v708, 127
        %v711 = vpop.permute.xlu0 %710
        %v713 = vadd.f32 %v705, %v711
        %s714 = sld [smem:[#allocation2 + $0x4a]]
        %v715 = vstv %s714
        %v716 = vmul.f32 %v715, %v689
        %718 = vrot.lane.b32.xlu0 %v716, 127
        %v719 = vpop.permute.xlu0 %718
        %v721 = vadd.f32 %v713, %v719
        %s722 = sld [smem:[#allocation2 + $0x4e]]
        %v723 = vstv %s722
        %v724 = vmul.f32 %v723, %v694
        %726 = vrot.lane.b32.xlu0 %v724, 127
        %v727 = vpop.permute.xlu0 %726
        %v729 = vadd.f32 %v721, %v727
        %s730 = sld [smem:[#allocation2 + $0x52]]
        %v731 = vstv %s730
        %v732 = vmul.f32 %v731, %v679
        %734 = vrot.lane.b32.xlu0 %v732, 126
        %v735 = vpop.permute.xlu0 %734
        %v737 = vadd.f32 %v729, %v735
        %s738 = sld [smem:[#allocation2 + $0x56]]
        %v739 = vstv %s738
        %v740 = vmul.f32 %v739, %v684
        %742 = vrot.lane.b32.xlu0 %v740, 126
        %v743 = vpop.permute.xlu0 %742
        %v745 = vadd.f32 %v737, %v743
        %s746 = sld [smem:[#allocation2 + $0x5a]]
        %v747 = vstv %s746
        %v748 = vmul.f32 %v747, %v689
        %750 = vrot.lane.b32.xlu0 %v748, 126
        %v751 = vpop.permute.xlu0 %750
        %v753 = vadd.f32 %v745, %v751
        %s754 = sld [smem:[#allocation2 + $0x5e]]
        %v755 = vstv %s754
        %v756 = vmul.f32 %v755, %v694
        %758 = vrot.lane.b32.xlu0 %v756, 126
        %v759 = vpop.permute.xlu0 %758
        %v761 = vadd.f32 %v753, %v759
        %s762 = scalar_lea.vmem %s204, 32 [#allocation7]
        %763 = vst.msk [vmem:[%s762] sm:$0x1] %vm397, %v761
        %764 = vst.msk [vmem:[%s762 + $0x1] sm:$0x2] %vm399, %v761
        %765 = vst.msk [vmem:[%s762 + $0x2] sm:$0x4] %vm401, %v761
        %766 = vst.msk [vmem:[%s762 + $0x3] sm:$0x8] %vm403, %v761
        %767 = vst.msk [vmem:[%s762 + $0x4] sm:$0x10] %vm405, %v761
        %768 = vst.msk [vmem:[%s762 + $0x5] sm:$0x20] %vm407, %v761
        %769 = vst.msk [vmem:[%s762 + $0x6] sm:$0x40] %vm409, %v761
        %770 = vst.msk [vmem:[%s762 + $0x7] sm:$0x80] %vm411, %v761
        %s771 = sld [smem:[#allocation5 + $0x3]]
        %v772 = vstv %s771
        %s773 = sld [smem:[#allocation2 + $0x3]]
        %v774 = vld [vmem:[%s215] sm:$0xff]
        %v775 = vstv %s773
        %v776 = vmul.f32 %v775, %v774
        %v777 = vadd.f32 %v772, %v776
        %s778 = sld [smem:[#allocation2 + $0x7]]
        %v779 = vld [vmem:[%s222] sm:$0xff]
        %v780 = vstv %s778
        %v781 = vmul.f32 %v780, %v779
        %v782 = vadd.f32 %v777, %v781
        %s783 = sld [smem:[#allocation2 + $0xb]]
        %v784 = vld [vmem:[%s229] sm:$0xff]
        %v785 = vstv %s783
        %v786 = vmul.f32 %v785, %v784
        %v787 = vadd.f32 %v782, %v786
        %s788 = sld [smem:[#allocation2 + $0xf]]
        %v789 = vld [vmem:[%s236] sm:$0xff]
        %v790 = vstv %s788
        %v791 = vmul.f32 %v790, %v789
        %v792 = vadd.f32 %v787, %v791
        %s793 = sld [smem:[#allocation2 + $0x13]]
        %v794 = vstv %s793
        %v795 = vmul.f32 %v794, %v774
        %797 = vrot.lane.b32.xlu0 %v795, 127
        %v798 = vpop.permute.xlu0 %797
        %v800 = vadd.f32 %v792, %v798
        %s801 = sld [smem:[#allocation2 + $0x17]]
        %v802 = vstv %s801
        %v803 = vmul.f32 %v802, %v779
        %805 = vrot.lane.b32.xlu0 %v803, 127
        %v806 = vpop.permute.xlu0 %805
        %v808 = vadd.f32 %v800, %v806
        %s809 = sld [smem:[#allocation2 + $0x1b]]
        %v810 = vstv %s809
        %v811 = vmul.f32 %v810, %v784
        %813 = vrot.lane.b32.xlu0 %v811, 127
        %v814 = vpop.permute.xlu0 %813
        %v816 = vadd.f32 %v808, %v814
        %s817 = sld [smem:[#allocation2 + $0x1f]]
        %v818 = vstv %s817
        %v819 = vmul.f32 %v818, %v789
        %821 = vrot.lane.b32.xlu0 %v819, 127
        %v822 = vpop.permute.xlu0 %821
        %v824 = vadd.f32 %v816, %v822
        %s825 = sld [smem:[#allocation2 + $0x23]]
        %v826 = vstv %s825
        %v827 = vmul.f32 %v826, %v774
        %829 = vrot.lane.b32.xlu0 %v827, 126
        %v830 = vpop.permute.xlu0 %829
        %v832 = vadd.f32 %v824, %v830
        %s833 = sld [smem:[#allocation2 + $0x27]]
        %v834 = vstv %s833
        %v835 = vmul.f32 %v834, %v779
        %837 = vrot.lane.b32.xlu0 %v835, 126
        %v838 = vpop.permute.xlu0 %837
        %v840 = vadd.f32 %v832, %v838
        %s841 = sld [smem:[#allocation2 + $0x2b]]
        %v842 = vstv %s841
        %v843 = vmul.f32 %v842, %v784
        %845 = vrot.lane.b32.xlu0 %v843, 126
        %v846 = vpop.permute.xlu0 %845
        %v848 = vadd.f32 %v840, %v846
        %s849 = sld [smem:[#allocation2 + $0x2f]]
        %v850 = vstv %s849
        %v851 = vmul.f32 %v850, %v789
        %853 = vrot.lane.b32.xlu0 %v851, 126
        %v854 = vpop.permute.xlu0 %853
        %v856 = vadd.f32 %v848, %v854
        %s857 = sld [smem:[#allocation2 + $0x33]]
        %v858 = vld [vmem:[%s307] sm:$0xff]
        %v859 = vstv %s857
        %v860 = vmul.f32 %v859, %v858
        %v861 = vadd.f32 %v856, %v860
        %s862 = sld [smem:[#allocation2 + $0x37]]
        %v863 = vld [vmem:[%s314] sm:$0xff]
        %v864 = vstv %s862
        %v865 = vmul.f32 %v864, %v863
        %v866 = vadd.f32 %v861, %v865
        %s867 = sld [smem:[#allocation2 + $0x3b]]
        %v868 = vld [vmem:[%s321] sm:$0xff]
        %v869 = vstv %s867
        %v870 = vmul.f32 %v869, %v868
        %v871 = vadd.f32 %v866, %v870
        %s872 = sld [smem:[#allocation2 + $0x3f]]
        %v873 = vld [vmem:[%s328] sm:$0xff]
        %v874 = vstv %s872
        %v875 = vmul.f32 %v874, %v873
        %v876 = vadd.f32 %v871, %v875
        %s877 = sld [smem:[#allocation2 + $0x43]]
        %v878 = vstv %s877
        %v879 = vmul.f32 %v878, %v858
        %881 = vrot.lane.b32.xlu0 %v879, 127
        %v882 = vpop.permute.xlu0 %881
        %v884 = vadd.f32 %v876, %v882
        %s885 = sld [smem:[#allocation2 + $0x47]]
        %v886 = vstv %s885
        %v887 = vmul.f32 %v886, %v863
        %889 = vrot.lane.b32.xlu0 %v887, 127
        %v890 = vpop.permute.xlu0 %889
        %v892 = vadd.f32 %v884, %v890
        %s893 = sld [smem:[#allocation2 + $0x4b]]
        %v894 = vstv %s893
        %v895 = vmul.f32 %v894, %v868
        %897 = vrot.lane.b32.xlu0 %v895, 127
        %v898 = vpop.permute.xlu0 %897
        %v900 = vadd.f32 %v892, %v898
        %s901 = sld [smem:[#allocation2 + $0x4f]]
        %v902 = vstv %s901
        %v903 = vmul.f32 %v902, %v873
        %905 = vrot.lane.b32.xlu0 %v903, 127
        %v906 = vpop.permute.xlu0 %905
        %v908 = vadd.f32 %v900, %v906
        %s909 = sld [smem:[#allocation2 + $0x53]]
        %v910 = vstv %s909
        %v911 = vmul.f32 %v910, %v858
        %913 = vrot.lane.b32.xlu0 %v911, 126
        %v914 = vpop.permute.xlu0 %913
        %v916 = vadd.f32 %v908, %v914
        %s917 = sld [smem:[#allocation2 + $0x57]]
        %v918 = vstv %s917
        %v919 = vmul.f32 %v918, %v863
        %921 = vrot.lane.b32.xlu0 %v919, 126
        %v922 = vpop.permute.xlu0 %921
        %v924 = vadd.f32 %v916, %v922
        %s925 = sld [smem:[#allocation2 + $0x5b]]
        %v926 = vstv %s925
        %v927 = vmul.f32 %v926, %v868
        %929 = vrot.lane.b32.xlu0 %v927, 126
        %v930 = vpop.permute.xlu0 %929
        %v932 = vadd.f32 %v924, %v930
        %s933 = sld [smem:[#allocation2 + $0x5f]]
        %v934 = vstv %s933
        %v935 = vmul.f32 %v934, %v873
        %937 = vrot.lane.b32.xlu0 %v935, 126
        %v938 = vpop.permute.xlu0 %937
        %v940 = vadd.f32 %v932, %v938
        %s941 = scalar_lea.vmem %s204, 48 [#allocation7]
        %942 = vst.msk [vmem:[%s941] sm:$0x1] %vm397, %v940
        %943 = vst.msk [vmem:[%s941 + $0x1] sm:$0x2] %vm399, %v940
        %944 = vst.msk [vmem:[%s941 + $0x2] sm:$0x4] %vm401, %v940
        %945 = vst.msk [vmem:[%s941 + $0x3] sm:$0x8] %vm403, %v940
        %946 = vst.msk [vmem:[%s941 + $0x4] sm:$0x10] %vm405, %v940
        %947 = vst.msk [vmem:[%s941 + $0x5] sm:$0x20] %vm407, %v940
        %948 = vst.msk [vmem:[%s941 + $0x6] sm:$0x40] %vm409, %v940
        %949 = vst.msk [vmem:[%s941 + $0x7] sm:$0x80] %vm411, %v940
        %s950 = sld [smem:[#allocation5]]
        %v951 = vstv %s950
        %s952 = sld [smem:[#allocation2 + $0x60]]
        %v953 = vld [vmem:[%s307] sm:$0xff]
        %v954 = vstv %s952
        %v955 = vmul.f32 %v954, %v953
        %v956 = vadd.f32 %v951, %v955
        %s957 = sld [smem:[#allocation2 + $0x64]]
        %v958 = vld [vmem:[%s314] sm:$0xff]
        %v959 = vstv %s957
        %v960 = vmul.f32 %v959, %v958
        %v961 = vadd.f32 %v956, %v960
        %s962 = sld [smem:[#allocation2 + $0x68]]
        %v963 = vld [vmem:[%s321] sm:$0xff]
        %v964 = vstv %s962
        %v965 = vmul.f32 %v964, %v963
        %v966 = vadd.f32 %v961, %v965
        %s967 = sld [smem:[#allocation2 + $0x6c]]
        %v968 = vld [vmem:[%s328] sm:$0xff]
        %v969 = vstv %s967
        %v970 = vmul.f32 %v969, %v968
        %v971 = vadd.f32 %v966, %v970
        %s972 = sld [smem:[#allocation2 + $0x70]]
        %v973 = vstv %s972
        %v974 = vmul.f32 %v973, %v953
        %976 = vrot.lane.b32.xlu0 %v974, 127
        %v977 = vpop.permute.xlu0 %976
        %v979 = vadd.f32 %v971, %v977
        %s980 = sld [smem:[#allocation2 + $0x74]]
        %v981 = vstv %s980
        %v982 = vmul.f32 %v981, %v958
        %984 = vrot.lane.b32.xlu0 %v982, 127
        %v985 = vpop.permute.xlu0 %984
        %v987 = vadd.f32 %v979, %v985
        %s988 = sld [smem:[#allocation2 + $0x78]]
        %v989 = vstv %s988
        %v990 = vmul.f32 %v989, %v963
        %992 = vrot.lane.b32.xlu0 %v990, 127
        %v993 = vpop.permute.xlu0 %992
        %v995 = vadd.f32 %v987, %v993
        %s996 = sld [smem:[#allocation2 + $0x7c]]
        %v997 = vstv %s996
        %v998 = vmul.f32 %v997, %v968
        %1000 = vrot.lane.b32.xlu0 %v998, 127
        %v1001 = vpop.permute.xlu0 %1000
        %v1003 = vadd.f32 %v995, %v1001
        %s1004 = sld [smem:[#allocation2 + $0x80]]
        %v1005 = vstv %s1004
        %v1006 = vmul.f32 %v1005, %v953
        %1008 = vrot.lane.b32.xlu0 %v1006, 126
        %v1009 = vpop.permute.xlu0 %1008
        %v1011 = vadd.f32 %v1003, %v1009
        %s1012 = sld [smem:[#allocation2 + $0x84]]
        %v1013 = vstv %s1012
        %v1014 = vmul.f32 %v1013, %v958
        %1016 = vrot.lane.b32.xlu0 %v1014, 126
        %v1017 = vpop.permute.xlu0 %1016
        %v1019 = vadd.f32 %v1011, %v1017
        %s1020 = sld [smem:[#allocation2 + $0x88]]
        %v1021 = vstv %s1020
        %v1022 = vmul.f32 %v1021, %v963
        %1024 = vrot.lane.b32.xlu0 %v1022, 126
        %v1025 = vpop.permute.xlu0 %1024
        %v1027 = vadd.f32 %v1019, %v1025
        %s1028 = sld [smem:[#allocation2 + $0x8c]]
        %v1029 = vstv %s1028
        %v1030 = vmul.f32 %v1029, %v968
        %1032 = vrot.lane.b32.xlu0 %v1030, 126
        %v1033 = vpop.permute.xlu0 %1032
        %v1035 = vadd.f32 %v1027, %v1033
        %s1036 = sadd.s32 %s211, 2
        %s1037 = sld [smem:[#allocation2 + $0x90]]
        %s1038 = scalar_lea.vmem %s209, %s1036
        %v1039 = vld [vmem:[%s1038] sm:$0xff]
        %v1040 = vstv %s1037
        %v1041 = vmul.f32 %v1040, %v1039
        %v1042 = vadd.f32 %v1035, %v1041
        %s1043 = sld [smem:[#allocation2 + $0x94]]
        %s1044 = sadd.s32 %s1036, 24
        %s1045 = scalar_lea.vmem %s209, %s1044
        %v1046 = vld [vmem:[%s1045] sm:$0xff]
        %v1047 = vstv %s1043
        %v1048 = vmul.f32 %v1047, %v1046
        %v1049 = vadd.f32 %v1042, %v1048
        %s1050 = sld [smem:[#allocation2 + $0x98]]
        %s1051 = sadd.s32 %s1036, 48
        %s1052 = scalar_lea.vmem %s209, %s1051
        %v1053 = vld [vmem:[%s1052] sm:$0xff]
        %v1054 = vstv %s1050
        %v1055 = vmul.f32 %v1054, %v1053
        %v1056 = vadd.f32 %v1049, %v1055
        %s1057 = sld [smem:[#allocation2 + $0x9c]]
        %s1058 = sadd.s32 %s1036, 72
        %s1059 = scalar_lea.vmem %s209, %s1058
        %v1060 = vld [vmem:[%s1059] sm:$0xff]
        %v1061 = vstv %s1057
        %v1062 = vmul.f32 %v1061, %v1060
        %v1063 = vadd.f32 %v1056, %v1062
        %s1064 = sld [smem:[#allocation2 + $0xa0]]
        %v1065 = vstv %s1064
        %v1066 = vmul.f32 %v1065, %v1039
        %1068 = vrot.lane.b32.xlu0 %v1066, 127
        %v1069 = vpop.permute.xlu0 %1068
        %v1071 = vadd.f32 %v1063, %v1069
        %s1072 = sld [smem:[#allocation2 + $0xa4]]
        %v1073 = vstv %s1072
        %v1074 = vmul.f32 %v1073, %v1046
        %1076 = vrot.lane.b32.xlu0 %v1074, 127
        %v1077 = vpop.permute.xlu0 %1076
        %v1079 = vadd.f32 %v1071, %v1077
        %s1080 = sld [smem:[#allocation2 + $0xa8]]
        %v1081 = vstv %s1080
        %v1082 = vmul.f32 %v1081, %v1053
        %1084 = vrot.lane.b32.xlu0 %v1082, 127
        %v1085 = vpop.permute.xlu0 %1084
        %v1087 = vadd.f32 %v1079, %v1085
        %s1088 = sld [smem:[#allocation2 + $0xac]]
        %v1089 = vstv %s1088
        %v1090 = vmul.f32 %v1089, %v1060
        %1092 = vrot.lane.b32.xlu0 %v1090, 127
        %v1093 = vpop.permute.xlu0 %1092
        %v1095 = vadd.f32 %v1087, %v1093
        %s1096 = sld [smem:[#allocation2 + $0xb0]]
        %v1097 = vstv %s1096
        %v1098 = vmul.f32 %v1097, %v1039
        %1100 = vrot.lane.b32.xlu0 %v1098, 126
        %v1101 = vpop.permute.xlu0 %1100
        %v1103 = vadd.f32 %v1095, %v1101
        %s1104 = sld [smem:[#allocation2 + $0xb4]]
        %v1105 = vstv %s1104
        %v1106 = vmul.f32 %v1105, %v1046
        %1108 = vrot.lane.b32.xlu0 %v1106, 126
        %v1109 = vpop.permute.xlu0 %1108
        %v1111 = vadd.f32 %v1103, %v1109
        %s1112 = sld [smem:[#allocation2 + $0xb8]]
        %v1113 = vstv %s1112
        %v1114 = vmul.f32 %v1113, %v1053
        %1116 = vrot.lane.b32.xlu0 %v1114, 126
        %v1117 = vpop.permute.xlu0 %1116
        %v1119 = vadd.f32 %v1111, %v1117
        %s1120 = sld [smem:[#allocation2 + $0xbc]]
        %v1121 = vstv %s1120
        %v1122 = vmul.f32 %v1121, %v1060
        %1124 = vrot.lane.b32.xlu0 %v1122, 126
        %v1125 = vpop.permute.xlu0 %1124
        %v1127 = vadd.f32 %v1119, %v1125
        %1128 = vst.msk [vmem:[%s204 + $0x1] sm:$0x1] %vm397, %v1127
        %1129 = vst.msk [vmem:[%s204 + $0x2] sm:$0x2] %vm399, %v1127
        %1130 = vst.msk [vmem:[%s204 + $0x3] sm:$0x4] %vm401, %v1127
        %1131 = vst.msk [vmem:[%s204 + $0x4] sm:$0x8] %vm403, %v1127
        %1132 = vst.msk [vmem:[%s204 + $0x5] sm:$0x10] %vm405, %v1127
        %1133 = vst.msk [vmem:[%s204 + $0x6] sm:$0x20] %vm407, %v1127
        %1134 = vst.msk [vmem:[%s204 + $0x7] sm:$0x40] %vm409, %v1127
        %1135 = vst.msk [vmem:[%s204 + $0x8] sm:$0x80] %vm411, %v1127
        %s1136 = sld [smem:[#allocation5 + $0x1]]
        %v1137 = vstv %s1136
        %s1138 = sld [smem:[#allocation2 + $0x61]]
        %v1139 = vld [vmem:[%s307] sm:$0xff]
        %v1140 = vstv %s1138
        %v1141 = vmul.f32 %v1140, %v1139
        %v1142 = vadd.f32 %v1137, %v1141
        %s1143 = sld [smem:[#allocation2 + $0x65]]
        %v1144 = vld [vmem:[%s314] sm:$0xff]
        %v1145 = vstv %s1143
        %v1146 = vmul.f32 %v1145, %v1144
        %v1147 = vadd.f32 %v1142, %v1146
        %s1148 = sld [smem:[#allocation2 + $0x69]]
        %v1149 = vld [vmem:[%s321] sm:$0xff]
        %v1150 = vstv %s1148
        %v1151 = vmul.f32 %v1150, %v1149
        %v1152 = vadd.f32 %v1147, %v1151
        %s1153 = sld [smem:[#allocation2 + $0x6d]]
        %v1154 = vld [vmem:[%s328] sm:$0xff]
        %v1155 = vstv %s1153
        %v1156 = vmul.f32 %v1155, %v1154
        %v1157 = vadd.f32 %v1152, %v1156
        %s1158 = sld [smem:[#allocation2 + $0x71]]
        %v1159 = vstv %s1158
        %v1160 = vmul.f32 %v1159, %v1139
        %1162 = vrot.lane.b32.xlu0 %v1160, 127
        %v1163 = vpop.permute.xlu0 %1162
        %v1165 = vadd.f32 %v1157, %v1163
        %s1166 = sld [smem:[#allocation2 + $0x75]]
        %v1167 = vstv %s1166
        %v1168 = vmul.f32 %v1167, %v1144
        %1170 = vrot.lane.b32.xlu0 %v1168, 127
        %v1171 = vpop.permute.xlu0 %1170
        %v1173 = vadd.f32 %v1165, %v1171
        %s1174 = sld [smem:[#allocation2 + $0x79]]
        %v1175 = vstv %s1174
        %v1176 = vmul.f32 %v1175, %v1149
        %1178 = vrot.lane.b32.xlu0 %v1176, 127
        %v1179 = vpop.permute.xlu0 %1178
        %v1181 = vadd.f32 %v1173, %v1179
        %s1182 = sld [smem:[#allocation2 + $0x7d]]
        %v1183 = vstv %s1182
        %v1184 = vmul.f32 %v1183, %v1154
        %1186 = vrot.lane.b32.xlu0 %v1184, 127
        %v1187 = vpop.permute.xlu0 %1186
        %v1189 = vadd.f32 %v1181, %v1187
        %s1190 = sld [smem:[#allocation2 + $0x81]]
        %v1191 = vstv %s1190
        %v1192 = vmul.f32 %v1191, %v1139
        %1194 = vrot.lane.b32.xlu0 %v1192, 126
        %v1195 = vpop.permute.xlu0 %1194
        %v1197 = vadd.f32 %v1189, %v1195
        %s1198 = sld [smem:[#allocation2 + $0x85]]
        %v1199 = vstv %s1198
        %v1200 = vmul.f32 %v1199, %v1144
        %1202 = vrot.lane.b32.xlu0 %v1200, 126
        %v1203 = vpop.permute.xlu0 %1202
        %v1205 = vadd.f32 %v1197, %v1203
        %s1206 = sld [smem:[#allocation2 + $0x89]]
        %v1207 = vstv %s1206
        %v1208 = vmul.f32 %v1207, %v1149
        %1210 = vrot.lane.b32.xlu0 %v1208, 126
        %v1211 = vpop.permute.xlu0 %1210
        %v1213 = vadd.f32 %v1205, %v1211
        %s1214 = sld [smem:[#allocation2 + $0x8d]]
        %v1215 = vstv %s1214
        %v1216 = vmul.f32 %v1215, %v1154
        %1218 = vrot.lane.b32.xlu0 %v1216, 126
        %v1219 = vpop.permute.xlu0 %1218
        %v1221 = vadd.f32 %v1213, %v1219
        %s1222 = sld [smem:[#allocation2 + $0x91]]
        %v1223 = vld [vmem:[%s1038] sm:$0xff]
        %v1224 = vstv %s1222
        %v1225 = vmul.f32 %v1224, %v1223
        %v1226 = vadd.f32 %v1221, %v1225
        %s1227 = sld [smem:[#allocation2 + $0x95]]
        %v1228 = vld [vmem:[%s1045] sm:$0xff]
        %v1229 = vstv %s1227
        %v1230 = vmul.f32 %v1229, %v1228
        %v1231 = vadd.f32 %v1226, %v1230
        %s1232 = sld [smem:[#allocation2 + $0x99]]
        %v1233 = vld [vmem:[%s1052] sm:$0xff]
        %v1234 = vstv %s1232
        %v1235 = vmul.f32 %v1234, %v1233
        %v1236 = vadd.f32 %v1231, %v1235
        %s1237 = sld [smem:[#allocation2 + $0x9d]]
        %v1238 = vld [vmem:[%s1059] sm:$0xff]
        %v1239 = vstv %s1237
        %v1240 = vmul.f32 %v1239, %v1238
        %v1241 = vadd.f32 %v1236, %v1240
        %s1242 = sld [smem:[#allocation2 + $0xa1]]
        %v1243 = vstv %s1242
        %v1244 = vmul.f32 %v1243, %v1223
        %1246 = vrot.lane.b32.xlu0 %v1244, 127
        %v1247 = vpop.permute.xlu0 %1246
        %v1249 = vadd.f32 %v1241, %v1247
        %s1250 = sld [smem:[#allocation2 + $0xa5]]
        %v1251 = vstv %s1250
        %v1252 = vmul.f32 %v1251, %v1228
        %1254 = vrot.lane.b32.xlu0 %v1252, 127
        %v1255 = vpop.permute.xlu0 %1254
        %v1257 = vadd.f32 %v1249, %v1255
        %s1258 = sld [smem:[#allocation2 + $0xa9]]
        %v1259 = vstv %s1258
        %v1260 = vmul.f32 %v1259, %v1233
        %1262 = vrot.lane.b32.xlu0 %v1260, 127
        %v1263 = vpop.permute.xlu0 %1262
        %v1265 = vadd.f32 %v1257, %v1263
        %s1266 = sld [smem:[#allocation2 + $0xad]]
        %v1267 = vstv %s1266
        %v1268 = vmul.f32 %v1267, %v1238
        %1270 = vrot.lane.b32.xlu0 %v1268, 127
        %v1271 = vpop.permute.xlu0 %1270
        %v1273 = vadd.f32 %v1265, %v1271
        %s1274 = sld [smem:[#allocation2 + $0xb1]]
        %v1275 = vstv %s1274
        %v1276 = vmul.f32 %v1275, %v1223
        %1278 = vrot.lane.b32.xlu0 %v1276, 126
        %v1279 = vpop.permute.xlu0 %1278
        %v1281 = vadd.f32 %v1273, %v1279
        %s1282 = sld [smem:[#allocation2 + $0xb5]]
        %v1283 = vstv %s1282
        %v1284 = vmul.f32 %v1283, %v1228
        %1286 = vrot.lane.b32.xlu0 %v1284, 126
        %v1287 = vpop.permute.xlu0 %1286
        %v1289 = vadd.f32 %v1281, %v1287
        %s1290 = sld [smem:[#allocation2 + $0xb9]]
        %v1291 = vstv %s1290
        %v1292 = vmul.f32 %v1291, %v1233
        %1294 = vrot.lane.b32.xlu0 %v1292, 126
        %v1295 = vpop.permute.xlu0 %1294
        %v1297 = vadd.f32 %v1289, %v1295
        %s1298 = sld [smem:[#allocation2 + $0xbd]]
        %v1299 = vstv %s1298
        %v1300 = vmul.f32 %v1299, %v1238
        %1302 = vrot.lane.b32.xlu0 %v1300, 126
        %v1303 = vpop.permute.xlu0 %1302
        %v1305 = vadd.f32 %v1297, %v1303
        %1306 = vst.msk [vmem:[%s583 + $0x1] sm:$0x1] %vm397, %v1305
        %1307 = vst.msk [vmem:[%s583 + $0x2] sm:$0x2] %vm399, %v1305
        %1308 = vst.msk [vmem:[%s583 + $0x3] sm:$0x4] %vm401, %v1305
        %1309 = vst.msk [vmem:[%s583 + $0x4] sm:$0x8] %vm403, %v1305
        %1310 = vst.msk [vmem:[%s583 + $0x5] sm:$0x10] %vm405, %v1305
        %1311 = vst.msk [vmem:[%s583 + $0x6] sm:$0x20] %vm407, %v1305
        %1312 = vst.msk [vmem:[%s583 + $0x7] sm:$0x40] %vm409, %v1305
        %1313 = vst.msk [vmem:[%s583 + $0x8] sm:$0x80] %vm411, %v1305
        %s1314 = sld [smem:[#allocation5 + $0x2]]
        %v1315 = vstv %s1314
        %s1316 = sld [smem:[#allocation2 + $0x62]]
        %v1317 = vld [vmem:[%s307] sm:$0xff]
        %v1318 = vstv %s1316
        %v1319 = vmul.f32 %v1318, %v1317
        %v1320 = vadd.f32 %v1315, %v1319
        %s1321 = sld [smem:[#allocation2 + $0x66]]
        %v1322 = vld [vmem:[%s314] sm:$0xff]
        %v1323 = vstv %s1321
        %v1324 = vmul.f32 %v1323, %v1322
        %v1325 = vadd.f32 %v1320, %v1324
        %s1326 = sld [smem:[#allocation2 + $0x6a]]
        %v1327 = vld [vmem:[%s321] sm:$0xff]
        %v1328 = vstv %s1326
        %v1329 = vmul.f32 %v1328, %v1327
        %v1330 = vadd.f32 %v1325, %v1329
        %s1331 = sld [smem:[#allocation2 + $0x6e]]
        %v1332 = vld [vmem:[%s328] sm:$0xff]
        %v1333 = vstv %s1331
        %v1334 = vmul.f32 %v1333, %v1332
        %v1335 = vadd.f32 %v1330, %v1334
        %s1336 = sld [smem:[#allocation2 + $0x72]]
        %v1337 = vstv %s1336
        %v1338 = vmul.f32 %v1337, %v1317
        %1340 = vrot.lane.b32.xlu0 %v1338, 127
        %v1341 = vpop.permute.xlu0 %1340
        %v1343 = vadd.f32 %v1335, %v1341
        %s1344 = sld [smem:[#allocation2 + $0x76]]
        %v1345 = vstv %s1344
        %v1346 = vmul.f32 %v1345, %v1322
        %1348 = vrot.lane.b32.xlu0 %v1346, 127
        %v1349 = vpop.permute.xlu0 %1348
        %v1351 = vadd.f32 %v1343, %v1349
        %s1352 = sld [smem:[#allocation2 + $0x7a]]
        %v1353 = vstv %s1352
        %v1354 = vmul.f32 %v1353, %v1327
        %1356 = vrot.lane.b32.xlu0 %v1354, 127
        %v1357 = vpop.permute.xlu0 %1356
        %v1359 = vadd.f32 %v1351, %v1357
        %s1360 = sld [smem:[#allocation2 + $0x7e]]
        %v1361 = vstv %s1360
        %v1362 = vmul.f32 %v1361, %v1332
        %1364 = vrot.lane.b32.xlu0 %v1362, 127
        %v1365 = vpop.permute.xlu0 %1364
        %v1367 = vadd.f32 %v1359, %v1365
        %s1368 = sld [smem:[#allocation2 + $0x82]]
        %v1369 = vstv %s1368
        %v1370 = vmul.f32 %v1369, %v1317
        %1372 = vrot.lane.b32.xlu0 %v1370, 126
        %v1373 = vpop.permute.xlu0 %1372
        %v1375 = vadd.f32 %v1367, %v1373
        %s1376 = sld [smem:[#allocation2 + $0x86]]
        %v1377 = vstv %s1376
        %v1378 = vmul.f32 %v1377, %v1322
        %1380 = vrot.lane.b32.xlu0 %v1378, 126
        %v1381 = vpop.permute.xlu0 %1380
        %v1383 = vadd.f32 %v1375, %v1381
        %s1384 = sld [smem:[#allocation2 + $0x8a]]
        %v1385 = vstv %s1384
        %v1386 = vmul.f32 %v1385, %v1327
        %1388 = vrot.lane.b32.xlu0 %v1386, 126
        %v1389 = vpop.permute.xlu0 %1388
        %v1391 = vadd.f32 %v1383, %v1389
        %s1392 = sld [smem:[#allocation2 + $0x8e]]
        %v1393 = vstv %s1392
        %v1394 = vmul.f32 %v1393, %v1332
        %1396 = vrot.lane.b32.xlu0 %v1394, 126
        %v1397 = vpop.permute.xlu0 %1396
        %v1399 = vadd.f32 %v1391, %v1397
        %s1400 = sld [smem:[#allocation2 + $0x92]]
        %v1401 = vld [vmem:[%s1038] sm:$0xff]
        %v1402 = vstv %s1400
        %v1403 = vmul.f32 %v1402, %v1401
        %v1404 = vadd.f32 %v1399, %v1403
        %s1405 = sld [smem:[#allocation2 + $0x96]]
        %v1406 = vld [vmem:[%s1045] sm:$0xff]
        %v1407 = vstv %s1405
        %v1408 = vmul.f32 %v1407, %v1406
        %v1409 = vadd.f32 %v1404, %v1408
        %s1410 = sld [smem:[#allocation2 + $0x9a]]
        %v1411 = vld [vmem:[%s1052] sm:$0xff]
        %v1412 = vstv %s1410
        %v1413 = vmul.f32 %v1412, %v1411
        %v1414 = vadd.f32 %v1409, %v1413
        %s1415 = sld [smem:[#allocation2 + $0x9e]]
        %v1416 = vld [vmem:[%s1059] sm:$0xff]
        %v1417 = vstv %s1415
        %v1418 = vmul.f32 %v1417, %v1416
        %v1419 = vadd.f32 %v1414, %v1418
        %s1420 = sld [smem:[#allocation2 + $0xa2]]
        %v1421 = vstv %s1420
        %v1422 = vmul.f32 %v1421, %v1401
        %1424 = vrot.lane.b32.xlu0 %v1422, 127
        %v1425 = vpop.permute.xlu0 %1424
        %v1427 = vadd.f32 %v1419, %v1425
        %s1428 = sld [smem:[#allocation2 + $0xa6]]
        %v1429 = vstv %s1428
        %v1430 = vmul.f32 %v1429, %v1406
        %1432 = vrot.lane.b32.xlu0 %v1430, 127
        %v1433 = vpop.permute.xlu0 %1432
        %v1435 = vadd.f32 %v1427, %v1433
        %s1436 = sld [smem:[#allocation2 + $0xaa]]
        %v1437 = vstv %s1436
        %v1438 = vmul.f32 %v1437, %v1411
        %1440 = vrot.lane.b32.xlu0 %v1438, 127
        %v1441 = vpop.permute.xlu0 %1440
        %v1443 = vadd.f32 %v1435, %v1441
        %s1444 = sld [smem:[#allocation2 + $0xae]]
        %v1445 = vstv %s1444
        %v1446 = vmul.f32 %v1445, %v1416
        %1448 = vrot.lane.b32.xlu0 %v1446, 127
        %v1449 = vpop.permute.xlu0 %1448
        %v1451 = vadd.f32 %v1443, %v1449
        %s1452 = sld [smem:[#allocation2 + $0xb2]]
        %v1453 = vstv %s1452
        %v1454 = vmul.f32 %v1453, %v1401
        %1456 = vrot.lane.b32.xlu0 %v1454, 126
        %v1457 = vpop.permute.xlu0 %1456
        %v1459 = vadd.f32 %v1451, %v1457
        %s1460 = sld [smem:[#allocation2 + $0xb6]]
        %v1461 = vstv %s1460
        %v1462 = vmul.f32 %v1461, %v1406
        %1464 = vrot.lane.b32.xlu0 %v1462, 126
        %v1465 = vpop.permute.xlu0 %1464
        %v1467 = vadd.f32 %v1459, %v1465
        %s1468 = sld [smem:[#allocation2 + $0xba]]
        %v1469 = vstv %s1468
        %v1470 = vmul.f32 %v1469, %v1411
        %1472 = vrot.lane.b32.xlu0 %v1470, 126
        %v1473 = vpop.permute.xlu0 %1472
        %v1475 = vadd.f32 %v1467, %v1473
        %s1476 = sld [smem:[#allocation2 + $0xbe]]
        %v1477 = vstv %s1476
        %v1478 = vmul.f32 %v1477, %v1416
        %1480 = vrot.lane.b32.xlu0 %v1478, 126
        %v1481 = vpop.permute.xlu0 %1480
        %v1483 = vadd.f32 %v1475, %v1481
        %1484 = vst.msk [vmem:[%s762 + $0x1] sm:$0x1] %vm397, %v1483
        %1485 = vst.msk [vmem:[%s762 + $0x2] sm:$0x2] %vm399, %v1483
        %1486 = vst.msk [vmem:[%s762 + $0x3] sm:$0x4] %vm401, %v1483
        %1487 = vst.msk [vmem:[%s762 + $0x4] sm:$0x8] %vm403, %v1483
        %1488 = vst.msk [vmem:[%s762 + $0x5] sm:$0x10] %vm405, %v1483
        %1489 = vst.msk [vmem:[%s762 + $0x6] sm:$0x20] %vm407, %v1483
        %1490 = vst.msk [vmem:[%s762 + $0x7] sm:$0x40] %vm409, %v1483
        %1491 = vst.msk [vmem:[%s762 + $0x8] sm:$0x80] %vm411, %v1483
        %s1492 = sld [smem:[#allocation5 + $0x3]]
        %v1493 = vstv %s1492
        %s1494 = sld [smem:[#allocation2 + $0x63]]
        %v1495 = vld [vmem:[%s307] sm:$0xff]
        %v1496 = vstv %s1494
        %v1497 = vmul.f32 %v1496, %v1495
        %v1498 = vadd.f32 %v1493, %v1497
        %s1499 = sld [smem:[#allocation2 + $0x67]]
        %v1500 = vld [vmem:[%s314] sm:$0xff]
        %v1501 = vstv %s1499
        %v1502 = vmul.f32 %v1501, %v1500
        %v1503 = vadd.f32 %v1498, %v1502
        %s1504 = sld [smem:[#allocation2 + $0x6b]]
        %v1505 = vld [vmem:[%s321] sm:$0xff]
        %v1506 = vstv %s1504
        %v1507 = vmul.f32 %v1506, %v1505
        %v1508 = vadd.f32 %v1503, %v1507
        %s1509 = sld [smem:[#allocation2 + $0x6f]]
        %v1510 = vld [vmem:[%s328] sm:$0xff]
        %v1511 = vstv %s1509
        %v1512 = vmul.f32 %v1511, %v1510
        %v1513 = vadd.f32 %v1508, %v1512
        %s1514 = sld [smem:[#allocation2 + $0x73]]
        %v1515 = vstv %s1514
        %v1516 = vmul.f32 %v1515, %v1495
        %1518 = vrot.lane.b32.xlu0 %v1516, 127
        %v1519 = vpop.permute.xlu0 %1518
        %v1521 = vadd.f32 %v1513, %v1519
        %s1522 = sld [smem:[#allocation2 + $0x77]]
        %v1523 = vstv %s1522
        %v1524 = vmul.f32 %v1523, %v1500
        %1526 = vrot.lane.b32.xlu0 %v1524, 127
        %v1527 = vpop.permute.xlu0 %1526
        %v1529 = vadd.f32 %v1521, %v1527
        %s1530 = sld [smem:[#allocation2 + $0x7b]]
        %v1531 = vstv %s1530
        %v1532 = vmul.f32 %v1531, %v1505
        %1534 = vrot.lane.b32.xlu0 %v1532, 127
        %v1535 = vpop.permute.xlu0 %1534
        %v1537 = vadd.f32 %v1529, %v1535
        %s1538 = sld [smem:[#allocation2 + $0x7f]]
        %v1539 = vstv %s1538
        %v1540 = vmul.f32 %v1539, %v1510
        %1542 = vrot.lane.b32.xlu0 %v1540, 127
        %v1543 = vpop.permute.xlu0 %1542
        %v1545 = vadd.f32 %v1537, %v1543
        %s1546 = sld [smem:[#allocation2 + $0x83]]
        %v1547 = vstv %s1546
        %v1548 = vmul.f32 %v1547, %v1495
        %1550 = vrot.lane.b32.xlu0 %v1548, 126
        %v1551 = vpop.permute.xlu0 %1550
        %v1553 = vadd.f32 %v1545, %v1551
        %s1554 = sld [smem:[#allocation2 + $0x87]]
        %v1555 = vstv %s1554
        %v1556 = vmul.f32 %v1555, %v1500
        %1558 = vrot.lane.b32.xlu0 %v1556, 126
        %v1559 = vpop.permute.xlu0 %1558
        %v1561 = vadd.f32 %v1553, %v1559
        %s1562 = sld [smem:[#allocation2 + $0x8b]]
        %v1563 = vstv %s1562
        %v1564 = vmul.f32 %v1563, %v1505
        %1566 = vrot.lane.b32.xlu0 %v1564, 126
        %v1567 = vpop.permute.xlu0 %1566
        %v1569 = vadd.f32 %v1561, %v1567
        %s1570 = sld [smem:[#allocation2 + $0x8f]]
        %v1571 = vstv %s1570
        %v1572 = vmul.f32 %v1571, %v1510
        %1574 = vrot.lane.b32.xlu0 %v1572, 126
        %v1575 = vpop.permute.xlu0 %1574
        %v1577 = vadd.f32 %v1569, %v1575
        %s1578 = sld [smem:[#allocation2 + $0x93]]
        %v1579 = vld [vmem:[%s1038] sm:$0xff]
        %v1580 = vstv %s1578
        %v1581 = vmul.f32 %v1580, %v1579
        %v1582 = vadd.f32 %v1577, %v1581
        %s1583 = sld [smem:[#allocation2 + $0x97]]
        %v1584 = vld [vmem:[%s1045] sm:$0xff]
        %v1585 = vstv %s1583
        %v1586 = vmul.f32 %v1585, %v1584
        %v1587 = vadd.f32 %v1582, %v1586
        %s1588 = sld [smem:[#allocation2 + $0x9b]]
        %v1589 = vld [vmem:[%s1052] sm:$0xff]
        %v1590 = vstv %s1588
        %v1591 = vmul.f32 %v1590, %v1589
        %v1592 = vadd.f32 %v1587, %v1591
        %s1593 = sld [smem:[#allocation2 + $0x9f]]
        %v1594 = vld [vmem:[%s1059] sm:$0xff]
        %v1595 = vstv %s1593
        %v1596 = vmul.f32 %v1595, %v1594
        %v1597 = vadd.f32 %v1592, %v1596
        %s1598 = sld [smem:[#allocation2 + $0xa3]]
        %v1599 = vstv %s1598
        %v1600 = vmul.f32 %v1599, %v1579
        %1602 = vrot.lane.b32.xlu0 %v1600, 127
        %v1603 = vpop.permute.xlu0 %1602
        %v1605 = vadd.f32 %v1597, %v1603
        %s1606 = sld [smem:[#allocation2 + $0xa7]]
        %v1607 = vstv %s1606
        %v1608 = vmul.f32 %v1607, %v1584
        %1610 = vrot.lane.b32.xlu0 %v1608, 127
        %v1611 = vpop.permute.xlu0 %1610
        %v1613 = vadd.f32 %v1605, %v1611
        %s1614 = sld [smem:[#allocation2 + $0xab]]
        %v1615 = vstv %s1614
        %v1616 = vmul.f32 %v1615, %v1589
        %1618 = vrot.lane.b32.xlu0 %v1616, 127
        %v1619 = vpop.permute.xlu0 %1618
        %v1621 = vadd.f32 %v1613, %v1619
        %s1622 = sld [smem:[#allocation2 + $0xaf]]
        %v1623 = vstv %s1622
        %v1624 = vmul.f32 %v1623, %v1594
        %1626 = vrot.lane.b32.xlu0 %v1624, 127
        %v1627 = vpop.permute.xlu0 %1626
        %v1629 = vadd.f32 %v1621, %v1627
        %s1630 = sld [smem:[#allocation2 + $0xb3]]
        %v1631 = vstv %s1630
        %v1632 = vmul.f32 %v1631, %v1579
        %1634 = vrot.lane.b32.xlu0 %v1632, 126
        %v1635 = vpop.permute.xlu0 %1634
        %v1637 = vadd.f32 %v1629, %v1635
        %s1638 = sld [smem:[#allocation2 + $0xb7]]
        %v1639 = vstv %s1638
        %v1640 = vmul.f32 %v1639, %v1584
        %1642 = vrot.lane.b32.xlu0 %v1640, 126
        %v1643 = vpop.permute.xlu0 %1642
        %v1645 = vadd.f32 %v1637, %v1643
        %s1646 = sld [smem:[#allocation2 + $0xbb]]
        %v1647 = vstv %s1646
        %v1648 = vmul.f32 %v1647, %v1589
        %1650 = vrot.lane.b32.xlu0 %v1648, 126
        %v1651 = vpop.permute.xlu0 %1650
        %v1653 = vadd.f32 %v1645, %v1651
        %s1654 = sld [smem:[#allocation2 + $0xbf]]
        %v1655 = vstv %s1654
        %v1656 = vmul.f32 %v1655, %v1594
        %1658 = vrot.lane.b32.xlu0 %v1656, 126
        %v1659 = vpop.permute.xlu0 %1658
        %v1661 = vadd.f32 %v1653, %v1659
        %1662 = vst.msk [vmem:[%s941 + $0x1] sm:$0x1] %vm397, %v1661
        %1663 = vst.msk [vmem:[%s941 + $0x2] sm:$0x2] %vm399, %v1661
        %1664 = vst.msk [vmem:[%s941 + $0x3] sm:$0x4] %vm401, %v1661
        %1665 = vst.msk [vmem:[%s941 + $0x4] sm:$0x8] %vm403, %v1661
        %1666 = vst.msk [vmem:[%s941 + $0x5] sm:$0x10] %vm405, %v1661
        %1667 = vst.msk [vmem:[%s941 + $0x6] sm:$0x20] %vm407, %v1661
        %1668 = vst.msk [vmem:[%s941 + $0x7] sm:$0x40] %vm409, %v1661
        %1669 = vst.msk [vmem:[%s941 + $0x8] sm:$0x80] %vm411, %v1661
        %s1670 = sand.u32 %s109, 1
        %s1671 = scalar_lea.sflag [#allocation3], %s1670
        %s1672 = sand.u32 %s109, 1
        %s1673 = smul.addr %s1672, 64
        %s1674 = scalar_lea.vmem [#allocation7], %s1673
        // Predicated region
        $region41: #{upsampler2x.1} parent=31 // pred_check
          %p1675 = pneg %p119
        $region42: #{upsampler2x.1} parent=31 // pred_check_branch
          %1677 = sbr.rel (%p1675) target = $region44
        $region43: #{upsampler2x.1} parent=31 // pred_region
          #allocation9 [shape = 'u32[6]{0}', space=smem, size = 0x18, scoped, tag = 'DMA stride descriptor']
          %s1678 = smul.u32 2, %s24
          %s1680 = ssub.s32 1024, 1024
          %1681 = vsyncadd %s1671, %s1680
          %s1682 = smul.addr %s23, 16
          %s1683 = sadd.s32 %s1678, %s1682
          %s1684 = smul.addr %s1683, 128
          %s1685 = scalar_lea.hbm %s3, %s1684
          %s1687 = sshll.u32 1, 14
          %s1688 = sxor.u32 4294967295, %s1687
          %s1691 = sshll.u32 7, 18
          %s1692 = sxor.u32 4294967295, %s1691
          %s1693 = sand.u32 0, %s1692
          %s1695 = sor.u32 %s1693, 0
          %s1697 = sshll.u32 3, 24
          %s1698 = sxor.u32 4294967295, %s1697
          %s1699 = sand.u32 %s1695, %s1698
          %s1701 = sor.u32 %s1699, 0
          %s1702 = sshll.u32 %s1674, 4
          %s1703 = int_to_ptr.vmem [resolvable:$true] %s1702
          %1709 = sst [smem:[#allocation9]] 256
          %s1710 = scalar_lea.smem [#allocation9], 1
          %1711 = sst [smem:[%s1710]] 512
          %s1712 = scalar_lea.smem [#allocation9], 2
          %1713 = sst [smem:[%s1712]] 2
          %s1714 = scalar_lea.smem [#allocation9], 3
          %1715 = sst [smem:[%s1714]] 128
          %s1716 = scalar_lea.smem [#allocation9], 4
          %1717 = sst [smem:[%s1716]] 128
          %s1718 = scalar_lea.smem [#allocation9], 5
          %1719 = sst [smem:[%s1718]] 8
          %1721 = dma.general %s1703, 1024, %s1685, %s1671, [#allocation8], [#allocation9], %s1701, 0
        $region44: #{upsampler2x.1} parent=31 // pred_fallthru
          _
      $region32: #{upsampler2x.1} parent=5 // pred_fallthru
        _
      %p1722 = scmp.le.s32.totalorder 2, %s14
      // Predicated region
      $region45: #{upsampler2x.1} parent=5 // pred_check
        %p1723 = pneg %p1722
      $region46: #{upsampler2x.1} parent=5 // pred_check_branch
        %1725 = sbr.rel (%p1723) target = $region48
      $region47: #{upsampler2x.1} parent=5 // pred_region
        %s1726 = ssub.s32 %s14, 2
        // Predicated region
        $region49: #{upsampler2x.1} parent=47 // pred_check
          %p1727 = pneg %p125
        $region50: #{upsampler2x.1} parent=47 // pred_check_branch
          %1729 = sbr.rel (%p1727) target = $region52
        $region51: #{upsampler2x.1} parent=47 // pred_region
          %s1730 = sand.u32 %s110, 1
          %s1731 = scalar_lea.sflag [#allocation3], %s1730
          %s1732 = sand.u32 %s110, 1
          %s1733 = smul.addr %s1732, 64
          %s1734 = scalar_lea.vmem [#allocation7], %s1733
          %1735 = dma.done %s1731, 1024
        $region52: #{upsampler2x.1} parent=47 // pred_fallthru
          _
      $region48: #{upsampler2x.1} parent=5 // pred_fallthru
        _
    $region6: #{upsampler2x.1} parent=1 // loop_footer
      %s18 = sadd.s32 1, %s14
    $region7: #{upsampler2x.1} parent=1 // loop_footer_branch
      %13 = sbr.rel target = $region3
    $region8: #{upsampler2x.1} parent=1 // loop_exit
      _
    %1736 = vsyncpa [#allocation3], 1
    %s1737 = scalar_lea.sflag [#allocation3], 1
    %1738 = vsyncpa %s1737, 1
    %1739 = vsyncpa [#allocation4], 1
    %s1740 = scalar_lea.sflag [#allocation4], 1
    %1741 = vsyncpa %s1740, 1
    %1742 = vsyncpa [#allocation6], 1

</llo_original>
